<compile_context>
chip_gen: v7x
topology: tpu7x:2x2x1
jax: 0.10.0
libtpu: 0.0.40
codegen_flags: <defaults>
</compile_context>

<pallas_src>
import jax
import jax.numpy as jnp
import numpy as np
from jax.experimental import pallas as pl
from jax.experimental.pallas import tpu as pltpu

NEG_SLOPE = 0.2    # F.leaky_relu negative_slope
MXU_DEPTH = 256    # target contraction depth per tap-group matmul (v6e/v7x; 128 on v5e)
CIN_PAD = 16       # pad the 3-channel input to a bf16 sublane multiple


# -----------------------------------------------------------------------------
# Host-side helpers: weight / constant-matrix preparation (outside the kernel).
# -----------------------------------------------------------------------------
def _weight_matrix(w, cin_pad=None):
    """(Cout, Cin, K, K) -> bf16 (Cout, K*K*Cin) with column order [kh, kw, ci]."""
    co, ci, kh, kw = w.shape
    if cin_pad is not None and cin_pad > ci:
        w = jnp.concatenate(
            [w, jnp.zeros((co, cin_pad - ci, kh, kw), w.dtype)], axis=1)
        ci = cin_pad
    m = jnp.transpose(w, (0, 2, 3, 1)).reshape(co, kh * kw * ci)
    return m.astype(jnp.bfloat16)


def _tap_masks(h, w, k):
    """(K*K, H*W) 0/1 masks; row t=kh*k+kw is 1 where (row+kh-1, col+kw-1) is in range.

    Host-precomputed once per (resolution, K) and shared by every conv at that
    resolution, so the kernel does a single multiply per tap.  For pad=1 these
    masks also zero every lane that a flat lane-rotation wraps around, so the tap
    shift needs no zero padding.
    """
    rows = np.arange(h * w) // w
    cols = np.arange(h * w) % w
    m = np.zeros((k * k, h * w), np.float32)
    for kh in range(k):
        for kw in range(k):
            dy, dx = kh - 1, kw - 1
            ok = ((rows + dy >= 0) & (rows + dy < h) &
                  (cols + dx >= 0) & (cols + dx < w))
            m[kh * k + kw] = ok
    return jnp.asarray(m).astype(jnp.bfloat16)   # 0/1 exact in bf16


def _down_select_matrix(h, w):
    """(H*W, (H/2)*(W/2)) 0/1 matrix selecting stride-2 (even, even) positions.

    TODO(synk): replace with strided/polyphase extraction at production sizes
    (this matrix is O((H*W)^2/4) and does not scale).
    """
    ho, wo = h // 2, w // 2
    p = np.zeros((h * w, ho * wo), np.float32)
    for yo in range(ho):
        for xo in range(wo):
            p[(2 * yo) * w + 2 * xo, yo * wo + xo] = 1.0
    return jnp.asarray(p).astype(jnp.bfloat16)


def _up_axis_matrix(n):
    """(2n, n) 1-D bilinear x2 matrix, align_corners=False (PyTorch semantics)."""
    u = np.zeros((2 * n, n), np.float32)
    for i in range(2 * n):
        src = (i + 0.5) / 2.0 - 0.5
        src = max(src, 0.0)
        i0 = int(np.floor(src))
        frac = src - i0
        i1 = min(i0 + 1, n - 1)
        i0 = min(i0, n - 1)
        u[i, i0] += 1.0 - frac
        u[i, i1] += frac
    return u


def _up_matrix(h, w):
    """(H*W, 2H*2W) right-multiply matrix: flat bilinear x2 upsampling.

    All coefficients are dyadic (products/sums of {0.25, 0.75, 1.0}) -> exact bf16.
    TODO(synk): apply the two 1-D factors separably at production sizes.
    """
    m = np.kron(_up_axis_matrix(h), _up_axis_matrix(w))  # (2H*2W, H*W)
    return jnp.asarray(m.T).astype(jnp.bfloat16)


def _spectral_normalize(w, iters=20):
    """spectral_norm: divide the conv weight by its largest singular value."""
    m = w.reshape(w.shape[0], -1)
    v = jnp.full((m.shape[1],), 1.0 / np.sqrt(m.shape[1]), m.dtype)
    u = m @ v
    for _ in range(iters):
        u = m @ v
        u = u / (jnp.linalg.norm(u) + 1e-12)
        v = m.T @ u
        v = v / (jnp.linalg.norm(v) + 1e-12)
    sigma = u @ (m @ v)
    return w / sigma


# -----------------------------------------------------------------------------
# In-kernel building blocks (operate on values; refs are loaded by the caller).
# -----------------------------------------------------------------------------
def _lane_roll(x, off):
    """out[:, p] = x[:, (p + off) % S].  Wrapped lanes are zeroed by the tap mask."""
    s = x.shape[-1]
    r = off % s
    if r == 0:
        return x
    # TODO(synk): pltpu.roll(x, -off, axis=-1) would move this onto the XLU slot;
    #             the lane-concat form is kept here for portability.
    return jnp.concatenate([x[:, r:], x[:, :r]], axis=-1)


def _conv_flat(x, wmat, masks, h, w, k):
    """KxK stride-1 pad-1 conv on a flat (Cp, h*w) activation (spatial on lanes).

    Taps are lane rotations of the bf16 activation, masked by host-precomputed 0/1
    boundary masks, streamed in groups sized to ~MXU_DEPTH contraction depth and
    accumulated in f32.  No full K*K*Cp im2col slab is ever materialized.
    """
    cp, s = x.shape
    xb = x.astype(jnp.bfloat16)
    tpg = max(1, min(k * k, MXU_DEPTH // cp))        # taps per group
    acc = None
    for g0 in range(0, k * k, tpg):
        g_taps = range(g0, min(g0 + tpg, k * k))
        pieces = []
        for t in g_taps:
            kh, kw = divmod(t, k)
            piece = _lane_roll(xb, (kh - 1) * w + (kw - 1))
            if not (k == 3 and kh == 1 and kw == 1):  # centre tap mask is all ones
                piece = piece * masks[t:t + 1, :]
            pieces.append(piece)
        slab = pieces[0] if len(pieces) == 1 else jnp.concatenate(pieces, axis=0)
        wg = wmat[:, g0 * cp:(g0 + len(pieces)) * cp]
        part = jnp.dot(wg, slab, preferred_element_type=jnp.float32)
        acc = part if acc is None else acc + part
    return acc


# -----------------------------------------------------------------------------
# Fused Pallas forward.
# -----------------------------------------------------------------------------
def tiny_unet_discriminator_forward(x, params):
    """x: (B, 3, H, W) f32. Returns (pooled (B, 1), score_map (B, 1, H, W))."""
    B, c_in, H, W = x.shape
    assert H % 4 == 0 and W % 4 == 0
    F = params["w0"].shape[0]
    assert F % 8 == 0, "num_feat must be a sublane multiple"
    H1, W1 = H // 2, W // 2
    H2, W2 = H // 4, W // 4
    S0, S1, S2 = H * W, H1 * W1, H2 * W2

    # Lane-dense activations: flattened spatial on the lane axis; input channels
    # zero-padded so every bf16 tap piece is sublane-aligned.
    cin_pad = max(CIN_PAD, ((c_in + 7) // 8) * 8)
    x_flat = x.reshape(B, c_in, S0).astype(jnp.float32)
    x_flat = jnp.concatenate(
        [x_flat, jnp.zeros((B, cin_pad - c_in, S0), jnp.float32)], axis=1)

    consts = [
        _weight_matrix(params["w0"], cin_pad),
        params["b0"].reshape(-1, 1).astype(jnp.float32),
        _weight_matrix(params["w1"]),
        _weight_matrix(params["w2"]),
        _weight_matrix(params["w5"]),
        _weight_matrix(params["w6"]),
        _weight_matrix(params["w7"]),
        _weight_matrix(params["w8"]),
        _weight_matrix(params["w9"]),
        params["b9"].reshape(-1, 1).astype(jnp.float32),
        _down_select_matrix(H, W),      # (S0, S1)
        _down_select_matrix(H1, W1),    # (S1, S2)
        _up_matrix(H2, W2),             # (S2, S1)
        _up_matrix(H1, W1),             # (S1, S0)
        _tap_masks(H, W, 3),            # conv0 / conv6..9
        _tap_masks(H, W, 4),            # conv1
        _tap_masks(H1, W1, 4),          # conv2
        _tap_masks(H1, W1, 3),          # conv5
    ]

    def kernel(x_ref, w0_ref, b0_ref, w1_ref, w2_ref, w5_ref, w6_ref, w7_ref,
               w8_ref, w9_ref, b9_ref, d1_ref, d2_ref, u1_ref, u2_ref,
               m3f_ref, m4f_ref, m4h_ref, m3h_ref, pooled_ref, map_ref):
        f32 = jnp.float32
        bf16 = jnp.bfloat16

        def lrelu(t):
            return jnp.maximum(t, NEG_SLOPE * t)   # valid since 0 < slope < 1

        def mmc(a, c_ref):
            # bf16 operands, f32 accumulation on the MXU.
            return jnp.dot(a.astype(bf16), c_ref[...], preferred_element_type=f32)

        def conv(a, w_ref, m_ref, h, w, k):
            return _conv_flat(a, w_ref[...], m_ref[...], h, w, k)

        x_in = x_ref[...].astype(f32)                                     # (Cp, S0)

        x0 = lrelu(conv(x_in, w0_ref, m3f_ref, H, W, 3) + b0_ref[...])    # (F,  S0)
        # Stride-2 4x4 convs: full-res conv, then constant 0/1 selection matmul.
        x1 = lrelu(mmc(conv(x0, w1_ref, m4f_ref, H, W, 4), d1_ref))       # (2F, S1)
        x2 = lrelu(mmc(conv(x1, w2_ref, m4h_ref, H1, W1, 4), d2_ref))     # (4F, S2)
        # Bilinear x2 upsample == matmul with a constant interpolation matrix.
        x4 = mmc(x2, u1_ref)                                              # (4F, S1)
        x5 = lrelu(conv(x4, w5_ref, m3h_ref, H1, W1, 3)) + x1             # (2F, S1)
        x5 = mmc(x5, u2_ref)                                              # (2F, S0)
        x6 = lrelu(conv(x5, w6_ref, m3f_ref, H, W, 3)) + x0               # (F,  S0)
        y = lrelu(conv(x6, w7_ref, m3f_ref, H, W, 3))                     # (F,  S0)
        y = lrelu(conv(y, w8_ref, m3f_ref, H, W, 3))                      # (F,  S0)
        y = conv(y, w9_ref, m3f_ref, H, W, 3) + b9_ref[...]               # (1,  S0)

        map_ref[...] = y
        pooled_ref[...] = jnp.mean(y, axis=1, keepdims=True)              # avg pool

    pooled, score_map = pl.pallas_call(
        kernel,
        out_shape=(
            jax.ShapeDtypeStruct((B, 1, 1), jnp.float32),
            jax.ShapeDtypeStruct((B, 1, S0), jnp.float32),
        ),
        grid=(B,),
        in_specs=[pl.BlockSpec((None, cin_pad, S0), lambda b: (b, 0, 0))] + [
            pl.BlockSpec(a.shape, lambda b, n=a.ndim: (0,) * n) for a in consts
        ],
        out_specs=(
            pl.BlockSpec((None, 1, 1), lambda b: (b, 0, 0)),
            pl.BlockSpec((None, 1, S0), lambda b: (b, 0, 0)),
        ),
        compiler_params=pltpu.CompilerParams(
            dimension_semantics=("parallel",),       # B>=2 keeps both v7x TCs busy
            vmem_limit_bytes=56 * 1024 * 1024),
    )(x_flat, *consts)

    return pooled.reshape(B, 1), score_map.reshape(B, 1, H, W)


# -----------------------------------------------------------------------------
# Pure-JAX reference mirroring the PyTorch module (independent code path).
# -----------------------------------------------------------------------------
def _ref_conv(x, w, b=None, stride=1):
    out = jax.lax.conv_general_dilated(
        x, w, (stride, stride), [(1, 1), (1, 1)],
        dimension_numbers=("NCHW", "OIHW", "NCHW"),
        precision=jax.lax.Precision.HIGHEST)
    if b is not None:
        out = out + b[None, :, None, None]
    return out


def _ref_upsample2(x):
    """F.interpolate(x, scale_factor=2, mode='bilinear', align_corners=False)."""
    _, _, h, w = x.shape

    def idx(n):
        i = np.arange(2 * n)
        src = np.maximum((i + 0.5) / 2.0 - 0.5, 0.0)
        i0 = np.floor(src).astype(np.int32)
        frac = (src - i0).astype(np.float32)
        i1 = np.minimum(i0 + 1, n - 1)
        i0 = np.minimum(i0, n - 1)
        return i0, i1, frac

    r0, r1, rf = idx(h)
    c0, c1, cf = idx(w)
    rf = jnp.asarray(rf)[None, None, :, None]
    cf = jnp.asarray(cf)[None, None, None, :]
    t = x[:, :, r0, :] * (1.0 - rf) + x[:, :, r1, :] * rf
    return t[:, :, :, c0] * (1.0 - cf) + t[:, :, :, c1] * cf


def reference_forward(x, p):
    lrelu = lambda t: jnp.where(t >= 0, t, NEG_SLOPE * t)
    x0 = lrelu(_ref_conv(x, p["w0"], p["b0"]))
    x1 = lrelu(_ref_conv(x0, p["w1"], stride=2))
    x2 = lrelu(_ref_conv(x1, p["w2"], stride=2))
    x4 = _ref_upsample2(x2)
    x5 = lrelu(_ref_conv(x4, p["w5"]))
    x5 = x5 + x1
    x5 = _ref_upsample2(x5)
    x6 = lrelu(_ref_conv(x5, p["w6"]))
    x6 = x6 + x0
    out = lrelu(_ref_conv(x6, p["w7"]))
    out = lrelu(_ref_conv(out, p["w8"]))
    out = _ref_conv(out, p["w9"], p["b9"])
    pooled = out.mean(axis=(2, 3))
    return pooled, out


if __name__ == "__main__":
    B, H, W, F = 2, 16, 16, 8  # small test config (module default num_feat=64)
    key = jax.random.PRNGKey(0)
    ks = jax.random.split(key, 12)

    x = jax.random.normal(ks[0], (B, 3, H, W), jnp.float32)

    sn = _spectral_normalize
    params = {
        "w0": 0.3 * jax.random.normal(ks[1], (F, 3, 3, 3), jnp.float32),
        "b0": 0.1 * jax.random.normal(ks[2], (F,), jnp.float32),
        "w1": sn(0.25 * jax.random.normal(ks[3], (2 * F, F, 4, 4), jnp.float32)),
        "w2": sn(0.25 * jax.random.normal(ks[4], (4 * F, 2 * F, 4, 4), jnp.float32)),
        "w5": sn(0.25 * jax.random.normal(ks[5], (2 * F, 4 * F, 3, 3), jnp.float32)),
        "w6": sn(0.25 * jax.random.normal(ks[6], (F, 2 * F, 3, 3), jnp.float32)),
        "w7": sn(0.25 * jax.random.normal(ks[7], (F, F, 3, 3), jnp.float32)),
        "w8": sn(0.25 * jax.random.normal(ks[8], (F, F, 3, 3), jnp.float32)),
        "w9": 0.25 * jax.random.normal(ks[9], (1, F, 3, 3), jnp.float32),
        "b9": 0.1 * jax.random.normal(ks[10], (1,), jnp.float32),
    }

    pooled, score_map = tiny_unet_discriminator_forward(x, params)
    pooled = jax.block_until_ready(pooled)
    score_map = jax.block_until_ready(score_map)

    ref_pooled, ref_map = reference_forward(x, params)
    ref_pooled = jax.block_until_ready(ref_pooled)

    # Tolerances sized for bf16 MXU operands (f32 accumulation) vs. the f32
    # HIGHEST-precision reference; structural errors would be orders larger.
    ok_pooled = bool(jnp.allclose(pooled, ref_pooled, atol=6e-2, rtol=6e-2))
    ok_map = bool(jnp.allclose(score_map, ref_map, atol=6e-2, rtol=6e-2))
    if not (ok_pooled and ok_map):
        err_p = float(jnp.max(jnp.abs(pooled - ref_pooled)))
        err_m = float(jnp.max(jnp.abs(score_map - ref_map)))
        raise AssertionError(
            f"Pallas TinyUNet discriminator mismatch: |d_pooled|={err_p:.3e} "
            f"|d_map|={err_m:.3e}")
    print("KERNEL_OK")
</pallas_src>

<mosaic_0001>
module attributes {stable_mosaic.version = 11 : i64} {
  func.func @kernel(%arg0: i32, %arg1: memref<1x16x256xf32, #tpu.memory_space<vmem>>, %arg2: memref<8x144xbf16, #tpu.memory_space<vmem>>, %arg3: memref<8x1xf32, #tpu.memory_space<vmem>>, %arg4: memref<16x128xbf16, #tpu.memory_space<vmem>>, %arg5: memref<32x256xbf16, #tpu.memory_space<vmem>>, %arg6: memref<16x288xbf16, #tpu.memory_space<vmem>>, %arg7: memref<8x144xbf16, #tpu.memory_space<vmem>>, %arg8: memref<8x72xbf16, #tpu.memory_space<vmem>>, %arg9: memref<8x72xbf16, #tpu.memory_space<vmem>>, %arg10: memref<1x72xbf16, #tpu.memory_space<vmem>>, %arg11: memref<1x1xf32, #tpu.memory_space<vmem>>, %arg12: memref<256x64xbf16, #tpu.memory_space<vmem>>, %arg13: memref<64x16xbf16, #tpu.memory_space<vmem>>, %arg14: memref<16x64xbf16, #tpu.memory_space<vmem>>, %arg15: memref<64x256xbf16, #tpu.memory_space<vmem>>, %arg16: memref<9x256xbf16, #tpu.memory_space<vmem>>, %arg17: memref<16x256xbf16, #tpu.memory_space<vmem>>, %arg18: memref<16x64xbf16, #tpu.memory_space<vmem>>, %arg19: memref<9x64xbf16, #tpu.memory_space<vmem>>, %arg20: memref<1x1x1xf32, #tpu.memory_space<vmem>>, %arg21: memref<1x1x256xf32, #tpu.memory_space<vmem>>) attributes {dimension_semantics = [#tpu.dimension_semantics<parallel>], iteration_bounds = array<i64: 2>, scalar_prefetch = 0 : i64, scratch_operands = 0 : i64, tpu.core_type = #tpu.core_type<tc>, window_params = [{transform_indices = @transform_0, window_bounds = array<i64: 1, 16, 256>}, {pipeline_mode = #tpu.pipeline_mode<synchronous>, transform_indices = @transform_1, window_bounds = array<i64: 8, 144>}, {pipeline_mode = #tpu.pipeline_mode<synchronous>, transform_indices = @transform_2, window_bounds = array<i64: 8, 1>}, {pipeline_mode = #tpu.pipeline_mode<synchronous>, transform_indices = @transform_3, window_bounds = array<i64: 16, 128>}, {pipeline_mode = #tpu.pipeline_mode<synchronous>, transform_indices = @transform_4, window_bounds = array<i64: 32, 256>}, {pipeline_mode = #tpu.pipeline_mode<synchronous>, transform_indices = @transform_5, window_bounds = array<i64: 16, 288>}, {pipeline_mode = #tpu.pipeline_mode<synchronous>, transform_indices = @transform_6, window_bounds = array<i64: 8, 144>}, {pipeline_mode = #tpu.pipeline_mode<synchronous>, transform_indices = @transform_7, window_bounds = array<i64: 8, 72>}, {pipeline_mode = #tpu.pipeline_mode<synchronous>, transform_indices = @transform_8, window_bounds = array<i64: 8, 72>}, {pipeline_mode = #tpu.pipeline_mode<synchronous>, transform_indices = @transform_9, window_bounds = array<i64: 1, 72>}, {pipeline_mode = #tpu.pipeline_mode<synchronous>, transform_indices = @transform_10, window_bounds = array<i64: 1, 1>}, {pipeline_mode = #tpu.pipeline_mode<synchronous>, transform_indices = @transform_11, window_bounds = array<i64: 256, 64>}, {pipeline_mode = #tpu.pipeline_mode<synchronous>, transform_indices = @transform_12, window_bounds = array<i64: 64, 16>}, {pipeline_mode = #tpu.pipeline_mode<synchronous>, transform_indices = @transform_13, window_bounds = array<i64: 16, 64>}, {pipeline_mode = #tpu.pipeline_mode<synchronous>, transform_indices = @transform_14, window_bounds = array<i64: 64, 256>}, {pipeline_mode = #tpu.pipeline_mode<synchronous>, transform_indices = @transform_15, window_bounds = array<i64: 9, 256>}, {pipeline_mode = #tpu.pipeline_mode<synchronous>, transform_indices = @transform_16, window_bounds = array<i64: 16, 256>}, {pipeline_mode = #tpu.pipeline_mode<synchronous>, transform_indices = @transform_17, window_bounds = array<i64: 16, 64>}, {pipeline_mode = #tpu.pipeline_mode<synchronous>, transform_indices = @transform_18, window_bounds = array<i64: 9, 64>}, {transform_indices = @transform_19, window_bounds = array<i64: 1, 1, 1>}, {transform_indices = @transform_20, window_bounds = array<i64: 1, 1, 256>}]} {
    %c0 = arith.constant 0 : index
    %c0_0 = arith.constant 0 : index
    %c0_1 = arith.constant 0 : index
    %0 = vector.load %arg1[%c0, %c0_0, %c0_1] : memref<1x16x256xf32, #tpu.memory_space<vmem>>, vector<1x16x256xf32>
    %1 = vector.shape_cast %0 : vector<1x16x256xf32> to vector<16x256xf32>
    %c0_2 = arith.constant 0 : index
    %c0_3 = arith.constant 0 : index
    %2 = vector.load %arg2[%c0_2, %c0_3] : memref<8x144xbf16, #tpu.memory_space<vmem>>, vector<8x144xbf16>
    %c0_4 = arith.constant 0 : index
    %c0_5 = arith.constant 0 : index
    %3 = vector.load %arg16[%c0_4, %c0_5] : memref<9x256xbf16, #tpu.memory_space<vmem>>, vector<9x256xbf16>
    %4 = arith.truncf %1 : vector<16x256xf32> to vector<16x256xbf16>
    %5 = vector.extract_strided_slice %4 {offsets = [0, 239], sizes = [16, 17], strides = [1, 1]} : vector<16x256xbf16> to vector<16x17xbf16>
    %6 = vector.extract_strided_slice %4 {offsets = [0, 0], sizes = [16, 239], strides = [1, 1]} : vector<16x256xbf16> to vector<16x239xbf16>
    %7 = tpu.concatenate %5, %6 in 1 : vector<16x17xbf16>, vector<16x239xbf16> -> vector<16x256xbf16>
    %8 = vector.extract_strided_slice %3 {offsets = [0, 0], sizes = [1, 256], strides = [1, 1]} : vector<9x256xbf16> to vector<1x256xbf16>
    %9 = vector.broadcast %8 : vector<1x256xbf16> to vector<16x256xbf16>
    %10 = arith.mulf %7, %9 : vector<16x256xbf16>
    %11 = vector.extract_strided_slice %4 {offsets = [0, 240], sizes = [16, 16], strides = [1, 1]} : vector<16x256xbf16> to vector<16x16xbf16>
    %12 = vector.extract_strided_slice %4 {offsets = [0, 0], sizes = [16, 240], strides = [1, 1]} : vector<16x256xbf16> to vector<16x240xbf16>
    %13 = tpu.concatenate %11, %12 in 1 : vector<16x16xbf16>, vector<16x240xbf16> -> vector<16x256xbf16>
    %14 = vector.extract_strided_slice %3 {offsets = [1, 0], sizes = [1, 256], strides = [1, 1]} : vector<9x256xbf16> to vector<1x256xbf16>
    %15 = vector.broadcast %14 : vector<1x256xbf16> to vector<16x256xbf16>
    %16 = arith.mulf %13, %15 : vector<16x256xbf16>
    %17 = vector.extract_strided_slice %4 {offsets = [0, 241], sizes = [16, 15], strides = [1, 1]} : vector<16x256xbf16> to vector<16x15xbf16>
    %18 = vector.extract_strided_slice %4 {offsets = [0, 0], sizes = [16, 241], strides = [1, 1]} : vector<16x256xbf16> to vector<16x241xbf16>
    %19 = tpu.concatenate %17, %18 in 1 : vector<16x15xbf16>, vector<16x241xbf16> -> vector<16x256xbf16>
    %20 = vector.extract_strided_slice %3 {offsets = [2, 0], sizes = [1, 256], strides = [1, 1]} : vector<9x256xbf16> to vector<1x256xbf16>
    %21 = vector.broadcast %20 : vector<1x256xbf16> to vector<16x256xbf16>
    %22 = arith.mulf %19, %21 : vector<16x256xbf16>
    %23 = vector.extract_strided_slice %4 {offsets = [0, 255], sizes = [16, 1], strides = [1, 1]} : vector<16x256xbf16> to vector<16x1xbf16>
    %24 = vector.extract_strided_slice %4 {offsets = [0, 0], sizes = [16, 255], strides = [1, 1]} : vector<16x256xbf16> to vector<16x255xbf16>
    %25 = tpu.concatenate %23, %24 in 1 : vector<16x1xbf16>, vector<16x255xbf16> -> vector<16x256xbf16>
    %26 = vector.extract_strided_slice %3 {offsets = [3, 0], sizes = [1, 256], strides = [1, 1]} : vector<9x256xbf16> to vector<1x256xbf16>
    %27 = vector.broadcast %26 : vector<1x256xbf16> to vector<16x256xbf16>
    %28 = arith.mulf %25, %27 : vector<16x256xbf16>
    %29 = vector.extract_strided_slice %4 {offsets = [0, 1], sizes = [16, 255], strides = [1, 1]} : vector<16x256xbf16> to vector<16x255xbf16>
    %30 = vector.extract_strided_slice %4 {offsets = [0, 0], sizes = [16, 1], strides = [1, 1]} : vector<16x256xbf16> to vector<16x1xbf16>
    %31 = tpu.concatenate %29, %30 in 1 : vector<16x255xbf16>, vector<16x1xbf16> -> vector<16x256xbf16>
    %32 = vector.extract_strided_slice %3 {offsets = [5, 0], sizes = [1, 256], strides = [1, 1]} : vector<9x256xbf16> to vector<1x256xbf16>
    %33 = vector.broadcast %32 : vector<1x256xbf16> to vector<16x256xbf16>
    %34 = arith.mulf %31, %33 : vector<16x256xbf16>
    %35 = vector.extract_strided_slice %4 {offsets = [0, 15], sizes = [16, 241], strides = [1, 1]} : vector<16x256xbf16> to vector<16x241xbf16>
    %36 = vector.extract_strided_slice %4 {offsets = [0, 0], sizes = [16, 15], strides = [1, 1]} : vector<16x256xbf16> to vector<16x15xbf16>
    %37 = tpu.concatenate %35, %36 in 1 : vector<16x241xbf16>, vector<16x15xbf16> -> vector<16x256xbf16>
    %38 = vector.extract_strided_slice %3 {offsets = [6, 0], sizes = [1, 256], strides = [1, 1]} : vector<9x256xbf16> to vector<1x256xbf16>
    %39 = vector.broadcast %38 : vector<1x256xbf16> to vector<16x256xbf16>
    %40 = arith.mulf %37, %39 : vector<16x256xbf16>
    %41 = vector.extract_strided_slice %4 {offsets = [0, 16], sizes = [16, 240], strides = [1, 1]} : vector<16x256xbf16> to vector<16x240xbf16>
    %42 = vector.extract_strided_slice %4 {offsets = [0, 0], sizes = [16, 16], strides = [1, 1]} : vector<16x256xbf16> to vector<16x16xbf16>
    %43 = tpu.concatenate %41, %42 in 1 : vector<16x240xbf16>, vector<16x16xbf16> -> vector<16x256xbf16>
    %44 = vector.extract_strided_slice %3 {offsets = [7, 0], sizes = [1, 256], strides = [1, 1]} : vector<9x256xbf16> to vector<1x256xbf16>
    %45 = vector.broadcast %44 : vector<1x256xbf16> to vector<16x256xbf16>
    %46 = arith.mulf %43, %45 : vector<16x256xbf16>
    %47 = vector.extract_strided_slice %4 {offsets = [0, 17], sizes = [16, 239], strides = [1, 1]} : vector<16x256xbf16> to vector<16x239xbf16>
    %48 = vector.extract_strided_slice %4 {offsets = [0, 0], sizes = [16, 17], strides = [1, 1]} : vector<16x256xbf16> to vector<16x17xbf16>
    %49 = tpu.concatenate %47, %48 in 1 : vector<16x239xbf16>, vector<16x17xbf16> -> vector<16x256xbf16>
    %50 = vector.extract_strided_slice %3 {offsets = [8, 0], sizes = [1, 256], strides = [1, 1]} : vector<9x256xbf16> to vector<1x256xbf16>
    %51 = vector.broadcast %50 : vector<1x256xbf16> to vector<16x256xbf16>
    %52 = arith.mulf %49, %51 : vector<16x256xbf16>
    %53 = tpu.concatenate %10, %16, %22, %28, %4, %34, %40, %46, %52 in 0 : vector<16x256xbf16>, vector<16x256xbf16>, vector<16x256xbf16>, vector<16x256xbf16>, vector<16x256xbf16>, vector<16x256xbf16>, vector<16x256xbf16>, vector<16x256xbf16>, vector<16x256xbf16> -> vector<144x256xbf16>
    %cst = arith.constant dense<0.000000e+00> : vector<8x256xf32>
    %54 = tpu.matmul %2, %53, %cst {dimension_numbers = #tpu.dot_dimension_numbers<[1], [0], [0], [1], [0, 0, 1, 1], [], []>} : vector<8x144xbf16>, vector<144x256xbf16>, vector<8x256xf32> -> vector<8x256xf32>
    %c0_6 = arith.constant 0 : index
    %c0_7 = arith.constant 0 : index
    %55 = vector.load %arg3[%c0_6, %c0_7] : memref<8x1xf32, #tpu.memory_space<vmem>>, vector<8x1xf32>
    %56 = vector.broadcast %55 : vector<8x1xf32> to vector<8x256xf32>
    %57 = arith.addf %54, %56 : vector<8x256xf32>
    %cst_8 = arith.constant 2.000000e-01 : f32
    %58 = vector.broadcast %cst_8 : f32 to vector<8x256xf32>
    %59 = arith.mulf %58, %57 : vector<8x256xf32>
    %60 = arith.maximumf %57, %59 : vector<8x256xf32>
    %c0_9 = arith.constant 0 : index
    %c0_10 = arith.constant 0 : index
    %61 = vector.load %arg4[%c0_9, %c0_10] : memref<16x128xbf16, #tpu.memory_space<vmem>>, vector<16x128xbf16>
    %c0_11 = arith.constant 0 : index
    %c0_12 = arith.constant 0 : index
    %62 = vector.load %arg17[%c0_11, %c0_12] : memref<16x256xbf16, #tpu.memory_space<vmem>>, vector<16x256xbf16>
    %63 = arith.truncf %60 : vector<8x256xf32> to vector<8x256xbf16>
    %64 = vector.extract_strided_slice %63 {offsets = [0, 239], sizes = [8, 17], strides = [1, 1]} : vector<8x256xbf16> to vector<8x17xbf16>
    %65 = vector.extract_strided_slice %63 {offsets = [0, 0], sizes = [8, 239], strides = [1, 1]} : vector<8x256xbf16> to vector<8x239xbf16>
    %66 = tpu.concatenate %64, %65 in 1 : vector<8x17xbf16>, vector<8x239xbf16> -> vector<8x256xbf16>
    %67 = vector.extract_strided_slice %62 {offsets = [0, 0], sizes = [1, 256], strides = [1, 1]} : vector<16x256xbf16> to vector<1x256xbf16>
    %68 = vector.broadcast %67 : vector<1x256xbf16> to vector<8x256xbf16>
    %69 = arith.mulf %66, %68 : vector<8x256xbf16>
    %70 = vector.extract_strided_slice %63 {offsets = [0, 240], sizes = [8, 16], strides = [1, 1]} : vector<8x256xbf16> to vector<8x16xbf16>
    %71 = vector.extract_strided_slice %63 {offsets = [0, 0], sizes = [8, 240], strides = [1, 1]} : vector<8x256xbf16> to vector<8x240xbf16>
    %72 = tpu.concatenate %70, %71 in 1 : vector<8x16xbf16>, vector<8x240xbf16> -> vector<8x256xbf16>
    %73 = vector.extract_strided_slice %62 {offsets = [1, 0], sizes = [1, 256], strides = [1, 1]} : vector<16x256xbf16> to vector<1x256xbf16>
    %74 = vector.broadcast %73 : vector<1x256xbf16> to vector<8x256xbf16>
    %75 = arith.mulf %72, %74 : vector<8x256xbf16>
    %76 = vector.extract_strided_slice %63 {offsets = [0, 241], sizes = [8, 15], strides = [1, 1]} : vector<8x256xbf16> to vector<8x15xbf16>
    %77 = vector.extract_strided_slice %63 {offsets = [0, 0], sizes = [8, 241], strides = [1, 1]} : vector<8x256xbf16> to vector<8x241xbf16>
    %78 = tpu.concatenate %76, %77 in 1 : vector<8x15xbf16>, vector<8x241xbf16> -> vector<8x256xbf16>
    %79 = vector.extract_strided_slice %62 {offsets = [2, 0], sizes = [1, 256], strides = [1, 1]} : vector<16x256xbf16> to vector<1x256xbf16>
    %80 = vector.broadcast %79 : vector<1x256xbf16> to vector<8x256xbf16>
    %81 = arith.mulf %78, %80 : vector<8x256xbf16>
    %82 = vector.extract_strided_slice %63 {offsets = [0, 242], sizes = [8, 14], strides = [1, 1]} : vector<8x256xbf16> to vector<8x14xbf16>
    %83 = vector.extract_strided_slice %63 {offsets = [0, 0], sizes = [8, 242], strides = [1, 1]} : vector<8x256xbf16> to vector<8x242xbf16>
    %84 = tpu.concatenate %82, %83 in 1 : vector<8x14xbf16>, vector<8x242xbf16> -> vector<8x256xbf16>
    %85 = vector.extract_strided_slice %62 {offsets = [3, 0], sizes = [1, 256], strides = [1, 1]} : vector<16x256xbf16> to vector<1x256xbf16>
    %86 = vector.broadcast %85 : vector<1x256xbf16> to vector<8x256xbf16>
    %87 = arith.mulf %84, %86 : vector<8x256xbf16>
    %88 = vector.extract_strided_slice %63 {offsets = [0, 255], sizes = [8, 1], strides = [1, 1]} : vector<8x256xbf16> to vector<8x1xbf16>
    %89 = vector.extract_strided_slice %63 {offsets = [0, 0], sizes = [8, 255], strides = [1, 1]} : vector<8x256xbf16> to vector<8x255xbf16>
    %90 = tpu.concatenate %88, %89 in 1 : vector<8x1xbf16>, vector<8x255xbf16> -> vector<8x256xbf16>
    %91 = vector.extract_strided_slice %62 {offsets = [4, 0], sizes = [1, 256], strides = [1, 1]} : vector<16x256xbf16> to vector<1x256xbf16>
    %92 = vector.broadcast %91 : vector<1x256xbf16> to vector<8x256xbf16>
    %93 = arith.mulf %90, %92 : vector<8x256xbf16>
    %94 = vector.extract_strided_slice %62 {offsets = [5, 0], sizes = [1, 256], strides = [1, 1]} : vector<16x256xbf16> to vector<1x256xbf16>
    %95 = vector.broadcast %94 : vector<1x256xbf16> to vector<8x256xbf16>
    %96 = arith.mulf %63, %95 : vector<8x256xbf16>
    %97 = vector.extract_strided_slice %63 {offsets = [0, 1], sizes = [8, 255], strides = [1, 1]} : vector<8x256xbf16> to vector<8x255xbf16>
    %98 = vector.extract_strided_slice %63 {offsets = [0, 0], sizes = [8, 1], strides = [1, 1]} : vector<8x256xbf16> to vector<8x1xbf16>
    %99 = tpu.concatenate %97, %98 in 1 : vector<8x255xbf16>, vector<8x1xbf16> -> vector<8x256xbf16>
    %100 = vector.extract_strided_slice %62 {offsets = [6, 0], sizes = [1, 256], strides = [1, 1]} : vector<16x256xbf16> to vector<1x256xbf16>
    %101 = vector.broadcast %100 : vector<1x256xbf16> to vector<8x256xbf16>
    %102 = arith.mulf %99, %101 : vector<8x256xbf16>
    %103 = vector.extract_strided_slice %63 {offsets = [0, 2], sizes = [8, 254], strides = [1, 1]} : vector<8x256xbf16> to vector<8x254xbf16>
    %104 = vector.extract_strided_slice %63 {offsets = [0, 0], sizes = [8, 2], strides = [1, 1]} : vector<8x256xbf16> to vector<8x2xbf16>
    %105 = tpu.concatenate %103, %104 in 1 : vector<8x254xbf16>, vector<8x2xbf16> -> vector<8x256xbf16>
    %106 = vector.extract_strided_slice %62 {offsets = [7, 0], sizes = [1, 256], strides = [1, 1]} : vector<16x256xbf16> to vector<1x256xbf16>
    %107 = vector.broadcast %106 : vector<1x256xbf16> to vector<8x256xbf16>
    %108 = arith.mulf %105, %107 : vector<8x256xbf16>
    %109 = vector.extract_strided_slice %63 {offsets = [0, 15], sizes = [8, 241], strides = [1, 1]} : vector<8x256xbf16> to vector<8x241xbf16>
    %110 = vector.extract_strided_slice %63 {offsets = [0, 0], sizes = [8, 15], strides = [1, 1]} : vector<8x256xbf16> to vector<8x15xbf16>
    %111 = tpu.concatenate %109, %110 in 1 : vector<8x241xbf16>, vector<8x15xbf16> -> vector<8x256xbf16>
    %112 = vector.extract_strided_slice %62 {offsets = [8, 0], sizes = [1, 256], strides = [1, 1]} : vector<16x256xbf16> to vector<1x256xbf16>
    %113 = vector.broadcast %112 : vector<1x256xbf16> to vector<8x256xbf16>
    %114 = arith.mulf %111, %113 : vector<8x256xbf16>
    %115 = vector.extract_strided_slice %63 {offsets = [0, 16], sizes = [8, 240], strides = [1, 1]} : vector<8x256xbf16> to vector<8x240xbf16>
    %116 = vector.extract_strided_slice %63 {offsets = [0, 0], sizes = [8, 16], strides = [1, 1]} : vector<8x256xbf16> to vector<8x16xbf16>
    %117 = tpu.concatenate %115, %116 in 1 : vector<8x240xbf16>, vector<8x16xbf16> -> vector<8x256xbf16>
    %118 = vector.extract_strided_slice %62 {offsets = [9, 0], sizes = [1, 256], strides = [1, 1]} : vector<16x256xbf16> to vector<1x256xbf16>
    %119 = vector.broadcast %118 : vector<1x256xbf16> to vector<8x256xbf16>
    %120 = arith.mulf %117, %119 : vector<8x256xbf16>
    %121 = vector.extract_strided_slice %63 {offsets = [0, 17], sizes = [8, 239], strides = [1, 1]} : vector<8x256xbf16> to vector<8x239xbf16>
    %122 = vector.extract_strided_slice %63 {offsets = [0, 0], sizes = [8, 17], strides = [1, 1]} : vector<8x256xbf16> to vector<8x17xbf16>
    %123 = tpu.concatenate %121, %122 in 1 : vector<8x239xbf16>, vector<8x17xbf16> -> vector<8x256xbf16>
    %124 = vector.extract_strided_slice %62 {offsets = [10, 0], sizes = [1, 256], strides = [1, 1]} : vector<16x256xbf16> to vector<1x256xbf16>
    %125 = vector.broadcast %124 : vector<1x256xbf16> to vector<8x256xbf16>
    %126 = arith.mulf %123, %125 : vector<8x256xbf16>
    %127 = vector.extract_strided_slice %63 {offsets = [0, 18], sizes = [8, 238], strides = [1, 1]} : vector<8x256xbf16> to vector<8x238xbf16>
    %128 = vector.extract_strided_slice %63 {offsets = [0, 0], sizes = [8, 18], strides = [1, 1]} : vector<8x256xbf16> to vector<8x18xbf16>
    %129 = tpu.concatenate %127, %128 in 1 : vector<8x238xbf16>, vector<8x18xbf16> -> vector<8x256xbf16>
    %130 = vector.extract_strided_slice %62 {offsets = [11, 0], sizes = [1, 256], strides = [1, 1]} : vector<16x256xbf16> to vector<1x256xbf16>
    %131 = vector.broadcast %130 : vector<1x256xbf16> to vector<8x256xbf16>
    %132 = arith.mulf %129, %131 : vector<8x256xbf16>
    %133 = vector.extract_strided_slice %63 {offsets = [0, 31], sizes = [8, 225], strides = [1, 1]} : vector<8x256xbf16> to vector<8x225xbf16>
    %134 = vector.extract_strided_slice %63 {offsets = [0, 0], sizes = [8, 31], strides = [1, 1]} : vector<8x256xbf16> to vector<8x31xbf16>
    %135 = tpu.concatenate %133, %134 in 1 : vector<8x225xbf16>, vector<8x31xbf16> -> vector<8x256xbf16>
    %136 = vector.extract_strided_slice %62 {offsets = [12, 0], sizes = [1, 256], strides = [1, 1]} : vector<16x256xbf16> to vector<1x256xbf16>
    %137 = vector.broadcast %136 : vector<1x256xbf16> to vector<8x256xbf16>
    %138 = arith.mulf %135, %137 : vector<8x256xbf16>
    %139 = vector.extract_strided_slice %63 {offsets = [0, 32], sizes = [8, 224], strides = [1, 1]} : vector<8x256xbf16> to vector<8x224xbf16>
    %140 = vector.extract_strided_slice %63 {offsets = [0, 0], sizes = [8, 32], strides = [1, 1]} : vector<8x256xbf16> to vector<8x32xbf16>
    %141 = tpu.concatenate %139, %140 in 1 : vector<8x224xbf16>, vector<8x32xbf16> -> vector<8x256xbf16>
    %142 = vector.extract_strided_slice %62 {offsets = [13, 0], sizes = [1, 256], strides = [1, 1]} : vector<16x256xbf16> to vector<1x256xbf16>
    %143 = vector.broadcast %142 : vector<1x256xbf16> to vector<8x256xbf16>
    %144 = arith.mulf %141, %143 : vector<8x256xbf16>
    %145 = vector.extract_strided_slice %63 {offsets = [0, 33], sizes = [8, 223], strides = [1, 1]} : vector<8x256xbf16> to vector<8x223xbf16>
    %146 = vector.extract_strided_slice %63 {offsets = [0, 0], sizes = [8, 33], strides = [1, 1]} : vector<8x256xbf16> to vector<8x33xbf16>
    %147 = tpu.concatenate %145, %146 in 1 : vector<8x223xbf16>, vector<8x33xbf16> -> vector<8x256xbf16>
    %148 = vector.extract_strided_slice %62 {offsets = [14, 0], sizes = [1, 256], strides = [1, 1]} : vector<16x256xbf16> to vector<1x256xbf16>
    %149 = vector.broadcast %148 : vector<1x256xbf16> to vector<8x256xbf16>
    %150 = arith.mulf %147, %149 : vector<8x256xbf16>
    %151 = vector.extract_strided_slice %63 {offsets = [0, 34], sizes = [8, 222], strides = [1, 1]} : vector<8x256xbf16> to vector<8x222xbf16>
    %152 = vector.extract_strided_slice %63 {offsets = [0, 0], sizes = [8, 34], strides = [1, 1]} : vector<8x256xbf16> to vector<8x34xbf16>
    %153 = tpu.concatenate %151, %152 in 1 : vector<8x222xbf16>, vector<8x34xbf16> -> vector<8x256xbf16>
    %154 = vector.extract_strided_slice %62 {offsets = [15, 0], sizes = [1, 256], strides = [1, 1]} : vector<16x256xbf16> to vector<1x256xbf16>
    %155 = vector.broadcast %154 : vector<1x256xbf16> to vector<8x256xbf16>
    %156 = arith.mulf %153, %155 : vector<8x256xbf16>
    %157 = tpu.concatenate %69, %75, %81, %87, %93, %96, %102, %108, %114, %120, %126, %132, %138, %144, %150, %156 in 0 : vector<8x256xbf16>, vector<8x256xbf16>, vector<8x256xbf16>, vector<8x256xbf16>, vector<8x256xbf16>, vector<8x256xbf16>, vector<8x256xbf16>, vector<8x256xbf16>, vector<8x256xbf16>, vector<8x256xbf16>, vector<8x256xbf16>, vector<8x256xbf16>, vector<8x256xbf16>, vector<8x256xbf16>, vector<8x256xbf16>, vector<8x256xbf16> -> vector<128x256xbf16>
    %cst_13 = arith.constant dense<0.000000e+00> : vector<16x256xf32>
    %158 = tpu.matmul %61, %157, %cst_13 {dimension_numbers = #tpu.dot_dimension_numbers<[1], [0], [0], [1], [0, 0, 1, 1], [], []>} : vector<16x128xbf16>, vector<128x256xbf16>, vector<16x256xf32> -> vector<16x256xf32>
    %159 = arith.truncf %158 : vector<16x256xf32> to vector<16x256xbf16>
    %c0_14 = arith.constant 0 : index
    %c0_15 = arith.constant 0 : index
    %160 = vector.load %arg12[%c0_14, %c0_15] : memref<256x64xbf16, #tpu.memory_space<vmem>>, vector<256x64xbf16>
    %cst_16 = arith.constant dense<0.000000e+00> : vector<16x64xf32>
    %161 = tpu.matmul %159, %160, %cst_16 {dimension_numbers = #tpu.dot_dimension_numbers<[1], [0], [0], [1], [0, 0, 1, 1], [], []>} : vector<16x256xbf16>, vector<256x64xbf16>, vector<16x64xf32> -> vector<16x64xf32>
    %cst_17 = arith.constant 2.000000e-01 : f32
    %162 = vector.broadcast %cst_17 : f32 to vector<16x64xf32>
    %163 = arith.mulf %162, %161 : vector<16x64xf32>
    %164 = arith.maximumf %161, %163 : vector<16x64xf32>
    %c0_18 = arith.constant 0 : index
    %c0_19 = arith.constant 0 : index
    %165 = vector.load %arg5[%c0_18, %c0_19] : memref<32x256xbf16, #tpu.memory_space<vmem>>, vector<32x256xbf16>
    %c0_20 = arith.constant 0 : index
    %c0_21 = arith.constant 0 : index
    %166 = vector.load %arg18[%c0_20, %c0_21] : memref<16x64xbf16, #tpu.memory_space<vmem>>, vector<16x64xbf16>
    %167 = arith.truncf %164 : vector<16x64xf32> to vector<16x64xbf16>
    %168 = vector.extract_strided_slice %167 {offsets = [0, 55], sizes = [16, 9], strides = [1, 1]} : vector<16x64xbf16> to vector<16x9xbf16>
    %169 = vector.extract_strided_slice %167 {offsets = [0, 0], sizes = [16, 55], strides = [1, 1]} : vector<16x64xbf16> to vector<16x55xbf16>
    %170 = tpu.concatenate %168, %169 in 1 : vector<16x9xbf16>, vector<16x55xbf16> -> vector<16x64xbf16>
    %171 = vector.extract_strided_slice %166 {offsets = [0, 0], sizes = [1, 64], strides = [1, 1]} : vector<16x64xbf16> to vector<1x64xbf16>
    %172 = vector.broadcast %171 : vector<1x64xbf16> to vector<16x64xbf16>
    %173 = arith.mulf %170, %172 : vector<16x64xbf16>
    %174 = vector.extract_strided_slice %167 {offsets = [0, 56], sizes = [16, 8], strides = [1, 1]} : vector<16x64xbf16> to vector<16x8xbf16>
    %175 = vector.extract_strided_slice %167 {offsets = [0, 0], sizes = [16, 56], strides = [1, 1]} : vector<16x64xbf16> to vector<16x56xbf16>
    %176 = tpu.concatenate %174, %175 in 1 : vector<16x8xbf16>, vector<16x56xbf16> -> vector<16x64xbf16>
    %177 = vector.extract_strided_slice %166 {offsets = [1, 0], sizes = [1, 64], strides = [1, 1]} : vector<16x64xbf16> to vector<1x64xbf16>
    %178 = vector.broadcast %177 : vector<1x64xbf16> to vector<16x64xbf16>
    %179 = arith.mulf %176, %178 : vector<16x64xbf16>
    %180 = vector.extract_strided_slice %167 {offsets = [0, 57], sizes = [16, 7], strides = [1, 1]} : vector<16x64xbf16> to vector<16x7xbf16>
    %181 = vector.extract_strided_slice %167 {offsets = [0, 0], sizes = [16, 57], strides = [1, 1]} : vector<16x64xbf16> to vector<16x57xbf16>
    %182 = tpu.concatenate %180, %181 in 1 : vector<16x7xbf16>, vector<16x57xbf16> -> vector<16x64xbf16>
    %183 = vector.extract_strided_slice %166 {offsets = [2, 0], sizes = [1, 64], strides = [1, 1]} : vector<16x64xbf16> to vector<1x64xbf16>
    %184 = vector.broadcast %183 : vector<1x64xbf16> to vector<16x64xbf16>
    %185 = arith.mulf %182, %184 : vector<16x64xbf16>
    %186 = vector.extract_strided_slice %167 {offsets = [0, 58], sizes = [16, 6], strides = [1, 1]} : vector<16x64xbf16> to vector<16x6xbf16>
    %187 = vector.extract_strided_slice %167 {offsets = [0, 0], sizes = [16, 58], strides = [1, 1]} : vector<16x64xbf16> to vector<16x58xbf16>
    %188 = tpu.concatenate %186, %187 in 1 : vector<16x6xbf16>, vector<16x58xbf16> -> vector<16x64xbf16>
    %189 = vector.extract_strided_slice %166 {offsets = [3, 0], sizes = [1, 64], strides = [1, 1]} : vector<16x64xbf16> to vector<1x64xbf16>
    %190 = vector.broadcast %189 : vector<1x64xbf16> to vector<16x64xbf16>
    %191 = arith.mulf %188, %190 : vector<16x64xbf16>
    %192 = vector.extract_strided_slice %167 {offsets = [0, 63], sizes = [16, 1], strides = [1, 1]} : vector<16x64xbf16> to vector<16x1xbf16>
    %193 = vector.extract_strided_slice %167 {offsets = [0, 0], sizes = [16, 63], strides = [1, 1]} : vector<16x64xbf16> to vector<16x63xbf16>
    %194 = tpu.concatenate %192, %193 in 1 : vector<16x1xbf16>, vector<16x63xbf16> -> vector<16x64xbf16>
    %195 = vector.extract_strided_slice %166 {offsets = [4, 0], sizes = [1, 64], strides = [1, 1]} : vector<16x64xbf16> to vector<1x64xbf16>
    %196 = vector.broadcast %195 : vector<1x64xbf16> to vector<16x64xbf16>
    %197 = arith.mulf %194, %196 : vector<16x64xbf16>
    %198 = vector.extract_strided_slice %166 {offsets = [5, 0], sizes = [1, 64], strides = [1, 1]} : vector<16x64xbf16> to vector<1x64xbf16>
    %199 = vector.broadcast %198 : vector<1x64xbf16> to vector<16x64xbf16>
    %200 = arith.mulf %167, %199 : vector<16x64xbf16>
    %201 = vector.extract_strided_slice %167 {offsets = [0, 1], sizes = [16, 63], strides = [1, 1]} : vector<16x64xbf16> to vector<16x63xbf16>
    %202 = vector.extract_strided_slice %167 {offsets = [0, 0], sizes = [16, 1], strides = [1, 1]} : vector<16x64xbf16> to vector<16x1xbf16>
    %203 = tpu.concatenate %201, %202 in 1 : vector<16x63xbf16>, vector<16x1xbf16> -> vector<16x64xbf16>
    %204 = vector.extract_strided_slice %166 {offsets = [6, 0], sizes = [1, 64], strides = [1, 1]} : vector<16x64xbf16> to vector<1x64xbf16>
    %205 = vector.broadcast %204 : vector<1x64xbf16> to vector<16x64xbf16>
    %206 = arith.mulf %203, %205 : vector<16x64xbf16>
    %207 = vector.extract_strided_slice %167 {offsets = [0, 2], sizes = [16, 62], strides = [1, 1]} : vector<16x64xbf16> to vector<16x62xbf16>
    %208 = vector.extract_strided_slice %167 {offsets = [0, 0], sizes = [16, 2], strides = [1, 1]} : vector<16x64xbf16> to vector<16x2xbf16>
    %209 = tpu.concatenate %207, %208 in 1 : vector<16x62xbf16>, vector<16x2xbf16> -> vector<16x64xbf16>
    %210 = vector.extract_strided_slice %166 {offsets = [7, 0], sizes = [1, 64], strides = [1, 1]} : vector<16x64xbf16> to vector<1x64xbf16>
    %211 = vector.broadcast %210 : vector<1x64xbf16> to vector<16x64xbf16>
    %212 = arith.mulf %209, %211 : vector<16x64xbf16>
    %213 = vector.extract_strided_slice %167 {offsets = [0, 7], sizes = [16, 57], strides = [1, 1]} : vector<16x64xbf16> to vector<16x57xbf16>
    %214 = vector.extract_strided_slice %167 {offsets = [0, 0], sizes = [16, 7], strides = [1, 1]} : vector<16x64xbf16> to vector<16x7xbf16>
    %215 = tpu.concatenate %213, %214 in 1 : vector<16x57xbf16>, vector<16x7xbf16> -> vector<16x64xbf16>
    %216 = vector.extract_strided_slice %166 {offsets = [8, 0], sizes = [1, 64], strides = [1, 1]} : vector<16x64xbf16> to vector<1x64xbf16>
    %217 = vector.broadcast %216 : vector<1x64xbf16> to vector<16x64xbf16>
    %218 = arith.mulf %215, %217 : vector<16x64xbf16>
    %219 = vector.extract_strided_slice %167 {offsets = [0, 8], sizes = [16, 56], strides = [1, 1]} : vector<16x64xbf16> to vector<16x56xbf16>
    %220 = vector.extract_strided_slice %167 {offsets = [0, 0], sizes = [16, 8], strides = [1, 1]} : vector<16x64xbf16> to vector<16x8xbf16>
    %221 = tpu.concatenate %219, %220 in 1 : vector<16x56xbf16>, vector<16x8xbf16> -> vector<16x64xbf16>
    %222 = vector.extract_strided_slice %166 {offsets = [9, 0], sizes = [1, 64], strides = [1, 1]} : vector<16x64xbf16> to vector<1x64xbf16>
    %223 = vector.broadcast %222 : vector<1x64xbf16> to vector<16x64xbf16>
    %224 = arith.mulf %221, %223 : vector<16x64xbf16>
    %225 = vector.extract_strided_slice %167 {offsets = [0, 9], sizes = [16, 55], strides = [1, 1]} : vector<16x64xbf16> to vector<16x55xbf16>
    %226 = vector.extract_strided_slice %167 {offsets = [0, 0], sizes = [16, 9], strides = [1, 1]} : vector<16x64xbf16> to vector<16x9xbf16>
    %227 = tpu.concatenate %225, %226 in 1 : vector<16x55xbf16>, vector<16x9xbf16> -> vector<16x64xbf16>
    %228 = vector.extract_strided_slice %166 {offsets = [10, 0], sizes = [1, 64], strides = [1, 1]} : vector<16x64xbf16> to vector<1x64xbf16>
    %229 = vector.broadcast %228 : vector<1x64xbf16> to vector<16x64xbf16>
    %230 = arith.mulf %227, %229 : vector<16x64xbf16>
    %231 = vector.extract_strided_slice %167 {offsets = [0, 10], sizes = [16, 54], strides = [1, 1]} : vector<16x64xbf16> to vector<16x54xbf16>
    %232 = vector.extract_strided_slice %167 {offsets = [0, 0], sizes = [16, 10], strides = [1, 1]} : vector<16x64xbf16> to vector<16x10xbf16>
    %233 = tpu.concatenate %231, %232 in 1 : vector<16x54xbf16>, vector<16x10xbf16> -> vector<16x64xbf16>
    %234 = vector.extract_strided_slice %166 {offsets = [11, 0], sizes = [1, 64], strides = [1, 1]} : vector<16x64xbf16> to vector<1x64xbf16>
    %235 = vector.broadcast %234 : vector<1x64xbf16> to vector<16x64xbf16>
    %236 = arith.mulf %233, %235 : vector<16x64xbf16>
    %237 = vector.extract_strided_slice %167 {offsets = [0, 15], sizes = [16, 49], strides = [1, 1]} : vector<16x64xbf16> to vector<16x49xbf16>
    %238 = vector.extract_strided_slice %167 {offsets = [0, 0], sizes = [16, 15], strides = [1, 1]} : vector<16x64xbf16> to vector<16x15xbf16>
    %239 = tpu.concatenate %237, %238 in 1 : vector<16x49xbf16>, vector<16x15xbf16> -> vector<16x64xbf16>
    %240 = vector.extract_strided_slice %166 {offsets = [12, 0], sizes = [1, 64], strides = [1, 1]} : vector<16x64xbf16> to vector<1x64xbf16>
    %241 = vector.broadcast %240 : vector<1x64xbf16> to vector<16x64xbf16>
    %242 = arith.mulf %239, %241 : vector<16x64xbf16>
    %243 = vector.extract_strided_slice %167 {offsets = [0, 16], sizes = [16, 48], strides = [1, 1]} : vector<16x64xbf16> to vector<16x48xbf16>
    %244 = vector.extract_strided_slice %167 {offsets = [0, 0], sizes = [16, 16], strides = [1, 1]} : vector<16x64xbf16> to vector<16x16xbf16>
    %245 = tpu.concatenate %243, %244 in 1 : vector<16x48xbf16>, vector<16x16xbf16> -> vector<16x64xbf16>
    %246 = vector.extract_strided_slice %166 {offsets = [13, 0], sizes = [1, 64], strides = [1, 1]} : vector<16x64xbf16> to vector<1x64xbf16>
    %247 = vector.broadcast %246 : vector<1x64xbf16> to vector<16x64xbf16>
    %248 = arith.mulf %245, %247 : vector<16x64xbf16>
    %249 = vector.extract_strided_slice %167 {offsets = [0, 17], sizes = [16, 47], strides = [1, 1]} : vector<16x64xbf16> to vector<16x47xbf16>
    %250 = vector.extract_strided_slice %167 {offsets = [0, 0], sizes = [16, 17], strides = [1, 1]} : vector<16x64xbf16> to vector<16x17xbf16>
    %251 = tpu.concatenate %249, %250 in 1 : vector<16x47xbf16>, vector<16x17xbf16> -> vector<16x64xbf16>
    %252 = vector.extract_strided_slice %166 {offsets = [14, 0], sizes = [1, 64], strides = [1, 1]} : vector<16x64xbf16> to vector<1x64xbf16>
    %253 = vector.broadcast %252 : vector<1x64xbf16> to vector<16x64xbf16>
    %254 = arith.mulf %251, %253 : vector<16x64xbf16>
    %255 = vector.extract_strided_slice %167 {offsets = [0, 18], sizes = [16, 46], strides = [1, 1]} : vector<16x64xbf16> to vector<16x46xbf16>
    %256 = vector.extract_strided_slice %167 {offsets = [0, 0], sizes = [16, 18], strides = [1, 1]} : vector<16x64xbf16> to vector<16x18xbf16>
    %257 = tpu.concatenate %255, %256 in 1 : vector<16x46xbf16>, vector<16x18xbf16> -> vector<16x64xbf16>
    %258 = vector.extract_strided_slice %166 {offsets = [15, 0], sizes = [1, 64], strides = [1, 1]} : vector<16x64xbf16> to vector<1x64xbf16>
    %259 = vector.broadcast %258 : vector<1x64xbf16> to vector<16x64xbf16>
    %260 = arith.mulf %257, %259 : vector<16x64xbf16>
    %261 = tpu.concatenate %173, %179, %185, %191, %197, %200, %206, %212, %218, %224, %230, %236, %242, %248, %254, %260 in 0 : vector<16x64xbf16>, vector<16x64xbf16>, vector<16x64xbf16>, vector<16x64xbf16>, vector<16x64xbf16>, vector<16x64xbf16>, vector<16x64xbf16>, vector<16x64xbf16>, vector<16x64xbf16>, vector<16x64xbf16>, vector<16x64xbf16>, vector<16x64xbf16>, vector<16x64xbf16>, vector<16x64xbf16>, vector<16x64xbf16>, vector<16x64xbf16> -> vector<256x64xbf16>
    %cst_22 = arith.constant dense<0.000000e+00> : vector<32x64xf32>
    %262 = tpu.matmul %165, %261, %cst_22 {dimension_numbers = #tpu.dot_dimension_numbers<[1], [0], [0], [1], [0, 0, 1, 1], [], []>} : vector<32x256xbf16>, vector<256x64xbf16>, vector<32x64xf32> -> vector<32x64xf32>
    %263 = arith.truncf %262 : vector<32x64xf32> to vector<32x64xbf16>
    %c0_23 = arith.constant 0 : index
    %c0_24 = arith.constant 0 : index
    %264 = vector.load %arg13[%c0_23, %c0_24] : memref<64x16xbf16, #tpu.memory_space<vmem>>, vector<64x16xbf16>
    %cst_25 = arith.constant dense<0.000000e+00> : vector<32x16xf32>
    %265 = tpu.matmul %263, %264, %cst_25 {dimension_numbers = #tpu.dot_dimension_numbers<[1], [0], [0], [1], [0, 0, 1, 1], [], []>} : vector<32x64xbf16>, vector<64x16xbf16>, vector<32x16xf32> -> vector<32x16xf32>
    %cst_26 = arith.constant 2.000000e-01 : f32
    %266 = vector.broadcast %cst_26 : f32 to vector<32x16xf32>
    %267 = arith.mulf %266, %265 : vector<32x16xf32>
    %268 = arith.maximumf %265, %267 : vector<32x16xf32>
    %269 = arith.truncf %268 : vector<32x16xf32> to vector<32x16xbf16>
    %c0_27 = arith.constant 0 : index
    %c0_28 = arith.constant 0 : index
    %270 = vector.load %arg14[%c0_27, %c0_28] : memref<16x64xbf16, #tpu.memory_space<vmem>>, vector<16x64xbf16>
    %cst_29 = arith.constant dense<0.000000e+00> : vector<32x64xf32>
    %271 = tpu.matmul %269, %270, %cst_29 {dimension_numbers = #tpu.dot_dimension_numbers<[1], [0], [0], [1], [0, 0, 1, 1], [], []>} : vector<32x16xbf16>, vector<16x64xbf16>, vector<32x64xf32> -> vector<32x64xf32>
    %c0_30 = arith.constant 0 : index
    %c0_31 = arith.constant 0 : index
    %272 = vector.load %arg6[%c0_30, %c0_31] : memref<16x288xbf16, #tpu.memory_space<vmem>>, vector<16x288xbf16>
    %c0_32 = arith.constant 0 : index
    %c0_33 = arith.constant 0 : index
    %273 = vector.load %arg19[%c0_32, %c0_33] : memref<9x64xbf16, #tpu.memory_space<vmem>>, vector<9x64xbf16>
    %274 = arith.truncf %271 : vector<32x64xf32> to vector<32x64xbf16>
    %275 = vector.extract_strided_slice %274 {offsets = [0, 55], sizes = [32, 9], strides = [1, 1]} : vector<32x64xbf16> to vector<32x9xbf16>
    %276 = vector.extract_strided_slice %274 {offsets = [0, 0], sizes = [32, 55], strides = [1, 1]} : vector<32x64xbf16> to vector<32x55xbf16>
    %277 = tpu.concatenate %275, %276 in 1 : vector<32x9xbf16>, vector<32x55xbf16> -> vector<32x64xbf16>
    %278 = vector.extract_strided_slice %273 {offsets = [0, 0], sizes = [1, 64], strides = [1, 1]} : vector<9x64xbf16> to vector<1x64xbf16>
    %279 = vector.broadcast %278 : vector<1x64xbf16> to vector<32x64xbf16>
    %280 = arith.mulf %277, %279 : vector<32x64xbf16>
    %281 = vector.extract_strided_slice %274 {offsets = [0, 56], sizes = [32, 8], strides = [1, 1]} : vector<32x64xbf16> to vector<32x8xbf16>
    %282 = vector.extract_strided_slice %274 {offsets = [0, 0], sizes = [32, 56], strides = [1, 1]} : vector<32x64xbf16> to vector<32x56xbf16>
    %283 = tpu.concatenate %281, %282 in 1 : vector<32x8xbf16>, vector<32x56xbf16> -> vector<32x64xbf16>
    %284 = vector.extract_strided_slice %273 {offsets = [1, 0], sizes = [1, 64], strides = [1, 1]} : vector<9x64xbf16> to vector<1x64xbf16>
    %285 = vector.broadcast %284 : vector<1x64xbf16> to vector<32x64xbf16>
    %286 = arith.mulf %283, %285 : vector<32x64xbf16>
    %287 = vector.extract_strided_slice %274 {offsets = [0, 57], sizes = [32, 7], strides = [1, 1]} : vector<32x64xbf16> to vector<32x7xbf16>
    %288 = vector.extract_strided_slice %274 {offsets = [0, 0], sizes = [32, 57], strides = [1, 1]} : vector<32x64xbf16> to vector<32x57xbf16>
    %289 = tpu.concatenate %287, %288 in 1 : vector<32x7xbf16>, vector<32x57xbf16> -> vector<32x64xbf16>
    %290 = vector.extract_strided_slice %273 {offsets = [2, 0], sizes = [1, 64], strides = [1, 1]} : vector<9x64xbf16> to vector<1x64xbf16>
    %291 = vector.broadcast %290 : vector<1x64xbf16> to vector<32x64xbf16>
    %292 = arith.mulf %289, %291 : vector<32x64xbf16>
    %293 = vector.extract_strided_slice %274 {offsets = [0, 63], sizes = [32, 1], strides = [1, 1]} : vector<32x64xbf16> to vector<32x1xbf16>
    %294 = vector.extract_strided_slice %274 {offsets = [0, 0], sizes = [32, 63], strides = [1, 1]} : vector<32x64xbf16> to vector<32x63xbf16>
    %295 = tpu.concatenate %293, %294 in 1 : vector<32x1xbf16>, vector<32x63xbf16> -> vector<32x64xbf16>
    %296 = vector.extract_strided_slice %273 {offsets = [3, 0], sizes = [1, 64], strides = [1, 1]} : vector<9x64xbf16> to vector<1x64xbf16>
    %297 = vector.broadcast %296 : vector<1x64xbf16> to vector<32x64xbf16>
    %298 = arith.mulf %295, %297 : vector<32x64xbf16>
    %299 = vector.extract_strided_slice %274 {offsets = [0, 1], sizes = [32, 63], strides = [1, 1]} : vector<32x64xbf16> to vector<32x63xbf16>
    %300 = vector.extract_strided_slice %274 {offsets = [0, 0], sizes = [32, 1], strides = [1, 1]} : vector<32x64xbf16> to vector<32x1xbf16>
    %301 = tpu.concatenate %299, %300 in 1 : vector<32x63xbf16>, vector<32x1xbf16> -> vector<32x64xbf16>
    %302 = vector.extract_strided_slice %273 {offsets = [5, 0], sizes = [1, 64], strides = [1, 1]} : vector<9x64xbf16> to vector<1x64xbf16>
    %303 = vector.broadcast %302 : vector<1x64xbf16> to vector<32x64xbf16>
    %304 = arith.mulf %301, %303 : vector<32x64xbf16>
    %305 = vector.extract_strided_slice %274 {offsets = [0, 7], sizes = [32, 57], strides = [1, 1]} : vector<32x64xbf16> to vector<32x57xbf16>
    %306 = vector.extract_strided_slice %274 {offsets = [0, 0], sizes = [32, 7], strides = [1, 1]} : vector<32x64xbf16> to vector<32x7xbf16>
    %307 = tpu.concatenate %305, %306 in 1 : vector<32x57xbf16>, vector<32x7xbf16> -> vector<32x64xbf16>
    %308 = vector.extract_strided_slice %273 {offsets = [6, 0], sizes = [1, 64], strides = [1, 1]} : vector<9x64xbf16> to vector<1x64xbf16>
    %309 = vector.broadcast %308 : vector<1x64xbf16> to vector<32x64xbf16>
    %310 = arith.mulf %307, %309 : vector<32x64xbf16>
    %311 = vector.extract_strided_slice %274 {offsets = [0, 8], sizes = [32, 56], strides = [1, 1]} : vector<32x64xbf16> to vector<32x56xbf16>
    %312 = vector.extract_strided_slice %274 {offsets = [0, 0], sizes = [32, 8], strides = [1, 1]} : vector<32x64xbf16> to vector<32x8xbf16>
    %313 = tpu.concatenate %311, %312 in 1 : vector<32x56xbf16>, vector<32x8xbf16> -> vector<32x64xbf16>
    %314 = vector.extract_strided_slice %273 {offsets = [7, 0], sizes = [1, 64], strides = [1, 1]} : vector<9x64xbf16> to vector<1x64xbf16>
    %315 = vector.broadcast %314 : vector<1x64xbf16> to vector<32x64xbf16>
    %316 = arith.mulf %313, %315 : vector<32x64xbf16>
    %317 = tpu.concatenate %280, %286, %292, %298, %274, %304, %310, %316 in 0 : vector<32x64xbf16>, vector<32x64xbf16>, vector<32x64xbf16>, vector<32x64xbf16>, vector<32x64xbf16>, vector<32x64xbf16>, vector<32x64xbf16>, vector<32x64xbf16> -> vector<256x64xbf16>
    %318 = vector.extract_strided_slice %272 {offsets = [0, 0], sizes = [16, 256], strides = [1, 1]} : vector<16x288xbf16> to vector<16x256xbf16>
    %cst_34 = arith.constant dense<0.000000e+00> : vector<16x64xf32>
    %319 = tpu.matmul %318, %317, %cst_34 {dimension_numbers = #tpu.dot_dimension_numbers<[1], [0], [0], [1], [0, 0, 1, 1], [], []>} : vector<16x256xbf16>, vector<256x64xbf16>, vector<16x64xf32> -> vector<16x64xf32>
    %320 = vector.extract_strided_slice %274 {offsets = [0, 9], sizes = [32, 55], strides = [1, 1]} : vector<32x64xbf16> to vector<32x55xbf16>
    %321 = vector.extract_strided_slice %274 {offsets = [0, 0], sizes = [32, 9], strides = [1, 1]} : vector<32x64xbf16> to vector<32x9xbf16>
    %322 = tpu.concatenate %320, %321 in 1 : vector<32x55xbf16>, vector<32x9xbf16> -> vector<32x64xbf16>
    %323 = vector.extract_strided_slice %273 {offsets = [8, 0], sizes = [1, 64], strides = [1, 1]} : vector<9x64xbf16> to vector<1x64xbf16>
    %324 = vector.broadcast %323 : vector<1x64xbf16> to vector<32x64xbf16>
    %325 = arith.mulf %322, %324 : vector<32x64xbf16>
    %326 = vector.extract_strided_slice %272 {offsets = [0, 256], sizes = [16, 32], strides = [1, 1]} : vector<16x288xbf16> to vector<16x32xbf16>
    %cst_35 = arith.constant dense<0.000000e+00> : vector<16x64xf32>
    %327 = tpu.matmul %326, %325, %cst_35 {dimension_numbers = #tpu.dot_dimension_numbers<[1], [0], [0], [1], [0, 0, 1, 1], [], []>} : vector<16x32xbf16>, vector<32x64xbf16>, vector<16x64xf32> -> vector<16x64xf32>
    %328 = arith.addf %319, %327 : vector<16x64xf32>
    %cst_36 = arith.constant 2.000000e-01 : f32
    %329 = vector.broadcast %cst_36 : f32 to vector<16x64xf32>
    %330 = arith.mulf %329, %328 : vector<16x64xf32>
    %331 = arith.maximumf %328, %330 : vector<16x64xf32>
    %332 = arith.addf %331, %164 : vector<16x64xf32>
    %333 = arith.truncf %332 : vector<16x64xf32> to vector<16x64xbf16>
    %c0_37 = arith.constant 0 : index
    %c0_38 = arith.constant 0 : index
    %334 = vector.load %arg15[%c0_37, %c0_38] : memref<64x256xbf16, #tpu.memory_space<vmem>>, vector<64x256xbf16>
    %cst_39 = arith.constant dense<0.000000e+00> : vector<16x256xf32>
    %335 = tpu.matmul %333, %334, %cst_39 {dimension_numbers = #tpu.dot_dimension_numbers<[1], [0], [0], [1], [0, 0, 1, 1], [], []>} : vector<16x64xbf16>, vector<64x256xbf16>, vector<16x256xf32> -> vector<16x256xf32>
    %c0_40 = arith.constant 0 : index
    %c0_41 = arith.constant 0 : index
    %336 = vector.load %arg7[%c0_40, %c0_41] : memref<8x144xbf16, #tpu.memory_space<vmem>>, vector<8x144xbf16>
    %c0_42 = arith.constant 0 : index
    %c0_43 = arith.constant 0 : index
    %337 = vector.load %arg16[%c0_42, %c0_43] : memref<9x256xbf16, #tpu.memory_space<vmem>>, vector<9x256xbf16>
    %338 = arith.truncf %335 : vector<16x256xf32> to vector<16x256xbf16>
    %339 = vector.extract_strided_slice %338 {offsets = [0, 239], sizes = [16, 17], strides = [1, 1]} : vector<16x256xbf16> to vector<16x17xbf16>
    %340 = vector.extract_strided_slice %338 {offsets = [0, 0], sizes = [16, 239], strides = [1, 1]} : vector<16x256xbf16> to vector<16x239xbf16>
    %341 = tpu.concatenate %339, %340 in 1 : vector<16x17xbf16>, vector<16x239xbf16> -> vector<16x256xbf16>
    %342 = vector.extract_strided_slice %337 {offsets = [0, 0], sizes = [1, 256], strides = [1, 1]} : vector<9x256xbf16> to vector<1x256xbf16>
    %343 = vector.broadcast %342 : vector<1x256xbf16> to vector<16x256xbf16>
    %344 = arith.mulf %341, %343 : vector<16x256xbf16>
    %345 = vector.extract_strided_slice %338 {offsets = [0, 240], sizes = [16, 16], strides = [1, 1]} : vector<16x256xbf16> to vector<16x16xbf16>
    %346 = vector.extract_strided_slice %338 {offsets = [0, 0], sizes = [16, 240], strides = [1, 1]} : vector<16x256xbf16> to vector<16x240xbf16>
    %347 = tpu.concatenate %345, %346 in 1 : vector<16x16xbf16>, vector<16x240xbf16> -> vector<16x256xbf16>
    %348 = vector.extract_strided_slice %337 {offsets = [1, 0], sizes = [1, 256], strides = [1, 1]} : vector<9x256xbf16> to vector<1x256xbf16>
    %349 = vector.broadcast %348 : vector<1x256xbf16> to vector<16x256xbf16>
    %350 = arith.mulf %347, %349 : vector<16x256xbf16>
    %351 = vector.extract_strided_slice %338 {offsets = [0, 241], sizes = [16, 15], strides = [1, 1]} : vector<16x256xbf16> to vector<16x15xbf16>
    %352 = vector.extract_strided_slice %338 {offsets = [0, 0], sizes = [16, 241], strides = [1, 1]} : vector<16x256xbf16> to vector<16x241xbf16>
    %353 = tpu.concatenate %351, %352 in 1 : vector<16x15xbf16>, vector<16x241xbf16> -> vector<16x256xbf16>
    %354 = vector.extract_strided_slice %337 {offsets = [2, 0], sizes = [1, 256], strides = [1, 1]} : vector<9x256xbf16> to vector<1x256xbf16>
    %355 = vector.broadcast %354 : vector<1x256xbf16> to vector<16x256xbf16>
    %356 = arith.mulf %353, %355 : vector<16x256xbf16>
    %357 = vector.extract_strided_slice %338 {offsets = [0, 255], sizes = [16, 1], strides = [1, 1]} : vector<16x256xbf16> to vector<16x1xbf16>
    %358 = vector.extract_strided_slice %338 {offsets = [0, 0], sizes = [16, 255], strides = [1, 1]} : vector<16x256xbf16> to vector<16x255xbf16>
    %359 = tpu.concatenate %357, %358 in 1 : vector<16x1xbf16>, vector<16x255xbf16> -> vector<16x256xbf16>
    %360 = vector.extract_strided_slice %337 {offsets = [3, 0], sizes = [1, 256], strides = [1, 1]} : vector<9x256xbf16> to vector<1x256xbf16>
    %361 = vector.broadcast %360 : vector<1x256xbf16> to vector<16x256xbf16>
    %362 = arith.mulf %359, %361 : vector<16x256xbf16>
    %363 = vector.extract_strided_slice %338 {offsets = [0, 1], sizes = [16, 255], strides = [1, 1]} : vector<16x256xbf16> to vector<16x255xbf16>
    %364 = vector.extract_strided_slice %338 {offsets = [0, 0], sizes = [16, 1], strides = [1, 1]} : vector<16x256xbf16> to vector<16x1xbf16>
    %365 = tpu.concatenate %363, %364 in 1 : vector<16x255xbf16>, vector<16x1xbf16> -> vector<16x256xbf16>
    %366 = vector.extract_strided_slice %337 {offsets = [5, 0], sizes = [1, 256], strides = [1, 1]} : vector<9x256xbf16> to vector<1x256xbf16>
    %367 = vector.broadcast %366 : vector<1x256xbf16> to vector<16x256xbf16>
    %368 = arith.mulf %365, %367 : vector<16x256xbf16>
    %369 = vector.extract_strided_slice %338 {offsets = [0, 15], sizes = [16, 241], strides = [1, 1]} : vector<16x256xbf16> to vector<16x241xbf16>
    %370 = vector.extract_strided_slice %338 {offsets = [0, 0], sizes = [16, 15], strides = [1, 1]} : vector<16x256xbf16> to vector<16x15xbf16>
    %371 = tpu.concatenate %369, %370 in 1 : vector<16x241xbf16>, vector<16x15xbf16> -> vector<16x256xbf16>
    %372 = vector.extract_strided_slice %337 {offsets = [6, 0], sizes = [1, 256], strides = [1, 1]} : vector<9x256xbf16> to vector<1x256xbf16>
    %373 = vector.broadcast %372 : vector<1x256xbf16> to vector<16x256xbf16>
    %374 = arith.mulf %371, %373 : vector<16x256xbf16>
    %375 = vector.extract_strided_slice %338 {offsets = [0, 16], sizes = [16, 240], strides = [1, 1]} : vector<16x256xbf16> to vector<16x240xbf16>
    %376 = vector.extract_strided_slice %338 {offsets = [0, 0], sizes = [16, 16], strides = [1, 1]} : vector<16x256xbf16> to vector<16x16xbf16>
    %377 = tpu.concatenate %375, %376 in 1 : vector<16x240xbf16>, vector<16x16xbf16> -> vector<16x256xbf16>
    %378 = vector.extract_strided_slice %337 {offsets = [7, 0], sizes = [1, 256], strides = [1, 1]} : vector<9x256xbf16> to vector<1x256xbf16>
    %379 = vector.broadcast %378 : vector<1x256xbf16> to vector<16x256xbf16>
    %380 = arith.mulf %377, %379 : vector<16x256xbf16>
    %381 = vector.extract_strided_slice %338 {offsets = [0, 17], sizes = [16, 239], strides = [1, 1]} : vector<16x256xbf16> to vector<16x239xbf16>
    %382 = vector.extract_strided_slice %338 {offsets = [0, 0], sizes = [16, 17], strides = [1, 1]} : vector<16x256xbf16> to vector<16x17xbf16>
    %383 = tpu.concatenate %381, %382 in 1 : vector<16x239xbf16>, vector<16x17xbf16> -> vector<16x256xbf16>
    %384 = vector.extract_strided_slice %337 {offsets = [8, 0], sizes = [1, 256], strides = [1, 1]} : vector<9x256xbf16> to vector<1x256xbf16>
    %385 = vector.broadcast %384 : vector<1x256xbf16> to vector<16x256xbf16>
    %386 = arith.mulf %383, %385 : vector<16x256xbf16>
    %387 = tpu.concatenate %344, %350, %356, %362, %338, %368, %374, %380, %386 in 0 : vector<16x256xbf16>, vector<16x256xbf16>, vector<16x256xbf16>, vector<16x256xbf16>, vector<16x256xbf16>, vector<16x256xbf16>, vector<16x256xbf16>, vector<16x256xbf16>, vector<16x256xbf16> -> vector<144x256xbf16>
    %cst_44 = arith.constant dense<0.000000e+00> : vector<8x256xf32>
    %388 = tpu.matmul %336, %387, %cst_44 {dimension_numbers = #tpu.dot_dimension_numbers<[1], [0], [0], [1], [0, 0, 1, 1], [], []>} : vector<8x144xbf16>, vector<144x256xbf16>, vector<8x256xf32> -> vector<8x256xf32>
    %cst_45 = arith.constant 2.000000e-01 : f32
    %389 = vector.broadcast %cst_45 : f32 to vector<8x256xf32>
    %390 = arith.mulf %389, %388 : vector<8x256xf32>
    %391 = arith.maximumf %388, %390 : vector<8x256xf32>
    %392 = arith.addf %391, %60 : vector<8x256xf32>
    %c0_46 = arith.constant 0 : index
    %c0_47 = arith.constant 0 : index
    %393 = vector.load %arg8[%c0_46, %c0_47] : memref<8x72xbf16, #tpu.memory_space<vmem>>, vector<8x72xbf16>
    %c0_48 = arith.constant 0 : index
    %c0_49 = arith.constant 0 : index
    %394 = vector.load %arg16[%c0_48, %c0_49] : memref<9x256xbf16, #tpu.memory_space<vmem>>, vector<9x256xbf16>
    %395 = arith.truncf %392 : vector<8x256xf32> to vector<8x256xbf16>
    %396 = vector.extract_strided_slice %395 {offsets = [0, 239], sizes = [8, 17], strides = [1, 1]} : vector<8x256xbf16> to vector<8x17xbf16>
    %397 = vector.extract_strided_slice %395 {offsets = [0, 0], sizes = [8, 239], strides = [1, 1]} : vector<8x256xbf16> to vector<8x239xbf16>
    %398 = tpu.concatenate %396, %397 in 1 : vector<8x17xbf16>, vector<8x239xbf16> -> vector<8x256xbf16>
    %399 = vector.extract_strided_slice %394 {offsets = [0, 0], sizes = [1, 256], strides = [1, 1]} : vector<9x256xbf16> to vector<1x256xbf16>
    %400 = vector.broadcast %399 : vector<1x256xbf16> to vector<8x256xbf16>
    %401 = arith.mulf %398, %400 : vector<8x256xbf16>
    %402 = vector.extract_strided_slice %395 {offsets = [0, 240], sizes = [8, 16], strides = [1, 1]} : vector<8x256xbf16> to vector<8x16xbf16>
    %403 = vector.extract_strided_slice %395 {offsets = [0, 0], sizes = [8, 240], strides = [1, 1]} : vector<8x256xbf16> to vector<8x240xbf16>
    %404 = tpu.concatenate %402, %403 in 1 : vector<8x16xbf16>, vector<8x240xbf16> -> vector<8x256xbf16>
    %405 = vector.extract_strided_slice %394 {offsets = [1, 0], sizes = [1, 256], strides = [1, 1]} : vector<9x256xbf16> to vector<1x256xbf16>
    %406 = vector.broadcast %405 : vector<1x256xbf16> to vector<8x256xbf16>
    %407 = arith.mulf %404, %406 : vector<8x256xbf16>
    %408 = vector.extract_strided_slice %395 {offsets = [0, 241], sizes = [8, 15], strides = [1, 1]} : vector<8x256xbf16> to vector<8x15xbf16>
    %409 = vector.extract_strided_slice %395 {offsets = [0, 0], sizes = [8, 241], strides = [1, 1]} : vector<8x256xbf16> to vector<8x241xbf16>
    %410 = tpu.concatenate %408, %409 in 1 : vector<8x15xbf16>, vector<8x241xbf16> -> vector<8x256xbf16>
    %411 = vector.extract_strided_slice %394 {offsets = [2, 0], sizes = [1, 256], strides = [1, 1]} : vector<9x256xbf16> to vector<1x256xbf16>
    %412 = vector.broadcast %411 : vector<1x256xbf16> to vector<8x256xbf16>
    %413 = arith.mulf %410, %412 : vector<8x256xbf16>
    %414 = vector.extract_strided_slice %395 {offsets = [0, 255], sizes = [8, 1], strides = [1, 1]} : vector<8x256xbf16> to vector<8x1xbf16>
    %415 = vector.extract_strided_slice %395 {offsets = [0, 0], sizes = [8, 255], strides = [1, 1]} : vector<8x256xbf16> to vector<8x255xbf16>
    %416 = tpu.concatenate %414, %415 in 1 : vector<8x1xbf16>, vector<8x255xbf16> -> vector<8x256xbf16>
    %417 = vector.extract_strided_slice %394 {offsets = [3, 0], sizes = [1, 256], strides = [1, 1]} : vector<9x256xbf16> to vector<1x256xbf16>
    %418 = vector.broadcast %417 : vector<1x256xbf16> to vector<8x256xbf16>
    %419 = arith.mulf %416, %418 : vector<8x256xbf16>
    %420 = vector.extract_strided_slice %395 {offsets = [0, 1], sizes = [8, 255], strides = [1, 1]} : vector<8x256xbf16> to vector<8x255xbf16>
    %421 = vector.extract_strided_slice %395 {offsets = [0, 0], sizes = [8, 1], strides = [1, 1]} : vector<8x256xbf16> to vector<8x1xbf16>
    %422 = tpu.concatenate %420, %421 in 1 : vector<8x255xbf16>, vector<8x1xbf16> -> vector<8x256xbf16>
    %423 = vector.extract_strided_slice %394 {offsets = [5, 0], sizes = [1, 256], strides = [1, 1]} : vector<9x256xbf16> to vector<1x256xbf16>
    %424 = vector.broadcast %423 : vector<1x256xbf16> to vector<8x256xbf16>
    %425 = arith.mulf %422, %424 : vector<8x256xbf16>
    %426 = vector.extract_strided_slice %395 {offsets = [0, 15], sizes = [8, 241], strides = [1, 1]} : vector<8x256xbf16> to vector<8x241xbf16>
    %427 = vector.extract_strided_slice %395 {offsets = [0, 0], sizes = [8, 15], strides = [1, 1]} : vector<8x256xbf16> to vector<8x15xbf16>
    %428 = tpu.concatenate %426, %427 in 1 : vector<8x241xbf16>, vector<8x15xbf16> -> vector<8x256xbf16>
    %429 = vector.extract_strided_slice %394 {offsets = [6, 0], sizes = [1, 256], strides = [1, 1]} : vector<9x256xbf16> to vector<1x256xbf16>
    %430 = vector.broadcast %429 : vector<1x256xbf16> to vector<8x256xbf16>
    %431 = arith.mulf %428, %430 : vector<8x256xbf16>
    %432 = vector.extract_strided_slice %395 {offsets = [0, 16], sizes = [8, 240], strides = [1, 1]} : vector<8x256xbf16> to vector<8x240xbf16>
    %433 = vector.extract_strided_slice %395 {offsets = [0, 0], sizes = [8, 16], strides = [1, 1]} : vector<8x256xbf16> to vector<8x16xbf16>
    %434 = tpu.concatenate %432, %433 in 1 : vector<8x240xbf16>, vector<8x16xbf16> -> vector<8x256xbf16>
    %435 = vector.extract_strided_slice %394 {offsets = [7, 0], sizes = [1, 256], strides = [1, 1]} : vector<9x256xbf16> to vector<1x256xbf16>
    %436 = vector.broadcast %435 : vector<1x256xbf16> to vector<8x256xbf16>
    %437 = arith.mulf %434, %436 : vector<8x256xbf16>
    %438 = vector.extract_strided_slice %395 {offsets = [0, 17], sizes = [8, 239], strides = [1, 1]} : vector<8x256xbf16> to vector<8x239xbf16>
    %439 = vector.extract_strided_slice %395 {offsets = [0, 0], sizes = [8, 17], strides = [1, 1]} : vector<8x256xbf16> to vector<8x17xbf16>
    %440 = tpu.concatenate %438, %439 in 1 : vector<8x239xbf16>, vector<8x17xbf16> -> vector<8x256xbf16>
    %441 = vector.extract_strided_slice %394 {offsets = [8, 0], sizes = [1, 256], strides = [1, 1]} : vector<9x256xbf16> to vector<1x256xbf16>
    %442 = vector.broadcast %441 : vector<1x256xbf16> to vector<8x256xbf16>
    %443 = arith.mulf %440, %442 : vector<8x256xbf16>
    %444 = tpu.concatenate %401, %407, %413, %419, %395, %425, %431, %437, %443 in 0 : vector<8x256xbf16>, vector<8x256xbf16>, vector<8x256xbf16>, vector<8x256xbf16>, vector<8x256xbf16>, vector<8x256xbf16>, vector<8x256xbf16>, vector<8x256xbf16>, vector<8x256xbf16> -> vector<72x256xbf16>
    %cst_50 = arith.constant dense<0.000000e+00> : vector<8x256xf32>
    %445 = tpu.matmul %393, %444, %cst_50 {dimension_numbers = #tpu.dot_dimension_numbers<[1], [0], [0], [1], [0, 0, 1, 1], [], []>} : vector<8x72xbf16>, vector<72x256xbf16>, vector<8x256xf32> -> vector<8x256xf32>
    %cst_51 = arith.constant 2.000000e-01 : f32
    %446 = vector.broadcast %cst_51 : f32 to vector<8x256xf32>
    %447 = arith.mulf %446, %445 : vector<8x256xf32>
    %448 = arith.maximumf %445, %447 : vector<8x256xf32>
    %c0_52 = arith.constant 0 : index
    %c0_53 = arith.constant 0 : index
    %449 = vector.load %arg9[%c0_52, %c0_53] : memref<8x72xbf16, #tpu.memory_space<vmem>>, vector<8x72xbf16>
    %c0_54 = arith.constant 0 : index
    %c0_55 = arith.constant 0 : index
    %450 = vector.load %arg16[%c0_54, %c0_55] : memref<9x256xbf16, #tpu.memory_space<vmem>>, vector<9x256xbf16>
    %451 = arith.truncf %448 : vector<8x256xf32> to vector<8x256xbf16>
    %452 = vector.extract_strided_slice %451 {offsets = [0, 239], sizes = [8, 17], strides = [1, 1]} : vector<8x256xbf16> to vector<8x17xbf16>
    %453 = vector.extract_strided_slice %451 {offsets = [0, 0], sizes = [8, 239], strides = [1, 1]} : vector<8x256xbf16> to vector<8x239xbf16>
    %454 = tpu.concatenate %452, %453 in 1 : vector<8x17xbf16>, vector<8x239xbf16> -> vector<8x256xbf16>
    %455 = vector.extract_strided_slice %450 {offsets = [0, 0], sizes = [1, 256], strides = [1, 1]} : vector<9x256xbf16> to vector<1x256xbf16>
    %456 = vector.broadcast %455 : vector<1x256xbf16> to vector<8x256xbf16>
    %457 = arith.mulf %454, %456 : vector<8x256xbf16>
    %458 = vector.extract_strided_slice %451 {offsets = [0, 240], sizes = [8, 16], strides = [1, 1]} : vector<8x256xbf16> to vector<8x16xbf16>
    %459 = vector.extract_strided_slice %451 {offsets = [0, 0], sizes = [8, 240], strides = [1, 1]} : vector<8x256xbf16> to vector<8x240xbf16>
    %460 = tpu.concatenate %458, %459 in 1 : vector<8x16xbf16>, vector<8x240xbf16> -> vector<8x256xbf16>
    %461 = vector.extract_strided_slice %450 {offsets = [1, 0], sizes = [1, 256], strides = [1, 1]} : vector<9x256xbf16> to vector<1x256xbf16>
    %462 = vector.broadcast %461 : vector<1x256xbf16> to vector<8x256xbf16>
    %463 = arith.mulf %460, %462 : vector<8x256xbf16>
    %464 = vector.extract_strided_slice %451 {offsets = [0, 241], sizes = [8, 15], strides = [1, 1]} : vector<8x256xbf16> to vector<8x15xbf16>
    %465 = vector.extract_strided_slice %451 {offsets = [0, 0], sizes = [8, 241], strides = [1, 1]} : vector<8x256xbf16> to vector<8x241xbf16>
    %466 = tpu.concatenate %464, %465 in 1 : vector<8x15xbf16>, vector<8x241xbf16> -> vector<8x256xbf16>
    %467 = vector.extract_strided_slice %450 {offsets = [2, 0], sizes = [1, 256], strides = [1, 1]} : vector<9x256xbf16> to vector<1x256xbf16>
    %468 = vector.broadcast %467 : vector<1x256xbf16> to vector<8x256xbf16>
    %469 = arith.mulf %466, %468 : vector<8x256xbf16>
    %470 = vector.extract_strided_slice %451 {offsets = [0, 255], sizes = [8, 1], strides = [1, 1]} : vector<8x256xbf16> to vector<8x1xbf16>
    %471 = vector.extract_strided_slice %451 {offsets = [0, 0], sizes = [8, 255], strides = [1, 1]} : vector<8x256xbf16> to vector<8x255xbf16>
    %472 = tpu.concatenate %470, %471 in 1 : vector<8x1xbf16>, vector<8x255xbf16> -> vector<8x256xbf16>
    %473 = vector.extract_strided_slice %450 {offsets = [3, 0], sizes = [1, 256], strides = [1, 1]} : vector<9x256xbf16> to vector<1x256xbf16>
    %474 = vector.broadcast %473 : vector<1x256xbf16> to vector<8x256xbf16>
    %475 = arith.mulf %472, %474 : vector<8x256xbf16>
    %476 = vector.extract_strided_slice %451 {offsets = [0, 1], sizes = [8, 255], strides = [1, 1]} : vector<8x256xbf16> to vector<8x255xbf16>
    %477 = vector.extract_strided_slice %451 {offsets = [0, 0], sizes = [8, 1], strides = [1, 1]} : vector<8x256xbf16> to vector<8x1xbf16>
    %478 = tpu.concatenate %476, %477 in 1 : vector<8x255xbf16>, vector<8x1xbf16> -> vector<8x256xbf16>
    %479 = vector.extract_strided_slice %450 {offsets = [5, 0], sizes = [1, 256], strides = [1, 1]} : vector<9x256xbf16> to vector<1x256xbf16>
    %480 = vector.broadcast %479 : vector<1x256xbf16> to vector<8x256xbf16>
    %481 = arith.mulf %478, %480 : vector<8x256xbf16>
    %482 = vector.extract_strided_slice %451 {offsets = [0, 15], sizes = [8, 241], strides = [1, 1]} : vector<8x256xbf16> to vector<8x241xbf16>
    %483 = vector.extract_strided_slice %451 {offsets = [0, 0], sizes = [8, 15], strides = [1, 1]} : vector<8x256xbf16> to vector<8x15xbf16>
    %484 = tpu.concatenate %482, %483 in 1 : vector<8x241xbf16>, vector<8x15xbf16> -> vector<8x256xbf16>
    %485 = vector.extract_strided_slice %450 {offsets = [6, 0], sizes = [1, 256], strides = [1, 1]} : vector<9x256xbf16> to vector<1x256xbf16>
    %486 = vector.broadcast %485 : vector<1x256xbf16> to vector<8x256xbf16>
    %487 = arith.mulf %484, %486 : vector<8x256xbf16>
    %488 = vector.extract_strided_slice %451 {offsets = [0, 16], sizes = [8, 240], strides = [1, 1]} : vector<8x256xbf16> to vector<8x240xbf16>
    %489 = vector.extract_strided_slice %451 {offsets = [0, 0], sizes = [8, 16], strides = [1, 1]} : vector<8x256xbf16> to vector<8x16xbf16>
    %490 = tpu.concatenate %488, %489 in 1 : vector<8x240xbf16>, vector<8x16xbf16> -> vector<8x256xbf16>
    %491 = vector.extract_strided_slice %450 {offsets = [7, 0], sizes = [1, 256], strides = [1, 1]} : vector<9x256xbf16> to vector<1x256xbf16>
    %492 = vector.broadcast %491 : vector<1x256xbf16> to vector<8x256xbf16>
    %493 = arith.mulf %490, %492 : vector<8x256xbf16>
    %494 = vector.extract_strided_slice %451 {offsets = [0, 17], sizes = [8, 239], strides = [1, 1]} : vector<8x256xbf16> to vector<8x239xbf16>
    %495 = vector.extract_strided_slice %451 {offsets = [0, 0], sizes = [8, 17], strides = [1, 1]} : vector<8x256xbf16> to vector<8x17xbf16>
    %496 = tpu.concatenate %494, %495 in 1 : vector<8x239xbf16>, vector<8x17xbf16> -> vector<8x256xbf16>
    %497 = vector.extract_strided_slice %450 {offsets = [8, 0], sizes = [1, 256], strides = [1, 1]} : vector<9x256xbf16> to vector<1x256xbf16>
    %498 = vector.broadcast %497 : vector<1x256xbf16> to vector<8x256xbf16>
    %499 = arith.mulf %496, %498 : vector<8x256xbf16>
    %500 = tpu.concatenate %457, %463, %469, %475, %451, %481, %487, %493, %499 in 0 : vector<8x256xbf16>, vector<8x256xbf16>, vector<8x256xbf16>, vector<8x256xbf16>, vector<8x256xbf16>, vector<8x256xbf16>, vector<8x256xbf16>, vector<8x256xbf16>, vector<8x256xbf16> -> vector<72x256xbf16>
    %cst_56 = arith.constant dense<0.000000e+00> : vector<8x256xf32>
    %501 = tpu.matmul %449, %500, %cst_56 {dimension_numbers = #tpu.dot_dimension_numbers<[1], [0], [0], [1], [0, 0, 1, 1], [], []>} : vector<8x72xbf16>, vector<72x256xbf16>, vector<8x256xf32> -> vector<8x256xf32>
    %cst_57 = arith.constant 2.000000e-01 : f32
    %502 = vector.broadcast %cst_57 : f32 to vector<8x256xf32>
    %503 = arith.mulf %502, %501 : vector<8x256xf32>
    %504 = arith.maximumf %501, %503 : vector<8x256xf32>
    %c0_58 = arith.constant 0 : index
    %c0_59 = arith.constant 0 : index
    %505 = vector.load %arg10[%c0_58, %c0_59] : memref<1x72xbf16, #tpu.memory_space<vmem>>, vector<1x72xbf16>
    %c0_60 = arith.constant 0 : index
    %c0_61 = arith.constant 0 : index
    %506 = vector.load %arg16[%c0_60, %c0_61] : memref<9x256xbf16, #tpu.memory_space<vmem>>, vector<9x256xbf16>
    %507 = arith.truncf %504 : vector<8x256xf32> to vector<8x256xbf16>
    %508 = vector.extract_strided_slice %507 {offsets = [0, 239], sizes = [8, 17], strides = [1, 1]} : vector<8x256xbf16> to vector<8x17xbf16>
    %509 = vector.extract_strided_slice %507 {offsets = [0, 0], sizes = [8, 239], strides = [1, 1]} : vector<8x256xbf16> to vector<8x239xbf16>
    %510 = tpu.concatenate %508, %509 in 1 : vector<8x17xbf16>, vector<8x239xbf16> -> vector<8x256xbf16>
    %511 = vector.extract_strided_slice %506 {offsets = [0, 0], sizes = [1, 256], strides = [1, 1]} : vector<9x256xbf16> to vector<1x256xbf16>
    %512 = vector.broadcast %511 : vector<1x256xbf16> to vector<8x256xbf16>
    %513 = arith.mulf %510, %512 : vector<8x256xbf16>
    %514 = vector.extract_strided_slice %507 {offsets = [0, 240], sizes = [8, 16], strides = [1, 1]} : vector<8x256xbf16> to vector<8x16xbf16>
    %515 = vector.extract_strided_slice %507 {offsets = [0, 0], sizes = [8, 240], strides = [1, 1]} : vector<8x256xbf16> to vector<8x240xbf16>
    %516 = tpu.concatenate %514, %515 in 1 : vector<8x16xbf16>, vector<8x240xbf16> -> vector<8x256xbf16>
    %517 = vector.extract_strided_slice %506 {offsets = [1, 0], sizes = [1, 256], strides = [1, 1]} : vector<9x256xbf16> to vector<1x256xbf16>
    %518 = vector.broadcast %517 : vector<1x256xbf16> to vector<8x256xbf16>
    %519 = arith.mulf %516, %518 : vector<8x256xbf16>
    %520 = vector.extract_strided_slice %507 {offsets = [0, 241], sizes = [8, 15], strides = [1, 1]} : vector<8x256xbf16> to vector<8x15xbf16>
    %521 = vector.extract_strided_slice %507 {offsets = [0, 0], sizes = [8, 241], strides = [1, 1]} : vector<8x256xbf16> to vector<8x241xbf16>
    %522 = tpu.concatenate %520, %521 in 1 : vector<8x15xbf16>, vector<8x241xbf16> -> vector<8x256xbf16>
    %523 = vector.extract_strided_slice %506 {offsets = [2, 0], sizes = [1, 256], strides = [1, 1]} : vector<9x256xbf16> to vector<1x256xbf16>
    %524 = vector.broadcast %523 : vector<1x256xbf16> to vector<8x256xbf16>
    %525 = arith.mulf %522, %524 : vector<8x256xbf16>
    %526 = vector.extract_strided_slice %507 {offsets = [0, 255], sizes = [8, 1], strides = [1, 1]} : vector<8x256xbf16> to vector<8x1xbf16>
    %527 = vector.extract_strided_slice %507 {offsets = [0, 0], sizes = [8, 255], strides = [1, 1]} : vector<8x256xbf16> to vector<8x255xbf16>
    %528 = tpu.concatenate %526, %527 in 1 : vector<8x1xbf16>, vector<8x255xbf16> -> vector<8x256xbf16>
    %529 = vector.extract_strided_slice %506 {offsets = [3, 0], sizes = [1, 256], strides = [1, 1]} : vector<9x256xbf16> to vector<1x256xbf16>
    %530 = vector.broadcast %529 : vector<1x256xbf16> to vector<8x256xbf16>
    %531 = arith.mulf %528, %530 : vector<8x256xbf16>
    %532 = vector.extract_strided_slice %507 {offsets = [0, 1], sizes = [8, 255], strides = [1, 1]} : vector<8x256xbf16> to vector<8x255xbf16>
    %533 = vector.extract_strided_slice %507 {offsets = [0, 0], sizes = [8, 1], strides = [1, 1]} : vector<8x256xbf16> to vector<8x1xbf16>
    %534 = tpu.concatenate %532, %533 in 1 : vector<8x255xbf16>, vector<8x1xbf16> -> vector<8x256xbf16>
    %535 = vector.extract_strided_slice %506 {offsets = [5, 0], sizes = [1, 256], strides = [1, 1]} : vector<9x256xbf16> to vector<1x256xbf16>
    %536 = vector.broadcast %535 : vector<1x256xbf16> to vector<8x256xbf16>
    %537 = arith.mulf %534, %536 : vector<8x256xbf16>
    %538 = vector.extract_strided_slice %507 {offsets = [0, 15], sizes = [8, 241], strides = [1, 1]} : vector<8x256xbf16> to vector<8x241xbf16>
    %539 = vector.extract_strided_slice %507 {offsets = [0, 0], sizes = [8, 15], strides = [1, 1]} : vector<8x256xbf16> to vector<8x15xbf16>
    %540 = tpu.concatenate %538, %539 in 1 : vector<8x241xbf16>, vector<8x15xbf16> -> vector<8x256xbf16>
    %541 = vector.extract_strided_slice %506 {offsets = [6, 0], sizes = [1, 256], strides = [1, 1]} : vector<9x256xbf16> to vector<1x256xbf16>
    %542 = vector.broadcast %541 : vector<1x256xbf16> to vector<8x256xbf16>
    %543 = arith.mulf %540, %542 : vector<8x256xbf16>
    %544 = vector.extract_strided_slice %507 {offsets = [0, 16], sizes = [8, 240], strides = [1, 1]} : vector<8x256xbf16> to vector<8x240xbf16>
    %545 = vector.extract_strided_slice %507 {offsets = [0, 0], sizes = [8, 16], strides = [1, 1]} : vector<8x256xbf16> to vector<8x16xbf16>
    %546 = tpu.concatenate %544, %545 in 1 : vector<8x240xbf16>, vector<8x16xbf16> -> vector<8x256xbf16>
    %547 = vector.extract_strided_slice %506 {offsets = [7, 0], sizes = [1, 256], strides = [1, 1]} : vector<9x256xbf16> to vector<1x256xbf16>
    %548 = vector.broadcast %547 : vector<1x256xbf16> to vector<8x256xbf16>
    %549 = arith.mulf %546, %548 : vector<8x256xbf16>
    %550 = vector.extract_strided_slice %507 {offsets = [0, 17], sizes = [8, 239], strides = [1, 1]} : vector<8x256xbf16> to vector<8x239xbf16>
    %551 = vector.extract_strided_slice %507 {offsets = [0, 0], sizes = [8, 17], strides = [1, 1]} : vector<8x256xbf16> to vector<8x17xbf16>
    %552 = tpu.concatenate %550, %551 in 1 : vector<8x239xbf16>, vector<8x17xbf16> -> vector<8x256xbf16>
    %553 = vector.extract_strided_slice %506 {offsets = [8, 0], sizes = [1, 256], strides = [1, 1]} : vector<9x256xbf16> to vector<1x256xbf16>
    %554 = vector.broadcast %553 : vector<1x256xbf16> to vector<8x256xbf16>
    %555 = arith.mulf %552, %554 : vector<8x256xbf16>
    %556 = tpu.concatenate %513, %519, %525, %531, %507, %537, %543, %549, %555 in 0 : vector<8x256xbf16>, vector<8x256xbf16>, vector<8x256xbf16>, vector<8x256xbf16>, vector<8x256xbf16>, vector<8x256xbf16>, vector<8x256xbf16>, vector<8x256xbf16>, vector<8x256xbf16> -> vector<72x256xbf16>
    %cst_62 = arith.constant dense<0.000000e+00> : vector<1x256xf32>
    %557 = tpu.matmul %505, %556, %cst_62 {dimension_numbers = #tpu.dot_dimension_numbers<[1], [0], [0], [1], [0, 0, 1, 1], [], []>} : vector<1x72xbf16>, vector<72x256xbf16>, vector<1x256xf32> -> vector<1x256xf32>
    %c0_63 = arith.constant 0 : index
    %c0_64 = arith.constant 0 : index
    %558 = vector.load %arg11[%c0_63, %c0_64] : memref<1x1xf32, #tpu.memory_space<vmem>>, vector<1x1xf32>
    %559 = vector.broadcast %558 : vector<1x1xf32> to vector<1x256xf32>
    %560 = arith.addf %557, %559 : vector<1x256xf32>
    %c0_65 = arith.constant 0 : index
    %c0_66 = arith.constant 0 : index
    %c0_67 = arith.constant 0 : index
    %561 = vector.load %arg21[%c0_65, %c0_66, %c0_67] : memref<1x1x256xf32, #tpu.memory_space<vmem>>, vector<1x1x256xf32>
    %562 = vector.shape_cast %561 : vector<1x1x256xf32> to vector<1x256xf32>
    %563 = vector.shape_cast %560 : vector<1x256xf32> to vector<1x1x256xf32>
    tpu.vector_store %arg21[%c0_65, %c0_66, %c0_67], %563 {strides = array<i32>} : memref<1x1x256xf32, #tpu.memory_space<vmem>>, vector<1x1x256xf32>,
    %cst_68 = arith.constant dense<0.000000e+00> : vector<1xf32>
    %564 = vector.multi_reduction <add>, %560, %cst_68 [1] : vector<1x256xf32> to vector<1xf32>
    %565 = vector.shape_cast %564 : vector<1xf32> to vector<1x1xf32>
    %cst_69 = arith.constant 2.560000e+02 : f32
    %566 = vector.broadcast %cst_69 : f32 to vector<1x1xf32>
    %567 = arith.divf %565, %566 : vector<1x1xf32>
    %c0_70 = arith.constant 0 : index
    %c0_71 = arith.constant 0 : index
    %c0_72 = arith.constant 0 : index
    %568 = vector.load %arg20[%c0_70, %c0_71, %c0_72] : memref<1x1x1xf32, #tpu.memory_space<vmem>>, vector<1x1x1xf32>
    %569 = vector.shape_cast %568 : vector<1x1x1xf32> to vector<1x1xf32>
    %570 = vector.shape_cast %567 : vector<1x1xf32> to vector<1x1x1xf32>
    tpu.vector_store %arg20[%c0_70, %c0_71, %c0_72], %570 {strides = array<i32>} : memref<1x1x1xf32, #tpu.memory_space<vmem>>, vector<1x1x1xf32>,
    return
  }
  func.func @transform_0(%arg0: i32) -> (i32, i32, i32) {
    %c0_i32 = arith.constant 0 : i32
    %c0_i32_0 = arith.constant 0 : i32
    %c0_i32_1 = arith.constant 0 : i32
    return %arg0, %c0_i32, %c0_i32_0 : i32, i32, i32
  }
  func.func @transform_1(%arg0: i32) -> (i32, i32) {
    %c0_i32 = arith.constant 0 : i32
    %c0_i32_0 = arith.constant 0 : i32
    %c0_i32_1 = arith.constant 0 : i32
    return %c0_i32, %c0_i32_0 : i32, i32
  }
  func.func @transform_2(%arg0: i32) -> (i32, i32) {
    %c0_i32 = arith.constant 0 : i32
    %c0_i32_0 = arith.constant 0 : i32
    %c0_i32_1 = arith.constant 0 : i32
    return %c0_i32, %c0_i32_0 : i32, i32
  }
  func.func @transform_3(%arg0: i32) -> (i32, i32) {
    %c0_i32 = arith.constant 0 : i32
    %c0_i32_0 = arith.constant 0 : i32
    %c0_i32_1 = arith.constant 0 : i32
    return %c0_i32, %c0_i32_0 : i32, i32
  }
  func.func @transform_4(%arg0: i32) -> (i32, i32) {
    %c0_i32 = arith.constant 0 : i32
    %c0_i32_0 = arith.constant 0 : i32
    %c0_i32_1 = arith.constant 0 : i32
    return %c0_i32, %c0_i32_0 : i32, i32
  }
  func.func @transform_5(%arg0: i32) -> (i32, i32) {
    %c0_i32 = arith.constant 0 : i32
    %c0_i32_0 = arith.constant 0 : i32
    %c0_i32_1 = arith.constant 0 : i32
    return %c0_i32, %c0_i32_0 : i32, i32
  }
  func.func @transform_6(%arg0: i32) -> (i32, i32) {
    %c0_i32 = arith.constant 0 : i32
    %c0_i32_0 = arith.constant 0 : i32
    %c0_i32_1 = arith.constant 0 : i32
    return %c0_i32, %c0_i32_0 : i32, i32
  }
  func.func @transform_7(%arg0: i32) -> (i32, i32) {
    %c0_i32 = arith.constant 0 : i32
    %c0_i32_0 = arith.constant 0 : i32
    %c0_i32_1 = arith.constant 0 : i32
    return %c0_i32, %c0_i32_0 : i32, i32
  }
  func.func @transform_8(%arg0: i32) -> (i32, i32) {
    %c0_i32 = arith.constant 0 : i32
    %c0_i32_0 = arith.constant 0 : i32
    %c0_i32_1 = arith.constant 0 : i32
    return %c0_i32, %c0_i32_0 : i32, i32
  }
  func.func @transform_9(%arg0: i32) -> (i32, i32) {
    %c0_i32 = arith.constant 0 : i32
    %c0_i32_0 = arith.constant 0 : i32
    %c0_i32_1 = arith.constant 0 : i32
    return %c0_i32, %c0_i32_0 : i32, i32
  }
  func.func @transform_10(%arg0: i32) -> (i32, i32) {
    %c0_i32 = arith.constant 0 : i32
    %c0_i32_0 = arith.constant 0 : i32
    %c0_i32_1 = arith.constant 0 : i32
    return %c0_i32, %c0_i32_0 : i32, i32
  }
  func.func @transform_11(%arg0: i32) -> (i32, i32) {
    %c0_i32 = arith.constant 0 : i32
    %c0_i32_0 = arith.constant 0 : i32
    %c0_i32_1 = arith.constant 0 : i32
    return %c0_i32, %c0_i32_0 : i32, i32
  }
  func.func @transform_12(%arg0: i32) -> (i32, i32) {
    %c0_i32 = arith.constant 0 : i32
    %c0_i32_0 = arith.constant 0 : i32
    %c0_i32_1 = arith.constant 0 : i32
    return %c0_i32, %c0_i32_0 : i32, i32
  }
  func.func @transform_13(%arg0: i32) -> (i32, i32) {
    %c0_i32 = arith.constant 0 : i32
    %c0_i32_0 = arith.constant 0 : i32
    %c0_i32_1 = arith.constant 0 : i32
    return %c0_i32, %c0_i32_0 : i32, i32
  }
  func.func @transform_14(%arg0: i32) -> (i32, i32) {
    %c0_i32 = arith.constant 0 : i32
    %c0_i32_0 = arith.constant 0 : i32
    %c0_i32_1 = arith.constant 0 : i32
    return %c0_i32, %c0_i32_0 : i32, i32
  }
  func.func @transform_15(%arg0: i32) -> (i32, i32) {
    %c0_i32 = arith.constant 0 : i32
    %c0_i32_0 = arith.constant 0 : i32
    %c0_i32_1 = arith.constant 0 : i32
    return %c0_i32, %c0_i32_0 : i32, i32
  }
  func.func @transform_16(%arg0: i32) -> (i32, i32) {
    %c0_i32 = arith.constant 0 : i32
    %c0_i32_0 = arith.constant 0 : i32
    %c0_i32_1 = arith.constant 0 : i32
    return %c0_i32, %c0_i32_0 : i32, i32
  }
  func.func @transform_17(%arg0: i32) -> (i32, i32) {
    %c0_i32 = arith.constant 0 : i32
    %c0_i32_0 = arith.constant 0 : i32
    %c0_i32_1 = arith.constant 0 : i32
    return %c0_i32, %c0_i32_0 : i32, i32
  }
  func.func @transform_18(%arg0: i32) -> (i32, i32) {
    %c0_i32 = arith.constant 0 : i32
    %c0_i32_0 = arith.constant 0 : i32
    %c0_i32_1 = arith.constant 0 : i32
    return %c0_i32, %c0_i32_0 : i32, i32
  }
  func.func @transform_19(%arg0: i32) -> (i32, i32, i32) {
    %c0_i32 = arith.constant 0 : i32
    %c0_i32_0 = arith.constant 0 : i32
    %c0_i32_1 = arith.constant 0 : i32
    return %arg0, %c0_i32, %c0_i32_0 : i32, i32, i32
  }
  func.func @transform_20(%arg0: i32) -> (i32, i32, i32) {
    %c0_i32 = arith.constant 0 : i32
    %c0_i32_0 = arith.constant 0 : i32
    %c0_i32_1 = arith.constant 0 : i32
    return %arg0, %c0_i32, %c0_i32_0 : i32, i32, i32
  }
}

</mosaic_0001>

<llo_original>
// kernel: tpu_custom_call.1
$region0: #{tpu_custom_call.1}
  #allocation0 [shape = 'u32[]', space=smem, size = 0x4, offset = 0x4, fixed_abs, tag = 'smem constant byte address 0x4 - core index']
  #allocation1 [shape = 'u32[144,128]{1,0:T(1,128)}', space=vmem, size = 0x12000, scoped, tag = 'internal scratch']
  #allocation2 [shape = 'f32[1,1]{1,0:T(1,128)S(1)}', space=vmem, size = 0x200, scoped, tag = 'scoped memory for tpu_custom_call.1']
  %s0 = inlined_call_operand.vmem [shape: f32[2,16,256], index: 0, kind: input, shape index: {}]
  %s1 = inlined_call_operand.hbm [shape: bf16[8,144], index: 1, kind: input, shape index: {}]
  %s2 = inlined_call_operand.vmem [shape: f32[8,1], index: 2, kind: input, shape index: {}]
  %s3 = inlined_call_operand.hbm [shape: bf16[16,128], index: 3, kind: input, shape index: {}]
  %s4 = inlined_call_operand.vmem [shape: bf16[32,256], index: 4, kind: input, shape index: {}]
  %s5 = inlined_call_operand.vmem [shape: bf16[16,288], index: 5, kind: input, shape index: {}]
  %s6 = inlined_call_operand.hbm [shape: bf16[8,144], index: 6, kind: input, shape index: {}]
  %s7 = inlined_call_operand.hbm [shape: bf16[8,72], index: 7, kind: input, shape index: {}]
  %s8 = inlined_call_operand.hbm [shape: bf16[8,72], index: 8, kind: input, shape index: {}]
  %s9 = inlined_call_operand.vmem [shape: bf16[1,72], index: 9, kind: input, shape index: {}]
  %s10 = inlined_call_operand.<no memory space> [shape: f32[1,1], index: 10, kind: input, shape index: {}]
  %s11 = inlined_call_operand.vmem [shape: bf16[256,64], index: 11, kind: input, shape index: {}]
  %s12 = inlined_call_operand.vmem [shape: bf16[64,16], index: 12, kind: input, shape index: {}]
  %s13 = inlined_call_operand.vmem [shape: bf16[16,64], index: 13, kind: input, shape index: {}]
  %s14 = inlined_call_operand.vmem [shape: bf16[64,256], index: 14, kind: input, shape index: {}]
  %s15 = inlined_call_operand.vmem [shape: bf16[9,256], index: 15, kind: input, shape index: {}]
  %s16 = inlined_call_operand.vmem [shape: bf16[16,256], index: 16, kind: input, shape index: {}]
  %s17 = inlined_call_operand.vmem [shape: bf16[16,64], index: 17, kind: input, shape index: {}]
  %s18 = inlined_call_operand.vmem [shape: bf16[9,64], index: 18, kind: input, shape index: {}]
  %s19 = inlined_call_operand.vmem [shape: f32[2,1,1], index: 19, kind: output, shape index: {0}]
  %s20 = inlined_call_operand.hbm [shape: f32[2,1,256], index: 20, kind: output, shape index: {1}]
  %21 = xla_tuple %s19, %s20
  %s22 = sld [smem:[#allocation0]]
  $region137: #{tpu_custom_call.1} parent=0
    _
  %s24 = ssub.s32 1, %s22
  %s25 = scalar_select 0, %s24, %s22
  %v26 = vstv %s10
  %27 = vst [vmem:[#allocation2] sm:$0x1] %v26
  $region1: #{tpu_custom_call.1} parent=0
    #allocation3 [shape = 'u8[4096]{0}', space=vmem, size = 0x1000, scoped, tag = 'input window, operand 1, single buffered']
    #allocation4 [shape = 's32[2]{0}', space=sflag, size = 0x8, scoped, tag = 'scoped memory for tpu_custom_call.1']
    #allocation5 [shape = 's32[2]{0}', space=sflag, size = 0x8, scoped, tag = 'scoped memory for tpu_custom_call.1']
    #allocation6 [shape = 'u8[4096]{0}', space=vmem, size = 0x1000, scoped, tag = 'input window, operand 3, single buffered']
    #allocation7 [shape = 's32[1]{0}', space=sflag, size = 0x4, scoped, tag = 'scoped memory for tpu_custom_call.1']
    #allocation8 [shape = 'u8[4096]{0}', space=vmem, size = 0x1000, scoped, tag = 'input window, operand 6, single buffered']
    #allocation9 [shape = 'u8[2048]{0}', space=vmem, size = 0x800, scoped, tag = 'input window, operand 7, single buffered']
    #allocation10 [shape = 's32[1]{0}', space=sflag, size = 0x4, scoped, tag = 'scoped memory for tpu_custom_call.1']
    #allocation11 [shape = 'u8[2048]{0}', space=vmem, size = 0x800, scoped, tag = 'input window, operand 8, single buffered']
    #allocation12 [shape = 'u8[2048]{0}', space=vmem, size = 0x800, scoped, tag = 'output window, operand 1']
    %28 = vsyncpa [#allocation4], 0
    %29 = vsyncpa [#allocation7], 0
    %30 = vsyncpa [#allocation10], 0
    %31 = vsyncpa [#allocation5], 0
    %s32 = scalar_lea.sflag [#allocation5], 1
    %33 = vsyncpa %s32, 0
    loop: start=0, step=1, limit=4
    $region2: #{tpu_custom_call.1} parent=1 // loop_pre_header
      _
    $region3: #{tpu_custom_call.1} parent=1 // loop_header
      %s35 = sphi 0, %s39
      %p36 = scmp.ge.s32.totalorder %s35, 4
      %s45 = sphi 0, %s47
      %s48 = sphi 0, %s45
      %s49 = sphi 0, %s48
      %s65 = sphi 0, %s49
      %s69 = sphi 0, %s69
      %s71 = sphi 0, %s69
      %s72 = sphi 0, %s71
      %s86 = sphi 0, %s72
      %s90 = sphi 0, %s90
      %s92 = sphi 0, %s90
      %s93 = sphi 0, %s92
      %s107 = sphi 0, %s93
      %s111 = sphi 0, %s111
      %s113 = sphi 0, %s111
      %s114 = sphi 0, %s113
      %s128 = sphi 0, %s114
      %s132 = sphi 0, %s132
      %s134 = sphi 0, %s132
      %s135 = sphi 0, %s134
      %s149 = sphi 0, %s135
      %s153 = sphi 0, %s153
      %s155 = sphi 0, %s153
      %s156 = sphi 0, %s155
      %s170 = sphi 0, %s156
      %s174 = sphi 0, %s174
      %s176 = sphi 0, %s174
      %s177 = sphi 0, %s176
      %s191 = sphi 0, %s177
      %s195 = sphi 0, %s195
      %s197 = sphi 0, %s195
      %s198 = sphi 0, %s197
      %s212 = sphi 0, %s198
      %s216 = sphi 0, %s216
      %s218 = sphi 0, %s216
      %s219 = sphi 0, %s218
      %s233 = sphi 0, %s219
      %s237 = sphi 0, %s237
      %s239 = sphi 0, %s237
      %s240 = sphi 0, %s239
      %s254 = sphi 0, %s240
      %s258 = sphi 0, %s258
      %s260 = sphi 0, %s258
      %s261 = sphi 0, %s260
      %s275 = sphi 0, %s261
      %s279 = sphi 0, %s279
      %s281 = sphi 0, %s279
      %s282 = sphi 0, %s281
      %s296 = sphi 0, %s282
      %s300 = sphi 0, %s300
      %s302 = sphi 0, %s300
      %s303 = sphi 0, %s302
      %s317 = sphi 0, %s303
      %s321 = sphi 0, %s321
      %s323 = sphi 0, %s321
      %s324 = sphi 0, %s323
      %s338 = sphi 0, %s324
      %s342 = sphi 0, %s342
      %s344 = sphi 0, %s342
      %s345 = sphi 0, %s344
      %s359 = sphi 0, %s345
      %s363 = sphi 0, %s363
      %s365 = sphi 0, %s363
      %s366 = sphi 0, %s365
      %s380 = sphi 0, %s366
      %s384 = sphi 0, %s384
      %s386 = sphi 0, %s384
      %s387 = sphi 0, %s386
      %s401 = sphi 0, %s387
      %s405 = sphi 0, %s405
      %s407 = sphi 0, %s405
      %s408 = sphi 0, %s407
      %s422 = sphi 0, %s408
      %s426 = sphi 0, %s426
      %s428 = sphi 0, %s426
      %s429 = sphi 0, %s428
      %s443 = sphi 0, %s429
      %s449 = sphi 0, %s451
      %s452 = sphi 0, %s449
      %s453 = sphi 0, %s452
      %s469 = sphi 0, %s453
      %s475 = sphi 0, %s477
      %s478 = sphi 0, %s475
      %s479 = sphi 0, %s478
      %s495 = sphi 0, %s479
    $region4: #{tpu_custom_call.1} parent=1 // loop_header_branch
      %38 = sbr.rel (%p36) target = $region8
    $region5: #{tpu_custom_call.1} parent=1 // loop_body
      %s40 = ssub.s32 %s35, 1
      %s41 = ssub.s32 %s35, 2
      %s42 = sadd.s32 %s35, 1
      %s43 = ssub.s32 %s35, %s42
      %p44 = scmp.eq.s32.totalorder %s43, 0
      %s46 = sadd.s32 %s45, 1
      %s47 = scalar_select %p44, %s45, %s46
      %p50 = pneg %p44
      %p51 = scmp.eq.s32.totalorder %s35, 1
      %p52 = por %p50, %p51
      %p53 = scmp.ne.s32.totalorder %s45, %s48
      %p54 = scmp.eq.s32.totalorder %s35, 0
      %p55 = por %p53, %p54
      %p56 = scmp.ne.s32.totalorder %s45, %s48
      %p57 = scmp.eq.s32.totalorder %s40, 1
      %p58 = por %p56, %p57
      %p59 = scmp.ne.s32.totalorder %s48, %s49
      %p60 = scmp.eq.s32.totalorder %s40, 0
      %p61 = por %p59, %p60
      %p62 = scmp.ne.s32.totalorder %s48, %s49
      %p63 = scmp.eq.s32.totalorder %s41, 1
      %p64 = por %p62, %p63
      %p66 = scmp.ne.s32.totalorder %s49, %s65
      %p67 = scmp.eq.s32.totalorder %s41, 0
      %p68 = por %p66, %p67
      %s70 = sadd.s32 %s69, 1
      %p73 = scmp.eq.s32.totalorder %s35, 1
      %p74 = scmp.ne.s32.totalorder %s69, %s71
      %p75 = scmp.eq.s32.totalorder %s35, 0
      %p76 = por %p74, %p75
      %p77 = scmp.ne.s32.totalorder %s69, %s71
      %p78 = scmp.eq.s32.totalorder %s40, 1
      %p79 = por %p77, %p78
      %p80 = scmp.ne.s32.totalorder %s71, %s72
      %p81 = scmp.eq.s32.totalorder %s40, 0
      %p82 = por %p80, %p81
      %p83 = scmp.ne.s32.totalorder %s71, %s72
      %p84 = scmp.eq.s32.totalorder %s41, 1
      %p85 = por %p83, %p84
      %p87 = scmp.ne.s32.totalorder %s72, %s86
      %p88 = scmp.eq.s32.totalorder %s41, 0
      %p89 = por %p87, %p88
      %s91 = sadd.s32 %s90, 1
      %p94 = scmp.eq.s32.totalorder %s35, 1
      %p95 = scmp.ne.s32.totalorder %s90, %s92
      %p96 = scmp.eq.s32.totalorder %s35, 0
      %p97 = por %p95, %p96
      %p98 = scmp.ne.s32.totalorder %s90, %s92
      %p99 = scmp.eq.s32.totalorder %s40, 1
      %p100 = por %p98, %p99
      %p101 = scmp.ne.s32.totalorder %s92, %s93
      %p102 = scmp.eq.s32.totalorder %s40, 0
      %p103 = por %p101, %p102
      %p104 = scmp.ne.s32.totalorder %s92, %s93
      %p105 = scmp.eq.s32.totalorder %s41, 1
      %p106 = por %p104, %p105
      %p108 = scmp.ne.s32.totalorder %s93, %s107
      %p109 = scmp.eq.s32.totalorder %s41, 0
      %p110 = por %p108, %p109
      %s112 = sadd.s32 %s111, 1
      %p115 = scmp.eq.s32.totalorder %s35, 1
      %p116 = scmp.ne.s32.totalorder %s111, %s113
      %p117 = scmp.eq.s32.totalorder %s35, 0
      %p118 = por %p116, %p117
      %p119 = scmp.ne.s32.totalorder %s111, %s113
      %p120 = scmp.eq.s32.totalorder %s40, 1
      %p121 = por %p119, %p120
      %p122 = scmp.ne.s32.totalorder %s113, %s114
      %p123 = scmp.eq.s32.totalorder %s40, 0
      %p124 = por %p122, %p123
      %p125 = scmp.ne.s32.totalorder %s113, %s114
      %p126 = scmp.eq.s32.totalorder %s41, 1
      %p127 = por %p125, %p126
      %p129 = scmp.ne.s32.totalorder %s114, %s128
      %p130 = scmp.eq.s32.totalorder %s41, 0
      %p131 = por %p129, %p130
      %s133 = sadd.s32 %s132, 1
      %p136 = scmp.eq.s32.totalorder %s35, 1
      %p137 = scmp.ne.s32.totalorder %s132, %s134
      %p138 = scmp.eq.s32.totalorder %s35, 0
      %p139 = por %p137, %p138
      %p140 = scmp.ne.s32.totalorder %s132, %s134
      %p141 = scmp.eq.s32.totalorder %s40, 1
      %p142 = por %p140, %p141
      %p143 = scmp.ne.s32.totalorder %s134, %s135
      %p144 = scmp.eq.s32.totalorder %s40, 0
      %p145 = por %p143, %p144
      %p146 = scmp.ne.s32.totalorder %s134, %s135
      %p147 = scmp.eq.s32.totalorder %s41, 1
      %p148 = por %p146, %p147
      %p150 = scmp.ne.s32.totalorder %s135, %s149
      %p151 = scmp.eq.s32.totalorder %s41, 0
      %p152 = por %p150, %p151
      %s154 = sadd.s32 %s153, 1
      %p157 = scmp.eq.s32.totalorder %s35, 1
      %p158 = scmp.ne.s32.totalorder %s153, %s155
      %p159 = scmp.eq.s32.totalorder %s35, 0
      %p160 = por %p158, %p159
      %p161 = scmp.ne.s32.totalorder %s153, %s155
      %p162 = scmp.eq.s32.totalorder %s40, 1
      %p163 = por %p161, %p162
      %p164 = scmp.ne.s32.totalorder %s155, %s156
      %p165 = scmp.eq.s32.totalorder %s40, 0
      %p166 = por %p164, %p165
      %p167 = scmp.ne.s32.totalorder %s155, %s156
      %p168 = scmp.eq.s32.totalorder %s41, 1
      %p169 = por %p167, %p168
      %p171 = scmp.ne.s32.totalorder %s156, %s170
      %p172 = scmp.eq.s32.totalorder %s41, 0
      %p173 = por %p171, %p172
      %s175 = sadd.s32 %s174, 1
      %p178 = scmp.eq.s32.totalorder %s35, 1
      %p179 = scmp.ne.s32.totalorder %s174, %s176
      %p180 = scmp.eq.s32.totalorder %s35, 0
      %p181 = por %p179, %p180
      %p182 = scmp.ne.s32.totalorder %s174, %s176
      %p183 = scmp.eq.s32.totalorder %s40, 1
      %p184 = por %p182, %p183
      %p185 = scmp.ne.s32.totalorder %s176, %s177
      %p186 = scmp.eq.s32.totalorder %s40, 0
      %p187 = por %p185, %p186
      %p188 = scmp.ne.s32.totalorder %s176, %s177
      %p189 = scmp.eq.s32.totalorder %s41, 1
      %p190 = por %p188, %p189
      %p192 = scmp.ne.s32.totalorder %s177, %s191
      %p193 = scmp.eq.s32.totalorder %s41, 0
      %p194 = por %p192, %p193
      %s196 = sadd.s32 %s195, 1
      %p199 = scmp.eq.s32.totalorder %s35, 1
      %p200 = scmp.ne.s32.totalorder %s195, %s197
      %p201 = scmp.eq.s32.totalorder %s35, 0
      %p202 = por %p200, %p201
      %p203 = scmp.ne.s32.totalorder %s195, %s197
      %p204 = scmp.eq.s32.totalorder %s40, 1
      %p205 = por %p203, %p204
      %p206 = scmp.ne.s32.totalorder %s197, %s198
      %p207 = scmp.eq.s32.totalorder %s40, 0
      %p208 = por %p206, %p207
      %p209 = scmp.ne.s32.totalorder %s197, %s198
      %p210 = scmp.eq.s32.totalorder %s41, 1
      %p211 = por %p209, %p210
      %p213 = scmp.ne.s32.totalorder %s198, %s212
      %p214 = scmp.eq.s32.totalorder %s41, 0
      %p215 = por %p213, %p214
      %s217 = sadd.s32 %s216, 1
      %p220 = scmp.eq.s32.totalorder %s35, 1
      %p221 = scmp.ne.s32.totalorder %s216, %s218
      %p222 = scmp.eq.s32.totalorder %s35, 0
      %p223 = por %p221, %p222
      %p224 = scmp.ne.s32.totalorder %s216, %s218
      %p225 = scmp.eq.s32.totalorder %s40, 1
      %p226 = por %p224, %p225
      %p227 = scmp.ne.s32.totalorder %s218, %s219
      %p228 = scmp.eq.s32.totalorder %s40, 0
      %p229 = por %p227, %p228
      %p230 = scmp.ne.s32.totalorder %s218, %s219
      %p231 = scmp.eq.s32.totalorder %s41, 1
      %p232 = por %p230, %p231
      %p234 = scmp.ne.s32.totalorder %s219, %s233
      %p235 = scmp.eq.s32.totalorder %s41, 0
      %p236 = por %p234, %p235
      %s238 = sadd.s32 %s237, 1
      %p241 = scmp.eq.s32.totalorder %s35, 1
      %p242 = scmp.ne.s32.totalorder %s237, %s239
      %p243 = scmp.eq.s32.totalorder %s35, 0
      %p244 = por %p242, %p243
      %p245 = scmp.ne.s32.totalorder %s237, %s239
      %p246 = scmp.eq.s32.totalorder %s40, 1
      %p247 = por %p245, %p246
      %p248 = scmp.ne.s32.totalorder %s239, %s240
      %p249 = scmp.eq.s32.totalorder %s40, 0
      %p250 = por %p248, %p249
      %p251 = scmp.ne.s32.totalorder %s239, %s240
      %p252 = scmp.eq.s32.totalorder %s41, 1
      %p253 = por %p251, %p252
      %p255 = scmp.ne.s32.totalorder %s240, %s254
      %p256 = scmp.eq.s32.totalorder %s41, 0
      %p257 = por %p255, %p256
      %s259 = sadd.s32 %s258, 1
      %p262 = scmp.eq.s32.totalorder %s35, 1
      %p263 = scmp.ne.s32.totalorder %s258, %s260
      %p264 = scmp.eq.s32.totalorder %s35, 0
      %p265 = por %p263, %p264
      %p266 = scmp.ne.s32.totalorder %s258, %s260
      %p267 = scmp.eq.s32.totalorder %s40, 1
      %p268 = por %p266, %p267
      %p269 = scmp.ne.s32.totalorder %s260, %s261
      %p270 = scmp.eq.s32.totalorder %s40, 0
      %p271 = por %p269, %p270
      %p272 = scmp.ne.s32.totalorder %s260, %s261
      %p273 = scmp.eq.s32.totalorder %s41, 1
      %p274 = por %p272, %p273
      %p276 = scmp.ne.s32.totalorder %s261, %s275
      %p277 = scmp.eq.s32.totalorder %s41, 0
      %p278 = por %p276, %p277
      %s280 = sadd.s32 %s279, 1
      %p283 = scmp.eq.s32.totalorder %s35, 1
      %p284 = scmp.ne.s32.totalorder %s279, %s281
      %p285 = scmp.eq.s32.totalorder %s35, 0
      %p286 = por %p284, %p285
      %p287 = scmp.ne.s32.totalorder %s279, %s281
      %p288 = scmp.eq.s32.totalorder %s40, 1
      %p289 = por %p287, %p288
      %p290 = scmp.ne.s32.totalorder %s281, %s282
      %p291 = scmp.eq.s32.totalorder %s40, 0
      %p292 = por %p290, %p291
      %p293 = scmp.ne.s32.totalorder %s281, %s282
      %p294 = scmp.eq.s32.totalorder %s41, 1
      %p295 = por %p293, %p294
      %p297 = scmp.ne.s32.totalorder %s282, %s296
      %p298 = scmp.eq.s32.totalorder %s41, 0
      %p299 = por %p297, %p298
      %s301 = sadd.s32 %s300, 1
      %p304 = scmp.eq.s32.totalorder %s35, 1
      %p305 = scmp.ne.s32.totalorder %s300, %s302
      %p306 = scmp.eq.s32.totalorder %s35, 0
      %p307 = por %p305, %p306
      %p308 = scmp.ne.s32.totalorder %s300, %s302
      %p309 = scmp.eq.s32.totalorder %s40, 1
      %p310 = por %p308, %p309
      %p311 = scmp.ne.s32.totalorder %s302, %s303
      %p312 = scmp.eq.s32.totalorder %s40, 0
      %p313 = por %p311, %p312
      %p314 = scmp.ne.s32.totalorder %s302, %s303
      %p315 = scmp.eq.s32.totalorder %s41, 1
      %p316 = por %p314, %p315
      %p318 = scmp.ne.s32.totalorder %s303, %s317
      %p319 = scmp.eq.s32.totalorder %s41, 0
      %p320 = por %p318, %p319
      %s322 = sadd.s32 %s321, 1
      %p325 = scmp.eq.s32.totalorder %s35, 1
      %p326 = scmp.ne.s32.totalorder %s321, %s323
      %p327 = scmp.eq.s32.totalorder %s35, 0
      %p328 = por %p326, %p327
      %p329 = scmp.ne.s32.totalorder %s321, %s323
      %p330 = scmp.eq.s32.totalorder %s40, 1
      %p331 = por %p329, %p330
      %p332 = scmp.ne.s32.totalorder %s323, %s324
      %p333 = scmp.eq.s32.totalorder %s40, 0
      %p334 = por %p332, %p333
      %p335 = scmp.ne.s32.totalorder %s323, %s324
      %p336 = scmp.eq.s32.totalorder %s41, 1
      %p337 = por %p335, %p336
      %p339 = scmp.ne.s32.totalorder %s324, %s338
      %p340 = scmp.eq.s32.totalorder %s41, 0
      %p341 = por %p339, %p340
      %s343 = sadd.s32 %s342, 1
      %p346 = scmp.eq.s32.totalorder %s35, 1
      %p347 = scmp.ne.s32.totalorder %s342, %s344
      %p348 = scmp.eq.s32.totalorder %s35, 0
      %p349 = por %p347, %p348
      %p350 = scmp.ne.s32.totalorder %s342, %s344
      %p351 = scmp.eq.s32.totalorder %s40, 1
      %p352 = por %p350, %p351
      %p353 = scmp.ne.s32.totalorder %s344, %s345
      %p354 = scmp.eq.s32.totalorder %s40, 0
      %p355 = por %p353, %p354
      %p356 = scmp.ne.s32.totalorder %s344, %s345
      %p357 = scmp.eq.s32.totalorder %s41, 1
      %p358 = por %p356, %p357
      %p360 = scmp.ne.s32.totalorder %s345, %s359
      %p361 = scmp.eq.s32.totalorder %s41, 0
      %p362 = por %p360, %p361
      %s364 = sadd.s32 %s363, 1
      %p367 = scmp.eq.s32.totalorder %s35, 1
      %p368 = scmp.ne.s32.totalorder %s363, %s365
      %p369 = scmp.eq.s32.totalorder %s35, 0
      %p370 = por %p368, %p369
      %p371 = scmp.ne.s32.totalorder %s363, %s365
      %p372 = scmp.eq.s32.totalorder %s40, 1
      %p373 = por %p371, %p372
      %p374 = scmp.ne.s32.totalorder %s365, %s366
      %p375 = scmp.eq.s32.totalorder %s40, 0
      %p376 = por %p374, %p375
      %p377 = scmp.ne.s32.totalorder %s365, %s366
      %p378 = scmp.eq.s32.totalorder %s41, 1
      %p379 = por %p377, %p378
      %p381 = scmp.ne.s32.totalorder %s366, %s380
      %p382 = scmp.eq.s32.totalorder %s41, 0
      %p383 = por %p381, %p382
      %s385 = sadd.s32 %s384, 1
      %p388 = scmp.eq.s32.totalorder %s35, 1
      %p389 = scmp.ne.s32.totalorder %s384, %s386
      %p390 = scmp.eq.s32.totalorder %s35, 0
      %p391 = por %p389, %p390
      %p392 = scmp.ne.s32.totalorder %s384, %s386
      %p393 = scmp.eq.s32.totalorder %s40, 1
      %p394 = por %p392, %p393
      %p395 = scmp.ne.s32.totalorder %s386, %s387
      %p396 = scmp.eq.s32.totalorder %s40, 0
      %p397 = por %p395, %p396
      %p398 = scmp.ne.s32.totalorder %s386, %s387
      %p399 = scmp.eq.s32.totalorder %s41, 1
      %p400 = por %p398, %p399
      %p402 = scmp.ne.s32.totalorder %s387, %s401
      %p403 = scmp.eq.s32.totalorder %s41, 0
      %p404 = por %p402, %p403
      %s406 = sadd.s32 %s405, 1
      %p409 = scmp.eq.s32.totalorder %s35, 1
      %p410 = scmp.ne.s32.totalorder %s405, %s407
      %p411 = scmp.eq.s32.totalorder %s35, 0
      %p412 = por %p410, %p411
      %p413 = scmp.ne.s32.totalorder %s405, %s407
      %p414 = scmp.eq.s32.totalorder %s40, 1
      %p415 = por %p413, %p414
      %p416 = scmp.ne.s32.totalorder %s407, %s408
      %p417 = scmp.eq.s32.totalorder %s40, 0
      %p418 = por %p416, %p417
      %p419 = scmp.ne.s32.totalorder %s407, %s408
      %p420 = scmp.eq.s32.totalorder %s41, 1
      %p421 = por %p419, %p420
      %p423 = scmp.ne.s32.totalorder %s408, %s422
      %p424 = scmp.eq.s32.totalorder %s41, 0
      %p425 = por %p423, %p424
      %s427 = sadd.s32 %s426, 1
      %p430 = scmp.eq.s32.totalorder %s35, 1
      %p431 = scmp.ne.s32.totalorder %s426, %s428
      %p432 = scmp.eq.s32.totalorder %s35, 0
      %p433 = por %p431, %p432
      %p434 = scmp.ne.s32.totalorder %s426, %s428
      %p435 = scmp.eq.s32.totalorder %s40, 1
      %p436 = por %p434, %p435
      %p437 = scmp.ne.s32.totalorder %s428, %s429
      %p438 = scmp.eq.s32.totalorder %s40, 0
      %p439 = por %p437, %p438
      %p440 = scmp.ne.s32.totalorder %s428, %s429
      %p441 = scmp.eq.s32.totalorder %s41, 1
      %p442 = por %p440, %p441
      %p444 = scmp.ne.s32.totalorder %s429, %s443
      %p445 = scmp.eq.s32.totalorder %s41, 0
      %p446 = por %p444, %p445
      %s447 = ssub.s32 %s35, %s42
      %p448 = scmp.eq.s32.totalorder %s447, 0
      %s450 = sadd.s32 %s449, 1
      %s451 = scalar_select %p448, %s449, %s450
      %p454 = pneg %p448
      %p455 = scmp.eq.s32.totalorder %s35, 1
      %p456 = por %p454, %p455
      %p457 = scmp.ne.s32.totalorder %s449, %s452
      %p458 = scmp.eq.s32.totalorder %s35, 0
      %p459 = por %p457, %p458
      %p460 = scmp.ne.s32.totalorder %s449, %s452
      %p461 = scmp.eq.s32.totalorder %s40, 1
      %p462 = por %p460, %p461
      %p463 = scmp.ne.s32.totalorder %s452, %s453
      %p464 = scmp.eq.s32.totalorder %s40, 0
      %p465 = por %p463, %p464
      %p466 = scmp.ne.s32.totalorder %s452, %s453
      %p467 = scmp.eq.s32.totalorder %s41, 1
      %p468 = por %p466, %p467
      %p470 = scmp.ne.s32.totalorder %s453, %s469
      %p471 = scmp.eq.s32.totalorder %s41, 0
      %p472 = por %p470, %p471
      %s473 = ssub.s32 %s35, %s42
      %p474 = scmp.eq.s32.totalorder %s473, 0
      %s476 = sadd.s32 %s475, 1
      %s477 = scalar_select %p474, %s475, %s476
      %p480 = pneg %p474
      %p481 = scmp.eq.s32.totalorder %s35, 1
      %p482 = por %p480, %p481
      %p483 = scmp.ne.s32.totalorder %s475, %s478
      %p484 = scmp.eq.s32.totalorder %s35, 0
      %p485 = por %p483, %p484
      %p486 = scmp.ne.s32.totalorder %s475, %s478
      %p487 = scmp.eq.s32.totalorder %s40, 1
      %p488 = por %p486, %p487
      %p489 = scmp.ne.s32.totalorder %s478, %s479
      %p490 = scmp.eq.s32.totalorder %s40, 0
      %p491 = por %p489, %p490
      %p492 = scmp.ne.s32.totalorder %s478, %s479
      %p493 = scmp.eq.s32.totalorder %s41, 1
      %p494 = por %p492, %p493
      %p496 = scmp.ne.s32.totalorder %s479, %s495
      %p497 = scmp.eq.s32.totalorder %s41, 0
      %p498 = por %p496, %p497
      %p499 = scmp.le.s32.totalorder 1, %s35
      %p500 = scmp.lt.s32.totalorder %s35, 3
      %p501 = pnand %p499, %p500
      %p502 = pneg %p501
      // Predicated region
      $region9: #{tpu_custom_call.1} parent=5 // pred_check
        _
      $region10: #{tpu_custom_call.1} parent=5 // pred_check_branch
        %504 = sbr.rel (%p501) target = $region12
      $region11: #{tpu_custom_call.1} parent=5 // pred_region
        %s505 = ssub.s32 %s35, 1
        // Predicated region
        $region13: #{tpu_custom_call.1} parent=11 // pred_check
          %p506 = pneg %p82
        $region14: #{tpu_custom_call.1} parent=11 // pred_check_branch
          %508 = sbr.rel (%p506) target = $region16
        $region15: #{tpu_custom_call.1} parent=11 // pred_region
          %s510 = ssub.s32 128, 128
          %511 = vsyncadd [#allocation4], %s510
          %s513 = sshll.u32 [#allocation3], 4
          %s514 = int_to_ptr.vmem [resolvable:$true] %s513
          %516 = dma.hbm_to_vmem [thread:$0]  %s1, 128, %s514, [#allocation4]
        $region16: #{tpu_custom_call.1} parent=11 // pred_fallthru
          _
        // Predicated region
        $region17: #{tpu_custom_call.1} parent=11 // pred_check
          %p517 = pneg %p103
        $region18: #{tpu_custom_call.1} parent=11 // pred_check_branch
          %519 = sbr.rel (%p517) target = $region20
        $region19: #{tpu_custom_call.1} parent=11 // pred_region
          _
        $region20: #{tpu_custom_call.1} parent=11 // pred_fallthru
          _
        // Predicated region
        $region21: #{tpu_custom_call.1} parent=11 // pred_check
          %p520 = pneg %p124
        $region22: #{tpu_custom_call.1} parent=11 // pred_check_branch
          %522 = sbr.rel (%p520) target = $region24
        $region23: #{tpu_custom_call.1} parent=11 // pred_region
          %s524 = ssub.s32 128, 128
          %525 = vsyncadd [#allocation7], %s524
          %s526 = sshll.u32 [#allocation6], 4
          %s527 = int_to_ptr.vmem [resolvable:$true] %s526
          %532 = dma.hbm_to_vmem [thread:$0]  %s3, 128, %s527, [#allocation7], 64, 64, 4
        $region24: #{tpu_custom_call.1} parent=11 // pred_fallthru
          _
        // Predicated region
        $region25: #{tpu_custom_call.1} parent=11 // pred_check
          %p533 = pneg %p145
        $region26: #{tpu_custom_call.1} parent=11 // pred_check_branch
          %535 = sbr.rel (%p533) target = $region28
        $region27: #{tpu_custom_call.1} parent=11 // pred_region
          _
        $region28: #{tpu_custom_call.1} parent=11 // pred_fallthru
          _
        // Predicated region
        $region29: #{tpu_custom_call.1} parent=11 // pred_check
          %p536 = pneg %p166
        $region30: #{tpu_custom_call.1} parent=11 // pred_check_branch
          %538 = sbr.rel (%p536) target = $region32
        $region31: #{tpu_custom_call.1} parent=11 // pred_region
          _
        $region32: #{tpu_custom_call.1} parent=11 // pred_fallthru
          _
        // Predicated region
        $region33: #{tpu_custom_call.1} parent=11 // pred_check
          %p539 = pneg %p187
        $region34: #{tpu_custom_call.1} parent=11 // pred_check_branch
          %541 = sbr.rel (%p539) target = $region36
        $region35: #{tpu_custom_call.1} parent=11 // pred_region
          %s543 = ssub.s32 128, 128
          %544 = vsyncadd [#allocation7], %s543
          %s546 = sshll.u32 [#allocation8], 4
          %s547 = int_to_ptr.vmem [resolvable:$true] %s546
          %549 = dma.hbm_to_vmem [thread:$0]  %s6, 128, %s547, [#allocation7]
        $region36: #{tpu_custom_call.1} parent=11 // pred_fallthru
          _
        // Predicated region
        $region37: #{tpu_custom_call.1} parent=11 // pred_check
          %p550 = pneg %p208
        $region38: #{tpu_custom_call.1} parent=11 // pred_check_branch
          %552 = sbr.rel (%p550) target = $region40
        $region39: #{tpu_custom_call.1} parent=11 // pred_region
          %s554 = ssub.s32 64, 64
          %555 = vsyncadd [#allocation10], %s554
          %s557 = sshll.u32 [#allocation9], 4
          %s558 = int_to_ptr.vmem [resolvable:$true] %s557
          %560 = dma.hbm_to_vmem [thread:$0]  %s7, 64, %s558, [#allocation10]
        $region40: #{tpu_custom_call.1} parent=11 // pred_fallthru
          _
        // Predicated region
        $region41: #{tpu_custom_call.1} parent=11 // pred_check
          %p561 = pneg %p229
        $region42: #{tpu_custom_call.1} parent=11 // pred_check_branch
          %563 = sbr.rel (%p561) target = $region44
        $region43: #{tpu_custom_call.1} parent=11 // pred_region
          %s565 = ssub.s32 64, 64
          %566 = vsyncadd [#allocation10], %s565
          %s568 = sshll.u32 [#allocation11], 4
          %s569 = int_to_ptr.vmem [resolvable:$true] %s568
          %571 = dma.hbm_to_vmem [thread:$0]  %s8, 64, %s569, [#allocation10]
        $region44: #{tpu_custom_call.1} parent=11 // pred_fallthru
          _
        // Predicated region
        $region45: #{tpu_custom_call.1} parent=11 // pred_check
          %p572 = pneg %p250
        $region46: #{tpu_custom_call.1} parent=11 // pred_check_branch
          %574 = sbr.rel (%p572) target = $region48
        $region47: #{tpu_custom_call.1} parent=11 // pred_region
          _
        $region48: #{tpu_custom_call.1} parent=11 // pred_fallthru
          _
        // Predicated region
        $region49: #{tpu_custom_call.1} parent=11 // pred_check
          %p575 = pneg %p271
        $region50: #{tpu_custom_call.1} parent=11 // pred_check_branch
          %577 = sbr.rel (%p575) target = $region52
        $region51: #{tpu_custom_call.1} parent=11 // pred_region
          _
        $region52: #{tpu_custom_call.1} parent=11 // pred_fallthru
          _
        // Predicated region
        $region53: #{tpu_custom_call.1} parent=11 // pred_check
          %p578 = pneg %p292
        $region54: #{tpu_custom_call.1} parent=11 // pred_check_branch
          %580 = sbr.rel (%p578) target = $region56
        $region55: #{tpu_custom_call.1} parent=11 // pred_region
          _
        $region56: #{tpu_custom_call.1} parent=11 // pred_fallthru
          _
        // Predicated region
        $region57: #{tpu_custom_call.1} parent=11 // pred_check
          %p581 = pneg %p313
        $region58: #{tpu_custom_call.1} parent=11 // pred_check_branch
          %583 = sbr.rel (%p581) target = $region60
        $region59: #{tpu_custom_call.1} parent=11 // pred_region
          _
        $region60: #{tpu_custom_call.1} parent=11 // pred_fallthru
          _
        // Predicated region
        $region61: #{tpu_custom_call.1} parent=11 // pred_check
          %p584 = pneg %p334
        $region62: #{tpu_custom_call.1} parent=11 // pred_check_branch
          %586 = sbr.rel (%p584) target = $region64
        $region63: #{tpu_custom_call.1} parent=11 // pred_region
          _
        $region64: #{tpu_custom_call.1} parent=11 // pred_fallthru
          _
        // Predicated region
        $region65: #{tpu_custom_call.1} parent=11 // pred_check
          %p587 = pneg %p355
        $region66: #{tpu_custom_call.1} parent=11 // pred_check_branch
          %589 = sbr.rel (%p587) target = $region68
        $region67: #{tpu_custom_call.1} parent=11 // pred_region
          _
        $region68: #{tpu_custom_call.1} parent=11 // pred_fallthru
          _
        // Predicated region
        $region69: #{tpu_custom_call.1} parent=11 // pred_check
          %p590 = pneg %p376
        $region70: #{tpu_custom_call.1} parent=11 // pred_check_branch
          %592 = sbr.rel (%p590) target = $region72
        $region71: #{tpu_custom_call.1} parent=11 // pred_region
          _
        $region72: #{tpu_custom_call.1} parent=11 // pred_fallthru
          _
        // Predicated region
        $region73: #{tpu_custom_call.1} parent=11 // pred_check
          %p593 = pneg %p397
        $region74: #{tpu_custom_call.1} parent=11 // pred_check_branch
          %595 = sbr.rel (%p593) target = $region76
        $region75: #{tpu_custom_call.1} parent=11 // pred_region
          _
        $region76: #{tpu_custom_call.1} parent=11 // pred_fallthru
          _
        // Predicated region
        $region77: #{tpu_custom_call.1} parent=11 // pred_check
          %p596 = pneg %p418
        $region78: #{tpu_custom_call.1} parent=11 // pred_check_branch
          %598 = sbr.rel (%p596) target = $region80
        $region79: #{tpu_custom_call.1} parent=11 // pred_region
          _
        $region80: #{tpu_custom_call.1} parent=11 // pred_fallthru
          _
        // Predicated region
        $region81: #{tpu_custom_call.1} parent=11 // pred_check
          %p599 = pneg %p439
        $region82: #{tpu_custom_call.1} parent=11 // pred_check_branch
          %601 = sbr.rel (%p599) target = $region84
        $region83: #{tpu_custom_call.1} parent=11 // pred_region
          _
        $region84: #{tpu_custom_call.1} parent=11 // pred_fallthru
          _
      $region12: #{tpu_custom_call.1} parent=5 // pred_fallthru
        _
      %p602 = scmp.lt.s32.totalorder %s35, 2
      // Predicated region
      $region85: #{tpu_custom_call.1} parent=5 // pred_check
        %p603 = pneg %p602
      $region86: #{tpu_custom_call.1} parent=5 // pred_check_branch
        %605 = sbr.rel (%p603) target = $region88
      $region87: #{tpu_custom_call.1} parent=5 // pred_region
        // Predicated region
        $region89: #{tpu_custom_call.1} parent=87 // pred_check
          %p606 = pneg %p55
        $region90: #{tpu_custom_call.1} parent=87 // pred_check_branch
          %608 = sbr.rel (%p606) target = $region92
        $region91: #{tpu_custom_call.1} parent=87 // pred_region
          %p609 = scmp.lt.s32.totalorder %s35, 1
          %s610 = scalar_select %p609, %s35, 1
          %s611 = smul.addr %s610, 4
          %s612 = smul.addr %s611, 8
          %s613 = scalar_lea.vmem %s0, %s612
        $region92: #{tpu_custom_call.1} parent=87 // pred_fallthru
          _
      $region88: #{tpu_custom_call.1} parent=5 // pred_fallthru
        _
      %p614 = scmp.le.s32.totalorder 1, %s35
      %p615 = scmp.lt.s32.totalorder %s35, 3
      %p616 = pnand %p614, %p615
      %p617 = pneg %p616
      // Predicated region
      $region93: #{tpu_custom_call.1} parent=5 // pred_check
        _
      $region94: #{tpu_custom_call.1} parent=5 // pred_check_branch
        %619 = sbr.rel (%p616) target = $region96
      $region95: #{tpu_custom_call.1} parent=5 // pred_region
        %s620 = ssub.s32 %s35, 1
        // Predicated region
        $region97: #{tpu_custom_call.1} parent=95 // pred_check
          %p621 = pneg %p82
        $region98: #{tpu_custom_call.1} parent=95 // pred_check_branch
          %623 = sbr.rel (%p621) target = $region100
        $region99: #{tpu_custom_call.1} parent=95 // pred_region
          %624 = dma.done [#allocation4], 128
        $region100: #{tpu_custom_call.1} parent=95 // pred_fallthru
          _
        // Predicated region
        $region101: #{tpu_custom_call.1} parent=95 // pred_check
          %p625 = pneg %p124
        $region102: #{tpu_custom_call.1} parent=95 // pred_check_branch
          %627 = sbr.rel (%p625) target = $region104
        $region103: #{tpu_custom_call.1} parent=95 // pred_region
          %628 = dma.done [#allocation7], 128
        $region104: #{tpu_custom_call.1} parent=95 // pred_fallthru
          _
        // Predicated region
        $region105: #{tpu_custom_call.1} parent=95 // pred_check
          %p629 = pneg %p187
        $region106: #{tpu_custom_call.1} parent=95 // pred_check_branch
          %631 = sbr.rel (%p629) target = $region108
        $region107: #{tpu_custom_call.1} parent=95 // pred_region
          %632 = dma.done [#allocation7], 128
        $region108: #{tpu_custom_call.1} parent=95 // pred_fallthru
          _
        // Predicated region
        $region109: #{tpu_custom_call.1} parent=95 // pred_check
          %p633 = pneg %p208
        $region110: #{tpu_custom_call.1} parent=95 // pred_check_branch
          %635 = sbr.rel (%p633) target = $region112
        $region111: #{tpu_custom_call.1} parent=95 // pred_region
          %636 = dma.done [#allocation10], 64
        $region112: #{tpu_custom_call.1} parent=95 // pred_fallthru
          _
        // Predicated region
        $region113: #{tpu_custom_call.1} parent=95 // pred_check
          %p637 = pneg %p229
        $region114: #{tpu_custom_call.1} parent=95 // pred_check_branch
          %639 = sbr.rel (%p637) target = $region116
        $region115: #{tpu_custom_call.1} parent=95 // pred_region
          %640 = dma.done [#allocation10], 64
        $region116: #{tpu_custom_call.1} parent=95 // pred_fallthru
          _
        %p641 = scmp.lt.s32.totalorder %s40, 1
        %s642 = scalar_select %p641, %s40, 1
        %s643 = smul.addr %s642, 4
        %s644 = smul.addr %s643, 8
        %s645 = scalar_lea.vmem %s0, %s644
        %p646 = pneg %p61
        %p647 = pneg %p58
        %p648 = pneg %p82
        %p649 = pneg %p79
        %p650 = pneg %p103
        %p651 = pneg %p100
        %p652 = pneg %p124
        %p653 = pneg %p121
        %p654 = pneg %p145
        %p655 = pneg %p142
        %p656 = pneg %p166
        %p657 = pneg %p163
        %p658 = pneg %p187
        %p659 = pneg %p184
        %p660 = pneg %p208
        %p661 = pneg %p205
        %p662 = pneg %p229
        %p663 = pneg %p226
        %p664 = pneg %p250
        %p665 = pneg %p247
        %p666 = pneg %p271
        %p667 = pneg %p268
        %p668 = pneg %p292
        %p669 = pneg %p289
        %p670 = pneg %p313
        %p671 = pneg %p310
        %p672 = pneg %p334
        %p673 = pneg %p331
        %p674 = pneg %p355
        %p675 = pneg %p352
        %p676 = pneg %p376
        %p677 = pneg %p373
        %p678 = pneg %p397
        %p679 = pneg %p394
        %p680 = pneg %p418
        %p681 = pneg %p415
        %p682 = pneg %p439
        %p683 = pneg %p436
        %p684 = pneg %p465
        %p685 = pneg %p462
        %p686 = scmp.lt.s32.totalorder %s40, 1
        %s687 = scalar_select %p686, %s40, 1
        %s688 = scalar_lea.vmem %s19, %s687
        %p689 = pneg %p491
        %p690 = pneg %p488
        %s691 = sand.u32 %s478, 1
        %s692 = scalar_lea.sflag [#allocation5], %s691
        %s693 = sand.u32 %s478, 1
        %s694 = smul.addr %s693, 2
        %s695 = scalar_lea.vmem [#allocation12], %s694
        %p696 = scmp.lt.s32.totalorder %s40, 1
        %s697 = scalar_select %p696, %s40, 1
        %s698 = smul.addr %s697, 4
        %s699 = smul.addr %s698, 8
        %s700 = scalar_lea.vmem %s0, %s699
        %p701 = scmp.lt.s32.totalorder %s40, 1
        %s702 = scalar_select %p701, %s40, 1
        %s703 = scalar_lea.vmem %s19, %s702
        %v705 = vld [vmem:[%s700] sm:$0xff]
        %v706 = vld [vmem:[%s700 + $0x8] sm:$0xff]
        %v707 = vld [vmem:[%s700 + $0x10] sm:$0xff]
        %v708 = vld [vmem:[%s700 + $0x18] sm:$0xff]
        %v709 = vld [vmem:[#allocation3] sm:$0xff]
        %v710 = vld [vmem:[%s15] sm:$0xff]
        %v711 = vld [vmem:[%s15 + $0x8] sm:$0x11]
        %v712 = vpack.c.bf16 %v707, %v705
        %v713 = vpack.c.bf16 %v708, %v706
        %715 = vrot.lane.b32.xlu0 %v713, 17
        %v716 = vpop.permute.xlu0 %715
        %718 = vrot.lane.b32.xlu0 %v712, 17
        %v719 = vpop.permute.xlu0 %718
        %vm720 = vcmask 138240
        %v721 = vsel %vm720, %v719, %v716
        %vm723 = vcmask 138240
        %v726 = vsel %vm723, %v716, %v719
        %v729 = vunpack.c.l.b16 %v710
        %v730 = vunpack.c.h.b16 %v710
        %v731 = vpack.c.b16 %v729, %v729
        %v732 = vpack.c.b16 %v730, %v730
        %v734 = vpack.i.b16 %v731, %v731
        %v736 = vlaneseq
        %v737 = vshrl.u32 %v736, 7
        %v738 = vsub.s32 0, %v737
        %v739 = vrot.slane %v734, %v738
        %v741 = vpack.i.b16 %v732, %v732
        %v743 = vlaneseq
        %v744 = vshrl.u32 %v743, 7
        %v745 = vsub.s32 0, %v744
        %v746 = vrot.slane %v741, %v745
        %v747 = vmul.bf16 %v726, %v739
        %v748 = vmul.bf16 %v721, %v746
        %749 = vrot.lane.b32.xlu0 %v713, 16
        %v750 = vpop.permute.xlu0 %749
        %751 = vrot.lane.b32.xlu0 %v712, 16
        %v752 = vpop.permute.xlu0 %751
        %vm753 = vcmask 130048
        %v754 = vsel %vm753, %v752, %v750
        %vm756 = vcmask 130048
        %v759 = vsel %vm756, %v750, %v752
        %v761 = vshrl.u32 %v731, 16
        %v762 = vpack.i.b16 %v761, %v761
        %v764 = vlaneseq
        %v765 = vshrl.u32 %v764, 7
        %v766 = vsub.s32 0, %v765
        %v767 = vrot.slane %v762, %v766
        %v768 = vshrl.u32 %v732, 16
        %v769 = vpack.i.b16 %v768, %v768
        %v771 = vlaneseq
        %v772 = vshrl.u32 %v771, 7
        %v773 = vsub.s32 0, %v772
        %v774 = vrot.slane %v769, %v773
        %v775 = vmul.bf16 %v759, %v767
        %v776 = vmul.bf16 %v754, %v774
        %777 = vrot.lane.b32.xlu0 %v713, 15
        %v778 = vpop.permute.xlu0 %777
        %779 = vrot.lane.b32.xlu0 %v712, 15
        %v780 = vpop.permute.xlu0 %779
        %vm781 = vcmask 121856
        %v782 = vsel %vm781, %v780, %v778
        %vm784 = vcmask 121856
        %v787 = vsel %vm784, %v778, %v780
        %v789 = vlaneseq
        %v790 = vshrl.u32 %v789, 7
        %v791 = vsub.s32 1, %v790
        %v792 = vrot.slane %v734, %v791
        %v793 = vlaneseq
        %v794 = vshrl.u32 %v793, 7
        %v795 = vsub.s32 1, %v794
        %v796 = vrot.slane %v741, %v795
        %v797 = vmul.bf16 %v787, %v792
        %v798 = vmul.bf16 %v782, %v796
        %799 = vrot.lane.b32.xlu0 %v713, 1
        %v800 = vpop.permute.xlu0 %799
        %801 = vrot.lane.b32.xlu0 %v712, 1
        %v802 = vpop.permute.xlu0 %801
        %vm803 = vcmask 7168
        %v804 = vsel %vm803, %v802, %v800
        %vm806 = vcmask 7168
        %v809 = vsel %vm806, %v800, %v802
        %v811 = vlaneseq
        %v812 = vshrl.u32 %v811, 7
        %v813 = vsub.s32 1, %v812
        %v814 = vrot.slane %v762, %v813
        %v815 = vlaneseq
        %v816 = vshrl.u32 %v815, 7
        %v817 = vsub.s32 1, %v816
        %v818 = vrot.slane %v769, %v817
        %v819 = vmul.bf16 %v809, %v814
        %v820 = vmul.bf16 %v804, %v818
        %821 = vrot.lane.b32.xlu0 %v712, 127
        %v822 = vpop.permute.xlu0 %821
        %823 = vrot.lane.b32.xlu0 %v713, 127
        %v824 = vpop.permute.xlu0 %823
        %vm825 = vcmask 1039360
        %v826 = vsel %vm825, %v822, %v824
        %vm828 = vcmask 1039360
        %v831 = vsel %vm828, %v824, %v822
        %v833 = vlaneseq
        %v834 = vshrl.u32 %v833, 7
        %v835 = vsub.s32 2, %v834
        %v836 = vrot.slane %v762, %v835
        %v837 = vlaneseq
        %v838 = vshrl.u32 %v837, 7
        %v839 = vsub.s32 2, %v838
        %v840 = vrot.slane %v769, %v839
        %v841 = vmul.bf16 %v826, %v836
        %v842 = vmul.bf16 %v831, %v840
        %843 = vrot.lane.b32.xlu0 %v712, 113
        %v844 = vpop.permute.xlu0 %843
        %845 = vrot.lane.b32.xlu0 %v713, 113
        %v846 = vpop.permute.xlu0 %845
        %vm847 = vcmask 924672
        %v848 = vsel %vm847, %v844, %v846
        %vm850 = vcmask 924672
        %v853 = vsel %vm850, %v846, %v844
        %v855 = vlaneseq
        %v856 = vshrl.u32 %v855, 7
        %v857 = vsub.s32 3, %v856
        %v858 = vrot.slane %v734, %v857
        %v859 = vlaneseq
        %v860 = vshrl.u32 %v859, 7
        %v861 = vsub.s32 3, %v860
        %v862 = vrot.slane %v741, %v861
        %v863 = vmul.bf16 %v848, %v858
        %v864 = vmul.bf16 %v853, %v862
        %865 = vrot.lane.b32.xlu0 %v712, 112
        %v866 = vpop.permute.xlu0 %865
        %867 = vrot.lane.b32.xlu0 %v713, 112
        %v868 = vpop.permute.xlu0 %867
        %vm869 = vcmask 916480
        %v870 = vsel %vm869, %v866, %v868
        %vm872 = vcmask 916480
        %v875 = vsel %vm872, %v868, %v866
        %v877 = vlaneseq
        %v878 = vshrl.u32 %v877, 7
        %v879 = vsub.s32 3, %v878
        %v880 = vrot.slane %v762, %v879
        %v881 = vlaneseq
        %v882 = vshrl.u32 %v881, 7
        %v883 = vsub.s32 3, %v882
        %v884 = vrot.slane %v769, %v883
        %v885 = vmul.bf16 %v870, %v880
        %v886 = vmul.bf16 %v875, %v884
        %887 = vrot.lane.b32.xlu0 %v712, 111
        %v888 = vpop.permute.xlu0 %887
        %889 = vrot.lane.b32.xlu0 %v713, 111
        %v890 = vpop.permute.xlu0 %889
        %vm891 = vcmask 908288
        %v892 = vsel %vm891, %v888, %v890
        %vm894 = vcmask 908288
        %v897 = vsel %vm894, %v890, %v888
        %v900 = vunpack.c.l.b16 %v711
        %v901 = vunpack.c.h.b16 %v711
        %v902 = vpack.c.b16 %v900, %v900
        %v903 = vpack.c.b16 %v901, %v901
        %v905 = vpack.i.b16 %v902, %v902
        %v907 = vlaneseq
        %v908 = vshrl.u32 %v907, 7
        %v909 = vsub.s32 0, %v908
        %v910 = vrot.slane %v905, %v909
        %v912 = vpack.i.b16 %v903, %v903
        %v914 = vlaneseq
        %v915 = vshrl.u32 %v914, 7
        %v916 = vsub.s32 0, %v915
        %v917 = vrot.slane %v912, %v916
        %v918 = vmul.bf16 %v892, %v910
        %v919 = vmul.bf16 %v897, %v917
        %v920 = vld [vmem:[%s2] sm:$0xff]
        %922 = vset.pattern.permute.xlu0 0
        %923 = vperm.xlu0 %922, %v920
        %v924 = vpop.permute.xlu0 %923
        %v927 = vunpack.c.l.b16 %v709
        %v928 = vunpack.c.h.b16 %v709
        %v929 = vpack.c.b16 %v927, %v927
        %v930 = vpack.c.b16 %v928, %v928
        %v933 = vsel %vm756, %v930, 0
        %935 = vmatprep.subr.bf16.mxu0 %v748
        %936 = vmatpush1.bf16.msra.mxu0 %v747
        %937 = vmatprep.subr.bf16.mxu0 %v776
        %938 = vmatpush1.bf16.msra.mxu0 %v775
        %939 = vmatprep.subr.bf16.mxu0 %v798
        %940 = vmatpush1.bf16.msra.mxu0 %v797
        %941 = vmatprep.subr.bf16.mxu0 %v820
        %942 = vmatpush1.bf16.msra.mxu0 %v819
        %943 = vmatprep.subr.bf16.mxu0 %v713
        %944 = vmatpush1.bf16.msra.mxu0 %v712
        %945 = vmatprep.subr.bf16.mxu0 %v842
        %946 = vmatpush1.bf16.msra.mxu0 %v841
        %947 = vmatprep.subr.bf16.mxu0 %v864
        %948 = vmatpush1.bf16.msra.mxu0 %v863
        %949 = vmatprep.subr.bf16.mxu0 %v886
        %950 = vmatpush1.bf16.msra.mxu0 %v885
        %951 = vmatprep.subr.bf16.mxu0 %v919
        %952 = vmatpush1.bf16.msra.mxu0 %v918
        %953 = vmatprep.subr.bf16.mxu0 0
        %954 = vmatpush1.bf16.msra.mxu0 0
        %955 = vmatprep.subr.bf16.mxu0 0
        %956 = vmatpush1.bf16.msra.mxu0 0
        %957 = vmatprep.subr.bf16.mxu0 0
        %958 = vmatpush1.bf16.msra.mxu0 0
        %959 = vmatprep.subr.bf16.mxu0 0
        %960 = vmatpush1.bf16.msra.mxu0 0
        %961 = vmatprep.subr.bf16.mxu0 0
        %962 = vmatpush1.bf16.msra.mxu0 0
        %963 = vmatprep.subr.bf16.mxu0 0
        %964 = vmatpush1.bf16.msra.mxu0 0
        %965 = vmatprep.subr.bf16.mxu0 0
        %966 = vmatpush1.bf16.msra.mxu0 0
        %967 = vmatprep.mubr.bf16.mxu0 %v933
        %968 = vmatmul.mubr.bf16.gmra.mrb[0].mxu0 %v929
        %v969 = vpop.f32.mrb[0].mxu0
        %v970 = vadd.f32 %v924, %v969
        %v971 = vpop.f32.mrb[0].mxu0
        %v972 = vadd.f32 %v924, %v971
        %v973 = vpop.f32.mrb[0].mxu0
        %v974 = vpop.f32.mrb[0].mxu0
        %975 = vdwg.mxu0
        %v976 = vmul.f32 %v970, 0.2
        %v977 = vmul.f32 %v972, 0.2
        %v978 = vmax.f32 %v970, %v976
        %v979 = vmax.f32 %v972, %v977
        %v980 = vld [vmem:[#allocation6] sm:$0xf]
        %v981 = vld [vmem:[#allocation6 + $0x4] sm:$0xf]
        %v982 = vld [vmem:[%s16] sm:$0xff]
        %v983 = vld [vmem:[%s16 + $0x8] sm:$0xff]
        %v984 = vpack.c.bf16 %v978, %v978
        %v985 = vpack.c.bf16 %v979, %v979
        %987 = vrot.lane.b32.xlu0 %v985, 17
        %v988 = vpop.permute.xlu0 %987
        %990 = vrot.lane.b32.xlu0 %v984, 17
        %v991 = vpop.permute.xlu0 %990
        %v992 = vsel %vm720, %v991, %v988
        %v996 = vsel %vm723, %v988, %v991
        %v999 = vunpack.c.l.b16 %v982
        %v1000 = vunpack.c.h.b16 %v982
        %v1001 = vpack.c.b16 %v999, %v999
        %v1002 = vpack.c.b16 %v1000, %v1000
        %v1004 = vpack.i.b16 %v1001, %v1001
        %v1006 = vlaneseq
        %v1007 = vshrl.u32 %v1006, 7
        %v1008 = vsub.s32 0, %v1007
        %v1009 = vrot.slane %v1004, %v1008
        %v1011 = vpack.i.b16 %v1002, %v1002
        %v1013 = vlaneseq
        %v1014 = vshrl.u32 %v1013, 7
        %v1015 = vsub.s32 0, %v1014
        %v1016 = vrot.slane %v1011, %v1015
        %v1017 = vmul.bf16 %v996, %v1009
        %v1018 = vmul.bf16 %v992, %v1016
        %1019 = vrot.lane.b32.xlu0 %v985, 16
        %v1020 = vpop.permute.xlu0 %1019
        %1021 = vrot.lane.b32.xlu0 %v984, 16
        %v1022 = vpop.permute.xlu0 %1021
        %v1023 = vsel %vm753, %v1022, %v1020
        %v1027 = vsel %vm756, %v1020, %v1022
        %v1029 = vshrl.u32 %v1001, 16
        %v1030 = vpack.i.b16 %v1029, %v1029
        %v1032 = vlaneseq
        %v1033 = vshrl.u32 %v1032, 7
        %v1034 = vsub.s32 0, %v1033
        %v1035 = vrot.slane %v1030, %v1034
        %v1036 = vshrl.u32 %v1002, 16
        %v1037 = vpack.i.b16 %v1036, %v1036
        %v1039 = vlaneseq
        %v1040 = vshrl.u32 %v1039, 7
        %v1041 = vsub.s32 0, %v1040
        %v1042 = vrot.slane %v1037, %v1041
        %v1043 = vmul.bf16 %v1027, %v1035
        %v1044 = vmul.bf16 %v1023, %v1042
        %1045 = vrot.lane.b32.xlu0 %v985, 15
        %v1046 = vpop.permute.xlu0 %1045
        %1047 = vrot.lane.b32.xlu0 %v984, 15
        %v1048 = vpop.permute.xlu0 %1047
        %v1049 = vsel %vm781, %v1048, %v1046
        %v1053 = vsel %vm784, %v1046, %v1048
        %v1055 = vlaneseq
        %v1056 = vshrl.u32 %v1055, 7
        %v1057 = vsub.s32 1, %v1056
        %v1058 = vrot.slane %v1004, %v1057
        %v1059 = vlaneseq
        %v1060 = vshrl.u32 %v1059, 7
        %v1061 = vsub.s32 1, %v1060
        %v1062 = vrot.slane %v1011, %v1061
        %v1063 = vmul.bf16 %v1053, %v1058
        %v1064 = vmul.bf16 %v1049, %v1062
        %1065 = vrot.lane.b32.xlu0 %v985, 14
        %v1066 = vpop.permute.xlu0 %1065
        %1067 = vrot.lane.b32.xlu0 %v984, 14
        %v1068 = vpop.permute.xlu0 %1067
        %vm1069 = vcmask 113664
        %v1070 = vsel %vm1069, %v1068, %v1066
        %vm1072 = vcmask 113664
        %v1075 = vsel %vm1072, %v1066, %v1068
        %v1077 = vlaneseq
        %v1078 = vshrl.u32 %v1077, 7
        %v1079 = vsub.s32 1, %v1078
        %v1080 = vrot.slane %v1030, %v1079
        %v1081 = vlaneseq
        %v1082 = vshrl.u32 %v1081, 7
        %v1083 = vsub.s32 1, %v1082
        %v1084 = vrot.slane %v1037, %v1083
        %v1085 = vmul.bf16 %v1075, %v1080
        %v1086 = vmul.bf16 %v1070, %v1084
        %1087 = vrot.lane.b32.xlu0 %v985, 1
        %v1088 = vpop.permute.xlu0 %1087
        %1089 = vrot.lane.b32.xlu0 %v984, 1
        %v1090 = vpop.permute.xlu0 %1089
        %v1091 = vsel %vm803, %v1090, %v1088
        %v1095 = vsel %vm806, %v1088, %v1090
        %v1097 = vlaneseq
        %v1098 = vshrl.u32 %v1097, 7
        %v1099 = vsub.s32 2, %v1098
        %v1100 = vrot.slane %v1004, %v1099
        %v1101 = vlaneseq
        %v1102 = vshrl.u32 %v1101, 7
        %v1103 = vsub.s32 2, %v1102
        %v1104 = vrot.slane %v1011, %v1103
        %v1105 = vmul.bf16 %v1095, %v1100
        %v1106 = vmul.bf16 %v1091, %v1104
        %v1107 = vlaneseq
        %v1108 = vshrl.u32 %v1107, 7
        %v1109 = vsub.s32 2, %v1108
        %v1110 = vrot.slane %v1030, %v1109
        %v1111 = vlaneseq
        %v1112 = vshrl.u32 %v1111, 7
        %v1113 = vsub.s32 2, %v1112
        %v1114 = vrot.slane %v1037, %v1113
        %v1115 = vmul.bf16 %v984, %v1110
        %v1116 = vmul.bf16 %v985, %v1114
        %1117 = vrot.lane.b32.xlu0 %v984, 127
        %v1118 = vpop.permute.xlu0 %1117
        %1119 = vrot.lane.b32.xlu0 %v985, 127
        %v1120 = vpop.permute.xlu0 %1119
        %v1121 = vsel %vm825, %v1118, %v1120
        %v1125 = vsel %vm828, %v1120, %v1118
        %v1127 = vlaneseq
        %v1128 = vshrl.u32 %v1127, 7
        %v1129 = vsub.s32 3, %v1128
        %v1130 = vrot.slane %v1004, %v1129
        %v1131 = vlaneseq
        %v1132 = vshrl.u32 %v1131, 7
        %v1133 = vsub.s32 3, %v1132
        %v1134 = vrot.slane %v1011, %v1133
        %v1135 = vmul.bf16 %v1121, %v1130
        %v1136 = vmul.bf16 %v1125, %v1134
        %1137 = vrot.lane.b32.xlu0 %v984, 126
        %v1138 = vpop.permute.xlu0 %1137
        %1139 = vrot.lane.b32.xlu0 %v985, 126
        %v1140 = vpop.permute.xlu0 %1139
        %vm1141 = vcmask 1031168
        %v1142 = vsel %vm1141, %v1138, %v1140
        %vm1144 = vcmask 1031168
        %v1147 = vsel %vm1144, %v1140, %v1138
        %v1149 = vlaneseq
        %v1150 = vshrl.u32 %v1149, 7
        %v1151 = vsub.s32 3, %v1150
        %v1152 = vrot.slane %v1030, %v1151
        %v1153 = vlaneseq
        %v1154 = vshrl.u32 %v1153, 7
        %v1155 = vsub.s32 3, %v1154
        %v1156 = vrot.slane %v1037, %v1155
        %v1157 = vmul.bf16 %v1142, %v1152
        %v1158 = vmul.bf16 %v1147, %v1156
        %1159 = vrot.lane.b32.xlu0 %v984, 113
        %v1160 = vpop.permute.xlu0 %1159
        %1161 = vrot.lane.b32.xlu0 %v985, 113
        %v1162 = vpop.permute.xlu0 %1161
        %v1163 = vsel %vm847, %v1160, %v1162
        %v1167 = vsel %vm850, %v1162, %v1160
        %v1170 = vunpack.c.l.b16 %v983
        %v1171 = vunpack.c.h.b16 %v983
        %v1172 = vpack.c.b16 %v1170, %v1170
        %v1173 = vpack.c.b16 %v1171, %v1171
        %v1175 = vpack.i.b16 %v1172, %v1172
        %v1177 = vlaneseq
        %v1178 = vshrl.u32 %v1177, 7
        %v1179 = vsub.s32 0, %v1178
        %v1180 = vrot.slane %v1175, %v1179
        %v1182 = vpack.i.b16 %v1173, %v1173
        %v1184 = vlaneseq
        %v1185 = vshrl.u32 %v1184, 7
        %v1186 = vsub.s32 0, %v1185
        %v1187 = vrot.slane %v1182, %v1186
        %v1188 = vmul.bf16 %v1163, %v1180
        %v1189 = vmul.bf16 %v1167, %v1187
        %1190 = vrot.lane.b32.xlu0 %v984, 112
        %v1191 = vpop.permute.xlu0 %1190
        %1192 = vrot.lane.b32.xlu0 %v985, 112
        %v1193 = vpop.permute.xlu0 %1192
        %v1194 = vsel %vm869, %v1191, %v1193
        %v1198 = vsel %vm872, %v1193, %v1191
        %v1200 = vshrl.u32 %v1172, 16
        %v1201 = vpack.i.b16 %v1200, %v1200
        %v1203 = vlaneseq
        %v1204 = vshrl.u32 %v1203, 7
        %v1205 = vsub.s32 0, %v1204
        %v1206 = vrot.slane %v1201, %v1205
        %v1207 = vshrl.u32 %v1173, 16
        %v1208 = vpack.i.b16 %v1207, %v1207
        %v1210 = vlaneseq
        %v1211 = vshrl.u32 %v1210, 7
        %v1212 = vsub.s32 0, %v1211
        %v1213 = vrot.slane %v1208, %v1212
        %v1214 = vmul.bf16 %v1194, %v1206
        %v1215 = vmul.bf16 %v1198, %v1213
        %1216 = vrot.lane.b32.xlu0 %v984, 111
        %v1217 = vpop.permute.xlu0 %1216
        %1218 = vrot.lane.b32.xlu0 %v985, 111
        %v1219 = vpop.permute.xlu0 %1218
        %v1220 = vsel %vm891, %v1217, %v1219
        %v1224 = vsel %vm894, %v1219, %v1217
        %v1226 = vlaneseq
        %v1227 = vshrl.u32 %v1226, 7
        %v1228 = vsub.s32 1, %v1227
        %v1229 = vrot.slane %v1175, %v1228
        %v1230 = vlaneseq
        %v1231 = vshrl.u32 %v1230, 7
        %v1232 = vsub.s32 1, %v1231
        %v1233 = vrot.slane %v1182, %v1232
        %v1234 = vmul.bf16 %v1220, %v1229
        %v1235 = vmul.bf16 %v1224, %v1233
        %1236 = vrot.lane.b32.xlu0 %v984, 110
        %v1237 = vpop.permute.xlu0 %1236
        %1238 = vrot.lane.b32.xlu0 %v985, 110
        %v1239 = vpop.permute.xlu0 %1238
        %vm1240 = vcmask 900096
        %v1241 = vsel %vm1240, %v1237, %v1239
        %vm1243 = vcmask 900096
        %v1246 = vsel %vm1243, %v1239, %v1237
        %v1248 = vlaneseq
        %v1249 = vshrl.u32 %v1248, 7
        %v1250 = vsub.s32 1, %v1249
        %v1251 = vrot.slane %v1201, %v1250
        %v1252 = vlaneseq
        %v1253 = vshrl.u32 %v1252, 7
        %v1254 = vsub.s32 1, %v1253
        %v1255 = vrot.slane %v1208, %v1254
        %v1256 = vmul.bf16 %v1241, %v1251
        %v1257 = vmul.bf16 %v1246, %v1255
        %1258 = vrot.lane.b32.xlu0 %v984, 97
        %v1259 = vpop.permute.xlu0 %1258
        %1260 = vrot.lane.b32.xlu0 %v985, 97
        %v1261 = vpop.permute.xlu0 %1260
        %vm1262 = vcmask 793600
        %v1263 = vsel %vm1262, %v1259, %v1261
        %vm1265 = vcmask 793600
        %v1268 = vsel %vm1265, %v1261, %v1259
        %v1270 = vlaneseq
        %v1271 = vshrl.u32 %v1270, 7
        %v1272 = vsub.s32 2, %v1271
        %v1273 = vrot.slane %v1175, %v1272
        %v1274 = vlaneseq
        %v1275 = vshrl.u32 %v1274, 7
        %v1276 = vsub.s32 2, %v1275
        %v1277 = vrot.slane %v1182, %v1276
        %v1278 = vmul.bf16 %v1263, %v1273
        %v1279 = vmul.bf16 %v1268, %v1277
        %1280 = vrot.lane.b32.xlu0 %v984, 96
        %v1281 = vpop.permute.xlu0 %1280
        %1282 = vrot.lane.b32.xlu0 %v985, 96
        %v1283 = vpop.permute.xlu0 %1282
        %vm1284 = vcmask 785408
        %v1285 = vsel %vm1284, %v1281, %v1283
        %vm1287 = vcmask 785408
        %v1290 = vsel %vm1287, %v1283, %v1281
        %v1292 = vlaneseq
        %v1293 = vshrl.u32 %v1292, 7
        %v1294 = vsub.s32 2, %v1293
        %v1295 = vrot.slane %v1201, %v1294
        %v1296 = vlaneseq
        %v1297 = vshrl.u32 %v1296, 7
        %v1298 = vsub.s32 2, %v1297
        %v1299 = vrot.slane %v1208, %v1298
        %v1300 = vmul.bf16 %v1285, %v1295
        %v1301 = vmul.bf16 %v1290, %v1299
        %1302 = vrot.lane.b32.xlu0 %v984, 95
        %v1303 = vpop.permute.xlu0 %1302
        %1304 = vrot.lane.b32.xlu0 %v985, 95
        %v1305 = vpop.permute.xlu0 %1304
        %vm1306 = vcmask 777216
        %v1307 = vsel %vm1306, %v1303, %v1305
        %vm1309 = vcmask 777216
        %v1312 = vsel %vm1309, %v1305, %v1303
        %v1314 = vlaneseq
        %v1315 = vshrl.u32 %v1314, 7
        %v1316 = vsub.s32 3, %v1315
        %v1317 = vrot.slane %v1175, %v1316
        %v1318 = vlaneseq
        %v1319 = vshrl.u32 %v1318, 7
        %v1320 = vsub.s32 3, %v1319
        %v1321 = vrot.slane %v1182, %v1320
        %v1322 = vmul.bf16 %v1307, %v1317
        %v1323 = vmul.bf16 %v1312, %v1321
        %1324 = vrot.lane.b32.xlu0 %v984, 94
        %v1325 = vpop.permute.xlu0 %1324
        %1326 = vrot.lane.b32.xlu0 %v985, 94
        %v1327 = vpop.permute.xlu0 %1326
        %vm1328 = vcmask 769024
        %v1329 = vsel %vm1328, %v1325, %v1327
        %vm1331 = vcmask 769024
        %v1334 = vsel %vm1331, %v1327, %v1325
        %v1336 = vlaneseq
        %v1337 = vshrl.u32 %v1336, 7
        %v1338 = vsub.s32 3, %v1337
        %v1339 = vrot.slane %v1201, %v1338
        %v1340 = vlaneseq
        %v1341 = vshrl.u32 %v1340, 7
        %v1342 = vsub.s32 3, %v1341
        %v1343 = vrot.slane %v1208, %v1342
        %v1344 = vmul.bf16 %v1329, %v1339
        %v1345 = vmul.bf16 %v1334, %v1343
        %v1348 = vrot.slane %v1043, 4
        %v1349 = vrot.slane %v1044, 4
        %v1352 = vrot.slane %v1085, 4
        %v1353 = vrot.slane %v1086, 4
        %v1356 = vrot.slane %v1115, 4
        %v1357 = vrot.slane %v1116, 4
        %v1360 = vrot.slane %v1157, 4
        %v1361 = vrot.slane %v1158, 4
        %v1364 = vrot.slane %v1214, 4
        %v1365 = vrot.slane %v1215, 4
        %v1368 = vrot.slane %v1256, 4
        %v1369 = vrot.slane %v1257, 4
        %v1372 = vrot.slane %v1300, 4
        %v1373 = vrot.slane %v1301, 4
        %v1376 = vrot.slane %v1344, 4
        %v1377 = vrot.slane %v1345, 4
        %vm1378 = vcmask 1043456
        %v1381 = vsel %vm1378, %v1017, %v1348
        %v1385 = vsel %vm1378, %v1018, %v1349
        %v1389 = vsel %vm1378, %v1063, %v1352
        %v1393 = vsel %vm1378, %v1064, %v1353
        %v1397 = vsel %vm1378, %v1105, %v1356
        %v1401 = vsel %vm1378, %v1106, %v1357
        %v1405 = vsel %vm1378, %v1135, %v1360
        %v1409 = vsel %vm1378, %v1136, %v1361
        %v1413 = vsel %vm1378, %v1188, %v1364
        %v1417 = vsel %vm1378, %v1189, %v1365
        %v1421 = vsel %vm1378, %v1234, %v1368
        %v1425 = vsel %vm1378, %v1235, %v1369
        %v1429 = vsel %vm1378, %v1278, %v1372
        %v1433 = vsel %vm1378, %v1279, %v1373
        %v1437 = vsel %vm1378, %v1322, %v1376
        %v1441 = vsel %vm1378, %v1323, %v1377
        %v1445 = vunpack.c.l.b16 %v980
        %v1446 = vunpack.c.l.b16 %v981
        %v1447 = vpack.c.b16 %v1446, %v1445
        %1449 = vmatprep.subr.bf16.mxu0 %v1385
        %1450 = vmatpush1.bf16.msra.mxu0 %v1381
        %1451 = vmatprep.subr.bf16.mxu0 %v1393
        %1452 = vmatpush1.bf16.msra.mxu0 %v1389
        %1453 = vmatprep.subr.bf16.mxu0 %v1401
        %1454 = vmatpush1.bf16.msra.mxu0 %v1397
        %1455 = vmatprep.subr.bf16.mxu0 %v1409
        %1456 = vmatpush1.bf16.msra.mxu0 %v1405
        %1457 = vmatprep.subr.bf16.mxu0 %v1417
        %1458 = vmatpush1.bf16.msra.mxu0 %v1413
        %1459 = vmatprep.subr.bf16.mxu0 %v1425
        %1460 = vmatpush1.bf16.msra.mxu0 %v1421
        %1461 = vmatprep.subr.bf16.mxu0 %v1433
        %1462 = vmatpush1.bf16.msra.mxu0 %v1429
        %1463 = vmatprep.subr.bf16.mxu0 %v1441
        %1464 = vmatpush1.bf16.msra.mxu0 %v1437
        %1465 = vmatprep.subr.bf16.mxu0 0
        %1466 = vmatpush1.bf16.msra.mxu0 0
        %1467 = vmatprep.subr.bf16.mxu0 0
        %1468 = vmatpush1.bf16.msra.mxu0 0
        %1469 = vmatprep.subr.bf16.mxu0 0
        %1470 = vmatpush1.bf16.msra.mxu0 0
        %1471 = vmatprep.subr.bf16.mxu0 0
        %1472 = vmatpush1.bf16.msra.mxu0 0
        %1473 = vmatprep.subr.bf16.mxu0 0
        %1474 = vmatpush1.bf16.msra.mxu0 0
        %1475 = vmatprep.subr.bf16.mxu0 0
        %1476 = vmatpush1.bf16.msra.mxu0 0
        %1477 = vmatprep.subr.bf16.mxu0 0
        %1478 = vmatpush1.bf16.msra.mxu0 0
        %1479 = vmatprep.subr.bf16.mxu0 0
        %1480 = vmatpush1.bf16.msra.mxu0 0
        %1481 = vmatprep.mubr.bf16.mxu0 0
        %1482 = vmatmul.mubr.bf16.gmra.mrb[0].mxu0 %v1447
        %v1483 = vpop.f32.mrb[0].mxu0
        %v1484 = vadd.f32 0.0, %v1483
        %v1485 = vpop.f32.mrb[0].mxu0
        %v1486 = vadd.f32 0.0, %v1485
        %v1487 = vpop.f32.mrb[0].mxu0
        %v1488 = vadd.f32 0.0, %v1487
        %v1489 = vpop.f32.mrb[0].mxu0
        %v1490 = vadd.f32 0.0, %v1489
        %1491 = vdwg.mxu0
        %v1492 = vpack.c.bf16 %v1488, %v1484
        %v1493 = vpack.c.bf16 %v1490, %v1486
        %v1494 = vld [vmem:[%s11] sm:$0xf]
        %v1495 = vld [vmem:[%s11 + $0x4] sm:$0xf]
        %v1496 = vld [vmem:[%s11 + $0x8] sm:$0xf]
        %v1497 = vld [vmem:[%s11 + $0xc] sm:$0xf]
        %v1498 = vld [vmem:[%s11 + $0x10] sm:$0xf]
        %v1499 = vld [vmem:[%s11 + $0x14] sm:$0xf]
        %v1500 = vld [vmem:[%s11 + $0x18] sm:$0xf]
        %v1501 = vld [vmem:[%s11 + $0x1c] sm:$0xf]
        %v1502 = vld [vmem:[%s11 + $0x20] sm:$0xf]
        %v1503 = vld [vmem:[%s11 + $0x24] sm:$0xf]
        %v1504 = vld [vmem:[%s11 + $0x28] sm:$0xf]
        %v1505 = vld [vmem:[%s11 + $0x2c] sm:$0xf]
        %v1506 = vld [vmem:[%s11 + $0x30] sm:$0xf]
        %v1507 = vld [vmem:[%s11 + $0x34] sm:$0xf]
        %v1508 = vld [vmem:[%s11 + $0x38] sm:$0xf]
        %v1509 = vld [vmem:[%s11 + $0x3c] sm:$0xf]
        %v1510 = vld [vmem:[%s11 + $0x40] sm:$0xf]
        %v1511 = vld [vmem:[%s11 + $0x44] sm:$0xf]
        %v1512 = vld [vmem:[%s11 + $0x48] sm:$0xf]
        %v1513 = vld [vmem:[%s11 + $0x4c] sm:$0xf]
        %v1514 = vld [vmem:[%s11 + $0x50] sm:$0xf]
        %v1515 = vld [vmem:[%s11 + $0x54] sm:$0xf]
        %v1516 = vld [vmem:[%s11 + $0x58] sm:$0xf]
        %v1517 = vld [vmem:[%s11 + $0x5c] sm:$0xf]
        %v1518 = vld [vmem:[%s11 + $0x60] sm:$0xf]
        %v1519 = vld [vmem:[%s11 + $0x64] sm:$0xf]
        %v1520 = vld [vmem:[%s11 + $0x68] sm:$0xf]
        %v1521 = vld [vmem:[%s11 + $0x6c] sm:$0xf]
        %v1522 = vld [vmem:[%s11 + $0x70] sm:$0xf]
        %v1523 = vld [vmem:[%s11 + $0x74] sm:$0xf]
        %v1524 = vld [vmem:[%s11 + $0x78] sm:$0xf]
        %v1525 = vld [vmem:[%s11 + $0x7c] sm:$0xf]
        %v1558 = vunpack.c.l.b16 %v1494
        %v1559 = vunpack.c.l.b16 %v1495
        %v1560 = vunpack.c.l.b16 %v1496
        %v1561 = vunpack.c.l.b16 %v1497
        %v1562 = vunpack.c.l.b16 %v1498
        %v1563 = vunpack.c.l.b16 %v1499
        %v1564 = vunpack.c.l.b16 %v1500
        %v1565 = vunpack.c.l.b16 %v1501
        %v1566 = vunpack.c.l.b16 %v1502
        %v1567 = vunpack.c.l.b16 %v1503
        %v1568 = vunpack.c.l.b16 %v1504
        %v1569 = vunpack.c.l.b16 %v1505
        %v1570 = vunpack.c.l.b16 %v1506
        %v1571 = vunpack.c.l.b16 %v1507
        %v1572 = vunpack.c.l.b16 %v1508
        %v1573 = vunpack.c.l.b16 %v1509
        %v1574 = vunpack.c.l.b16 %v1510
        %v1575 = vunpack.c.l.b16 %v1511
        %v1576 = vunpack.c.l.b16 %v1512
        %v1577 = vunpack.c.l.b16 %v1513
        %v1578 = vunpack.c.l.b16 %v1514
        %v1579 = vunpack.c.l.b16 %v1515
        %v1580 = vunpack.c.l.b16 %v1516
        %v1581 = vunpack.c.l.b16 %v1517
        %v1582 = vunpack.c.l.b16 %v1518
        %v1583 = vunpack.c.l.b16 %v1519
        %v1584 = vunpack.c.l.b16 %v1520
        %v1585 = vunpack.c.l.b16 %v1521
        %v1586 = vunpack.c.l.b16 %v1522
        %v1587 = vunpack.c.l.b16 %v1523
        %v1588 = vunpack.c.l.b16 %v1524
        %v1589 = vunpack.c.l.b16 %v1525
        %v1590 = vpack.c.b16 %v1559, %v1558
        %v1591 = vpack.c.b16 %v1561, %v1560
        %v1592 = vpack.c.b16 %v1563, %v1562
        %v1593 = vpack.c.b16 %v1565, %v1564
        %v1594 = vpack.c.b16 %v1567, %v1566
        %v1595 = vpack.c.b16 %v1569, %v1568
        %v1596 = vpack.c.b16 %v1571, %v1570
        %v1597 = vpack.c.b16 %v1573, %v1572
        %v1598 = vpack.c.b16 %v1575, %v1574
        %v1599 = vpack.c.b16 %v1577, %v1576
        %v1600 = vpack.c.b16 %v1579, %v1578
        %v1601 = vpack.c.b16 %v1581, %v1580
        %v1602 = vpack.c.b16 %v1583, %v1582
        %v1603 = vpack.c.b16 %v1585, %v1584
        %v1604 = vpack.c.b16 %v1587, %v1586
        %v1605 = vpack.c.b16 %v1589, %v1588
        %1622 = vmatprep.subr.bf16.mxu0 0
        %1623 = vmatpush1.bf16.msra.mxu0 %v1590
        %1624 = vmatprep.subr.bf16.mxu0 0
        %1625 = vmatpush1.bf16.msra.mxu0 %v1591
        %1626 = vmatprep.subr.bf16.mxu0 0
        %1627 = vmatpush1.bf16.msra.mxu0 %v1592
        %1628 = vmatprep.subr.bf16.mxu0 0
        %1629 = vmatpush1.bf16.msra.mxu0 %v1593
        %1630 = vmatprep.subr.bf16.mxu0 0
        %1631 = vmatpush1.bf16.msra.mxu0 %v1594
        %1632 = vmatprep.subr.bf16.mxu0 0
        %1633 = vmatpush1.bf16.msra.mxu0 %v1595
        %1634 = vmatprep.subr.bf16.mxu0 0
        %1635 = vmatpush1.bf16.msra.mxu0 %v1596
        %1636 = vmatprep.subr.bf16.mxu0 0
        %1637 = vmatpush1.bf16.msra.mxu0 %v1597
        %1638 = vmatprep.subr.bf16.mxu0 0
        %1639 = vmatpush1.bf16.msra.mxu0 %v1598
        %1640 = vmatprep.subr.bf16.mxu0 0
        %1641 = vmatpush1.bf16.msra.mxu0 %v1599
        %1642 = vmatprep.subr.bf16.mxu0 0
        %1643 = vmatpush1.bf16.msra.mxu0 %v1600
        %1644 = vmatprep.subr.bf16.mxu0 0
        %1645 = vmatpush1.bf16.msra.mxu0 %v1601
        %1646 = vmatprep.subr.bf16.mxu0 0
        %1647 = vmatpush1.bf16.msra.mxu0 %v1602
        %1648 = vmatprep.subr.bf16.mxu0 0
        %1649 = vmatpush1.bf16.msra.mxu0 %v1603
        %1650 = vmatprep.subr.bf16.mxu0 0
        %1651 = vmatpush1.bf16.msra.mxu0 %v1604
        %1652 = vmatprep.subr.bf16.mxu0 0
        %1653 = vmatpush1.bf16.msra.mxu0 %v1605
        %1654 = vmatprep.mubr.bf16.mxu0 %v1493
        %1655 = vmatmul.mubr.bf16.gmra.mrb[0].mxu0 %v1492
        %v1656 = vpop.f32.mrb[0].mxu0
        %v1657 = vadd.f32 0.0, %v1656
        %v1658 = vpop.f32.mrb[0].mxu0
        %v1659 = vpop.f32.mrb[0].mxu0
        %v1660 = vadd.f32 0.0, %v1659
        %v1661 = vpop.f32.mrb[0].mxu0
        %1662 = vdwg.mxu0
        %v1663 = vmul.f32 %v1657, 0.2
        %v1664 = vmul.f32 %v1660, 0.2
        %v1665 = vmax.f32 %v1657, %v1663
        %v1666 = vmax.f32 %v1660, %v1664
        %v1667 = vld [vmem:[%s4] sm:$0xff]
        %v1668 = vld [vmem:[%s4 + $0x8] sm:$0xff]
        %v1669 = vld [vmem:[%s4 + $0x10] sm:$0xff]
        %v1670 = vld [vmem:[%s4 + $0x18] sm:$0xff]
        %v1671 = vld [vmem:[%s17] sm:$0xf]
        %v1672 = vld [vmem:[%s17 + $0x4] sm:$0xf]
        %v1673 = vpack.c.bf16 %v1666, %v1665
        %1675 = vrot.lane.b32.xlu0 %v1673, 73
        %v1676 = vpop.permute.xlu0 %1675
        %1677 = vrot.lane.b32.xlu0 %v1673, 9
        %v1678 = vpop.permute.xlu0 %1677
        %vm1679 = vcmask 72704
        %v1682 = vsel %vm1679, %v1676, %v1678
        %v1685 = vpack.i.b16 %v1671, %v1671
        %v1687 = vlaneseq
        %v1688 = vshrl.u32 %v1687, 7
        %v1689 = vsub.s32 0, %v1688
        %v1690 = vrot.slane %v1685, %v1689
        %v1691 = vmul.bf16 %v1682, %v1690
        %1692 = vrot.lane.b32.xlu0 %v1673, 72
        %v1693 = vpop.permute.xlu0 %1692
        %1694 = vrot.lane.b32.xlu0 %v1673, 8
        %v1695 = vpop.permute.xlu0 %1694
        %vm1696 = vcmask 64512
        %v1699 = vsel %vm1696, %v1693, %v1695
        %v1701 = vshrl.u32 %v1671, 16
        %v1702 = vpack.i.b16 %v1701, %v1701
        %v1704 = vlaneseq
        %v1705 = vshrl.u32 %v1704, 7
        %v1706 = vsub.s32 0, %v1705
        %v1707 = vrot.slane %v1702, %v1706
        %v1708 = vmul.bf16 %v1699, %v1707
        %1709 = vrot.lane.b32.xlu0 %v1673, 71
        %v1710 = vpop.permute.xlu0 %1709
        %1711 = vrot.lane.b32.xlu0 %v1673, 7
        %v1712 = vpop.permute.xlu0 %1711
        %vm1713 = vcmask 56320
        %v1716 = vsel %vm1713, %v1710, %v1712
        %v1718 = vlaneseq
        %v1719 = vshrl.u32 %v1718, 7
        %v1720 = vsub.s32 1, %v1719
        %v1721 = vrot.slane %v1685, %v1720
        %v1722 = vmul.bf16 %v1716, %v1721
        %1723 = vrot.lane.b32.xlu0 %v1673, 70
        %v1724 = vpop.permute.xlu0 %1723
        %1725 = vrot.lane.b32.xlu0 %v1673, 6
        %v1726 = vpop.permute.xlu0 %1725
        %vm1727 = vcmask 48128
        %v1730 = vsel %vm1727, %v1724, %v1726
        %v1732 = vlaneseq
        %v1733 = vshrl.u32 %v1732, 7
        %v1734 = vsub.s32 1, %v1733
        %v1735 = vrot.slane %v1702, %v1734
        %v1736 = vmul.bf16 %v1730, %v1735
        %1737 = vrot.lane.b32.xlu0 %v1673, 65
        %v1738 = vpop.permute.xlu0 %1737
        %1739 = vrot.lane.b32.xlu0 %v1673, 1
        %v1740 = vpop.permute.xlu0 %1739
        %v1743 = vsel %vm806, %v1738, %v1740
        %v1745 = vlaneseq
        %v1746 = vshrl.u32 %v1745, 7
        %v1747 = vsub.s32 2, %v1746
        %v1748 = vrot.slane %v1685, %v1747
        %v1749 = vmul.bf16 %v1743, %v1748
        %v1750 = vlaneseq
        %v1751 = vshrl.u32 %v1750, 7
        %v1752 = vsub.s32 2, %v1751
        %v1753 = vrot.slane %v1702, %v1752
        %v1754 = vmul.bf16 %v1673, %v1753
        %1755 = vrot.lane.b32.xlu0 %v1673, 127
        %v1756 = vpop.permute.xlu0 %1755
        %1757 = vrot.lane.b32.xlu0 %v1673, 63
        %v1758 = vpop.permute.xlu0 %1757
        %vm1759 = vcmask 515072
        %v1762 = vsel %vm1759, %v1756, %v1758
        %v1764 = vlaneseq
        %v1765 = vshrl.u32 %v1764, 7
        %v1766 = vsub.s32 3, %v1765
        %v1767 = vrot.slane %v1685, %v1766
        %v1768 = vmul.bf16 %v1762, %v1767
        %1769 = vrot.lane.b32.xlu0 %v1673, 126
        %v1770 = vpop.permute.xlu0 %1769
        %1771 = vrot.lane.b32.xlu0 %v1673, 62
        %v1772 = vpop.permute.xlu0 %1771
        %vm1773 = vcmask 506880
        %v1776 = vsel %vm1773, %v1770, %v1772
        %v1778 = vlaneseq
        %v1779 = vshrl.u32 %v1778, 7
        %v1780 = vsub.s32 3, %v1779
        %v1781 = vrot.slane %v1702, %v1780
        %v1782 = vmul.bf16 %v1776, %v1781
        %1783 = vrot.lane.b32.xlu0 %v1673, 121
        %v1784 = vpop.permute.xlu0 %1783
        %1785 = vrot.lane.b32.xlu0 %v1673, 57
        %v1786 = vpop.permute.xlu0 %1785
        %vm1787 = vcmask 465920
        %v1790 = vsel %vm1787, %v1784, %v1786
        %v1793 = vpack.i.b16 %v1672, %v1672
        %v1795 = vlaneseq
        %v1796 = vshrl.u32 %v1795, 7
        %v1797 = vsub.s32 0, %v1796
        %v1798 = vrot.slane %v1793, %v1797
        %v1799 = vmul.bf16 %v1790, %v1798
        %1800 = vrot.lane.b32.xlu0 %v1673, 120
        %v1801 = vpop.permute.xlu0 %1800
        %1802 = vrot.lane.b32.xlu0 %v1673, 56
        %v1803 = vpop.permute.xlu0 %1802
        %vm1804 = vcmask 457728
        %v1807 = vsel %vm1804, %v1801, %v1803
        %v1809 = vshrl.u32 %v1672, 16
        %v1810 = vpack.i.b16 %v1809, %v1809
        %v1812 = vlaneseq
        %v1813 = vshrl.u32 %v1812, 7
        %v1814 = vsub.s32 0, %v1813
        %v1815 = vrot.slane %v1810, %v1814
        %v1816 = vmul.bf16 %v1807, %v1815
        %1817 = vrot.lane.b32.xlu0 %v1673, 119
        %v1818 = vpop.permute.xlu0 %1817
        %1819 = vrot.lane.b32.xlu0 %v1673, 55
        %v1820 = vpop.permute.xlu0 %1819
        %vm1821 = vcmask 449536
        %v1824 = vsel %vm1821, %v1818, %v1820
        %v1826 = vlaneseq
        %v1827 = vshrl.u32 %v1826, 7
        %v1828 = vsub.s32 1, %v1827
        %v1829 = vrot.slane %v1793, %v1828
        %v1830 = vmul.bf16 %v1824, %v1829
        %1831 = vrot.lane.b32.xlu0 %v1673, 118
        %v1832 = vpop.permute.xlu0 %1831
        %1833 = vrot.lane.b32.xlu0 %v1673, 54
        %v1834 = vpop.permute.xlu0 %1833
        %vm1835 = vcmask 441344
        %v1838 = vsel %vm1835, %v1832, %v1834
        %v1840 = vlaneseq
        %v1841 = vshrl.u32 %v1840, 7
        %v1842 = vsub.s32 1, %v1841
        %v1843 = vrot.slane %v1810, %v1842
        %v1844 = vmul.bf16 %v1838, %v1843
        %1845 = vrot.lane.b32.xlu0 %v1673, 113
        %v1846 = vpop.permute.xlu0 %1845
        %1847 = vrot.lane.b32.xlu0 %v1673, 49
        %v1848 = vpop.permute.xlu0 %1847
        %vm1849 = vcmask 400384
        %v1852 = vsel %vm1849, %v1846, %v1848
        %v1854 = vlaneseq
        %v1855 = vshrl.u32 %v1854, 7
        %v1856 = vsub.s32 2, %v1855
        %v1857 = vrot.slane %v1793, %v1856
        %v1858 = vmul.bf16 %v1852, %v1857
        %1859 = vrot.lane.b32.xlu0 %v1673, 112
        %v1860 = vpop.permute.xlu0 %1859
        %1861 = vrot.lane.b32.xlu0 %v1673, 48
        %v1862 = vpop.permute.xlu0 %1861
        %vm1863 = vcmask 392192
        %v1866 = vsel %vm1863, %v1860, %v1862
        %v1868 = vlaneseq
        %v1869 = vshrl.u32 %v1868, 7
        %v1870 = vsub.s32 2, %v1869
        %v1871 = vrot.slane %v1810, %v1870
        %v1872 = vmul.bf16 %v1866, %v1871
        %1873 = vrot.lane.b32.xlu0 %v1673, 111
        %v1874 = vpop.permute.xlu0 %1873
        %1875 = vrot.lane.b32.xlu0 %v1673, 47
        %v1876 = vpop.permute.xlu0 %1875
        %vm1877 = vcmask 384000
        %v1880 = vsel %vm1877, %v1874, %v1876
        %v1882 = vlaneseq
        %v1883 = vshrl.u32 %v1882, 7
        %v1884 = vsub.s32 3, %v1883
        %v1885 = vrot.slane %v1793, %v1884
        %v1886 = vmul.bf16 %v1880, %v1885
        %1887 = vrot.lane.b32.xlu0 %v1673, 110
        %v1888 = vpop.permute.xlu0 %1887
        %1889 = vrot.lane.b32.xlu0 %v1673, 46
        %v1890 = vpop.permute.xlu0 %1889
        %vm1891 = vcmask 375808
        %v1894 = vsel %vm1891, %v1888, %v1890
        %v1896 = vlaneseq
        %v1897 = vshrl.u32 %v1896, 7
        %v1898 = vsub.s32 3, %v1897
        %v1899 = vrot.slane %v1810, %v1898
        %v1900 = vmul.bf16 %v1894, %v1899
        %v1905 = vunpack.c.l.b16 %v1667
        %v1906 = vunpack.c.h.b16 %v1667
        %v1907 = vunpack.c.l.b16 %v1668
        %v1908 = vunpack.c.h.b16 %v1668
        %v1909 = vunpack.c.l.b16 %v1669
        %v1910 = vunpack.c.h.b16 %v1669
        %v1911 = vunpack.c.l.b16 %v1670
        %v1912 = vunpack.c.h.b16 %v1670
        %v1913 = vpack.c.b16 %v1907, %v1905
        %v1914 = vpack.c.b16 %v1908, %v1906
        %v1915 = vpack.c.b16 %v1911, %v1909
        %v1916 = vpack.c.b16 %v1912, %v1910
        %1921 = vmatprep.subr.bf16.mxu0 0
        %1922 = vmatpush1.bf16.msra.mxu0 %v1691
        %1923 = vmatprep.subr.bf16.mxu0 0
        %1924 = vmatpush1.bf16.msra.mxu0 %v1708
        %1925 = vmatprep.subr.bf16.mxu0 0
        %1926 = vmatpush1.bf16.msra.mxu0 %v1722
        %1927 = vmatprep.subr.bf16.mxu0 0
        %1928 = vmatpush1.bf16.msra.mxu0 %v1736
        %1929 = vmatprep.subr.bf16.mxu0 0
        %1930 = vmatpush1.bf16.msra.mxu0 %v1749
        %1931 = vmatprep.subr.bf16.mxu0 0
        %1932 = vmatpush1.bf16.msra.mxu0 %v1754
        %1933 = vmatprep.subr.bf16.mxu0 0
        %1934 = vmatpush1.bf16.msra.mxu0 %v1768
        %1935 = vmatprep.subr.bf16.mxu0 0
        %1936 = vmatpush1.bf16.msra.mxu0 %v1782
        %1937 = vmatprep.subr.bf16.mxu0 0
        %1938 = vmatpush1.bf16.msra.mxu0 %v1799
        %1939 = vmatprep.subr.bf16.mxu0 0
        %1940 = vmatpush1.bf16.msra.mxu0 %v1816
        %1941 = vmatprep.subr.bf16.mxu0 0
        %1942 = vmatpush1.bf16.msra.mxu0 %v1830
        %1943 = vmatprep.subr.bf16.mxu0 0
        %1944 = vmatpush1.bf16.msra.mxu0 %v1844
        %1945 = vmatprep.subr.bf16.mxu0 0
        %1946 = vmatpush1.bf16.msra.mxu0 %v1858
        %1947 = vmatprep.subr.bf16.mxu0 0
        %1948 = vmatpush1.bf16.msra.mxu0 %v1872
        %1949 = vmatprep.subr.bf16.mxu0 0
        %1950 = vmatpush1.bf16.msra.mxu0 %v1886
        %1951 = vmatprep.subr.bf16.mxu0 0
        %1952 = vmatpush1.bf16.msra.mxu0 %v1900
        %1953 = vmatprep.mubr.bf16.mxu0 %v1914
        %1954 = vmatmul.mubr.bf16.gmra.mrb[0].mxu0 %v1913
        %v1955 = vpop.f32.mrb[0].mxu0
        %v1956 = vadd.f32 0.0, %v1955
        %v1957 = vpop.f32.mrb[0].mxu0
        %v1958 = vpop.f32.mrb[0].mxu0
        %v1959 = vadd.f32 0.0, %v1958
        %v1960 = vpop.f32.mrb[0].mxu0
        %1961 = vmatprep.mubr.bf16.mxu0 %v1916
        %1962 = vmatmul.mubr.bf16.gmra.mrb[0].mxu0 %v1915
        %v1963 = vpop.f32.mrb[0].mxu0
        %v1964 = vadd.f32 0.0, %v1963
        %v1965 = vpop.f32.mrb[0].mxu0
        %v1966 = vpop.f32.mrb[0].mxu0
        %v1967 = vadd.f32 0.0, %v1966
        %v1968 = vpop.f32.mrb[0].mxu0
        %1969 = vdwg.mxu0
        %v1970 = vpack.c.bf16 %v1959, %v1956
        %v1971 = vpack.c.bf16 %v1967, %v1964
        %v1972 = vld [vmem:[%s12] sm:$0xf]
        %v1973 = vld [vmem:[%s12 + $0x4] sm:$0xf]
        %v1974 = vld [vmem:[%s12 + $0x8] sm:$0xf]
        %v1975 = vld [vmem:[%s12 + $0xc] sm:$0xf]
        %v1976 = vld [vmem:[%s12 + $0x10] sm:$0xf]
        %v1977 = vld [vmem:[%s12 + $0x14] sm:$0xf]
        %v1978 = vld [vmem:[%s12 + $0x18] sm:$0xf]
        %v1979 = vld [vmem:[%s12 + $0x1c] sm:$0xf]
        %v1988 = vunpack.c.l.b16 %v1972
        %v1989 = vunpack.c.l.b16 %v1973
        %v1990 = vunpack.c.l.b16 %v1974
        %v1991 = vunpack.c.l.b16 %v1975
        %v1992 = vunpack.c.l.b16 %v1976
        %v1993 = vunpack.c.l.b16 %v1977
        %v1994 = vunpack.c.l.b16 %v1978
        %v1995 = vunpack.c.l.b16 %v1979
        %v1996 = vpack.c.b16 %v1989, %v1988
        %v1997 = vpack.c.b16 %v1991, %v1990
        %v1998 = vpack.c.b16 %v1993, %v1992
        %v1999 = vpack.c.b16 %v1995, %v1994
        %vm2004 = vcmask 523264
        %v2006 = vsel %vm2004, %v1970, 0
        %v2009 = vsel %vm2004, %v1971, 0
        %2011 = vmatprep.subr.bf16.mxu0 0
        %2012 = vmatpush1.bf16.msra.mxu0 %v1996
        %2013 = vmatprep.subr.bf16.mxu0 0
        %2014 = vmatpush1.bf16.msra.mxu0 %v1997
        %2015 = vmatprep.subr.bf16.mxu0 0
        %2016 = vmatpush1.bf16.msra.mxu0 %v1998
        %2017 = vmatprep.subr.bf16.mxu0 0
        %2018 = vmatpush1.bf16.msra.mxu0 %v1999
        %2019 = vmatprep.subr.bf16.mxu0 0
        %2020 = vmatpush1.bf16.msra.mxu0 0
        %2021 = vmatprep.subr.bf16.mxu0 0
        %2022 = vmatpush1.bf16.msra.mxu0 0
        %2023 = vmatprep.subr.bf16.mxu0 0
        %2024 = vmatpush1.bf16.msra.mxu0 0
        %2025 = vmatprep.subr.bf16.mxu0 0
        %2026 = vmatpush1.bf16.msra.mxu0 0
        %2027 = vmatprep.subr.bf16.mxu0 0
        %2028 = vmatpush1.bf16.msra.mxu0 0
        %2029 = vmatprep.subr.bf16.mxu0 0
        %2030 = vmatpush1.bf16.msra.mxu0 0
        %2031 = vmatprep.subr.bf16.mxu0 0
        %2032 = vmatpush1.bf16.msra.mxu0 0
        %2033 = vmatprep.subr.bf16.mxu0 0
        %2034 = vmatpush1.bf16.msra.mxu0 0
        %2035 = vmatprep.subr.bf16.mxu0 0
        %2036 = vmatpush1.bf16.msra.mxu0 0
        %2037 = vmatprep.subr.bf16.mxu0 0
        %2038 = vmatpush1.bf16.msra.mxu0 0
        %2039 = vmatprep.subr.bf16.mxu0 0
        %2040 = vmatpush1.bf16.msra.mxu0 0
        %2041 = vmatprep.subr.bf16.mxu0 0
        %2042 = vmatpush1.bf16.msra.mxu0 0
        %2043 = vmatprep.mubr.bf16.mxu0 0
        %2044 = vmatmul.mubr.bf16.gmra.mrb[0].mxu0 %v2006
        %v2045 = vpop.f32.mrb[0].mxu0
        %v2046 = vadd.f32 0.0, %v2045
        %v2047 = vpop.f32.mrb[0].mxu0
        %v2048 = vpop.f32.mrb[0].mxu0
        %v2049 = vadd.f32 0.0, %v2048
        %v2050 = vpop.f32.mrb[0].mxu0
        %2051 = vmatprep.mubr.bf16.mxu0 0
        %2052 = vmatmul.mubr.bf16.gmra.mrb[0].mxu0 %v2009
        %v2053 = vpop.f32.mrb[0].mxu0
        %v2054 = vadd.f32 0.0, %v2053
        %v2055 = vpop.f32.mrb[0].mxu0
        %v2056 = vpop.f32.mrb[0].mxu0
        %v2057 = vadd.f32 0.0, %v2056
        %v2058 = vpop.f32.mrb[0].mxu0
        %2059 = vdwg.mxu0
        %v2060 = vmul.f32 %v2046, 0.2
        %v2061 = vmul.f32 %v2049, 0.2
        %v2062 = vmul.f32 %v2054, 0.2
        %v2063 = vmul.f32 %v2057, 0.2
        %v2064 = vmax.f32 %v2046, %v2060
        %v2065 = vmax.f32 %v2049, %v2061
        %v2066 = vmax.f32 %v2054, %v2062
        %v2067 = vmax.f32 %v2057, %v2063
        %v2068 = vpack.c.bf16 %v2065, %v2064
        %v2069 = vpack.c.bf16 %v2067, %v2066
        %v2070 = vld [vmem:[%s13] sm:$0xf]
        %v2071 = vld [vmem:[%s13 + $0x4] sm:$0xf]
        %v2074 = vunpack.c.l.b16 %v2070
        %v2075 = vunpack.c.l.b16 %v2071
        %v2076 = vpack.c.b16 %v2075, %v2074
        %v2079 = vsel %vm756, %v2068, 0
        %v2082 = vsel %vm756, %v2069, 0
        %2084 = vmatprep.subr.bf16.mxu0 0
        %2085 = vmatpush1.bf16.msra.mxu0 %v2076
        %2086 = vmatprep.subr.bf16.mxu0 0
        %2087 = vmatpush1.bf16.msra.mxu0 0
        %2088 = vmatprep.subr.bf16.mxu0 0
        %2089 = vmatpush1.bf16.msra.mxu0 0
        %2090 = vmatprep.subr.bf16.mxu0 0
        %2091 = vmatpush1.bf16.msra.mxu0 0
        %2092 = vmatprep.subr.bf16.mxu0 0
        %2093 = vmatpush1.bf16.msra.mxu0 0
        %2094 = vmatprep.subr.bf16.mxu0 0
        %2095 = vmatpush1.bf16.msra.mxu0 0
        %2096 = vmatprep.subr.bf16.mxu0 0
        %2097 = vmatpush1.bf16.msra.mxu0 0
        %2098 = vmatprep.subr.bf16.mxu0 0
        %2099 = vmatpush1.bf16.msra.mxu0 0
        %2100 = vmatprep.subr.bf16.mxu0 0
        %2101 = vmatpush1.bf16.msra.mxu0 0
        %2102 = vmatprep.subr.bf16.mxu0 0
        %2103 = vmatpush1.bf16.msra.mxu0 0
        %2104 = vmatprep.subr.bf16.mxu0 0
        %2105 = vmatpush1.bf16.msra.mxu0 0
        %2106 = vmatprep.subr.bf16.mxu0 0
        %2107 = vmatpush1.bf16.msra.mxu0 0
        %2108 = vmatprep.subr.bf16.mxu0 0
        %2109 = vmatpush1.bf16.msra.mxu0 0
        %2110 = vmatprep.subr.bf16.mxu0 0
        %2111 = vmatpush1.bf16.msra.mxu0 0
        %2112 = vmatprep.subr.bf16.mxu0 0
        %2113 = vmatpush1.bf16.msra.mxu0 0
        %2114 = vmatprep.subr.bf16.mxu0 0
        %2115 = vmatpush1.bf16.msra.mxu0 0
        %2116 = vmatprep.mubr.bf16.mxu0 0
        %2117 = vmatmul.mubr.bf16.gmra.mrb[0].mxu0 %v2079
        %v2118 = vpop.f32.mrb[0].mxu0
        %v2119 = vadd.f32 0.0, %v2118
        %v2120 = vpop.f32.mrb[0].mxu0
        %v2121 = vpop.f32.mrb[0].mxu0
        %v2122 = vadd.f32 0.0, %v2121
        %v2123 = vpop.f32.mrb[0].mxu0
        %2124 = vmatprep.mubr.bf16.mxu0 0
        %2125 = vmatmul.mubr.bf16.gmra.mrb[0].mxu0 %v2082
        %v2126 = vpop.f32.mrb[0].mxu0
        %v2127 = vadd.f32 0.0, %v2126
        %v2128 = vpop.f32.mrb[0].mxu0
        %v2129 = vpop.f32.mrb[0].mxu0
        %v2130 = vadd.f32 0.0, %v2129
        %v2131 = vpop.f32.mrb[0].mxu0
        %2132 = vdwg.mxu0
        %v2133 = vld [vmem:[%s5] sm:$0xff]
        %v2134 = vld [vmem:[%s5 + $0x8] sm:$0xf]
        %v2135 = vld [vmem:[%s5 + $0xc] sm:$0xff]
        %v2136 = vld [vmem:[%s5 + $0x14] sm:$0xf]
        %v2137 = vld [vmem:[%s18] sm:$0xf]
        %v2138 = vld [vmem:[%s18 + $0x4] sm:$0x1]
        %v2139 = vpack.c.bf16 %v2122, %v2119
        %v2140 = vpack.c.bf16 %v2130, %v2127
        %2143 = vrot.lane.b32.xlu0 %v2139, 73
        %v2144 = vpop.permute.xlu0 %2143
        %2145 = vrot.lane.b32.xlu0 %v2140, 73
        %v2146 = vpop.permute.xlu0 %2145
        %2147 = vrot.lane.b32.xlu0 %v2139, 9
        %v2148 = vpop.permute.xlu0 %2147
        %2149 = vrot.lane.b32.xlu0 %v2140, 9
        %v2150 = vpop.permute.xlu0 %2149
        %v2153 = vsel %vm1679, %v2144, %v2148
        %v2157 = vsel %vm1679, %v2146, %v2150
        %v2160 = vpack.i.b16 %v2137, %v2137
        %v2162 = vlaneseq
        %v2163 = vshrl.u32 %v2162, 7
        %v2164 = vsub.s32 0, %v2163
        %v2165 = vrot.slane %v2160, %v2164
        %v2166 = vmul.bf16 %v2153, %v2165
        %v2167 = vmul.bf16 %v2157, %v2165
        %2168 = vrot.lane.b32.xlu0 %v2139, 72
        %v2169 = vpop.permute.xlu0 %2168
        %2170 = vrot.lane.b32.xlu0 %v2140, 72
        %v2171 = vpop.permute.xlu0 %2170
        %2172 = vrot.lane.b32.xlu0 %v2139, 8
        %v2173 = vpop.permute.xlu0 %2172
        %2174 = vrot.lane.b32.xlu0 %v2140, 8
        %v2175 = vpop.permute.xlu0 %2174
        %v2178 = vsel %vm1696, %v2169, %v2173
        %v2182 = vsel %vm1696, %v2171, %v2175
        %v2184 = vshrl.u32 %v2137, 16
        %v2185 = vpack.i.b16 %v2184, %v2184
        %v2187 = vlaneseq
        %v2188 = vshrl.u32 %v2187, 7
        %v2189 = vsub.s32 0, %v2188
        %v2190 = vrot.slane %v2185, %v2189
        %v2191 = vmul.bf16 %v2178, %v2190
        %v2192 = vmul.bf16 %v2182, %v2190
        %2193 = vrot.lane.b32.xlu0 %v2139, 71
        %v2194 = vpop.permute.xlu0 %2193
        %2195 = vrot.lane.b32.xlu0 %v2140, 71
        %v2196 = vpop.permute.xlu0 %2195
        %2197 = vrot.lane.b32.xlu0 %v2139, 7
        %v2198 = vpop.permute.xlu0 %2197
        %2199 = vrot.lane.b32.xlu0 %v2140, 7
        %v2200 = vpop.permute.xlu0 %2199
        %v2203 = vsel %vm1713, %v2194, %v2198
        %v2207 = vsel %vm1713, %v2196, %v2200
        %v2209 = vlaneseq
        %v2210 = vshrl.u32 %v2209, 7
        %v2211 = vsub.s32 1, %v2210
        %v2212 = vrot.slane %v2160, %v2211
        %v2213 = vmul.bf16 %v2203, %v2212
        %v2214 = vmul.bf16 %v2207, %v2212
        %2215 = vrot.lane.b32.xlu0 %v2139, 65
        %v2216 = vpop.permute.xlu0 %2215
        %2217 = vrot.lane.b32.xlu0 %v2140, 65
        %v2218 = vpop.permute.xlu0 %2217
        %2219 = vrot.lane.b32.xlu0 %v2139, 1
        %v2220 = vpop.permute.xlu0 %2219
        %2221 = vrot.lane.b32.xlu0 %v2140, 1
        %v2222 = vpop.permute.xlu0 %2221
        %v2225 = vsel %vm806, %v2216, %v2220
        %v2229 = vsel %vm806, %v2218, %v2222
        %v2231 = vlaneseq
        %v2232 = vshrl.u32 %v2231, 7
        %v2233 = vsub.s32 1, %v2232
        %v2234 = vrot.slane %v2185, %v2233
        %v2235 = vmul.bf16 %v2225, %v2234
        %v2236 = vmul.bf16 %v2229, %v2234
        %2237 = vrot.lane.b32.xlu0 %v2139, 127
        %v2238 = vpop.permute.xlu0 %2237
        %2239 = vrot.lane.b32.xlu0 %v2140, 127
        %v2240 = vpop.permute.xlu0 %2239
        %2241 = vrot.lane.b32.xlu0 %v2139, 63
        %v2242 = vpop.permute.xlu0 %2241
        %2243 = vrot.lane.b32.xlu0 %v2140, 63
        %v2244 = vpop.permute.xlu0 %2243
        %v2247 = vsel %vm1759, %v2238, %v2242
        %v2251 = vsel %vm1759, %v2240, %v2244
        %v2253 = vlaneseq
        %v2254 = vshrl.u32 %v2253, 7
        %v2255 = vsub.s32 2, %v2254
        %v2256 = vrot.slane %v2185, %v2255
        %v2257 = vmul.bf16 %v2247, %v2256
        %v2258 = vmul.bf16 %v2251, %v2256
        %2259 = vrot.lane.b32.xlu0 %v2139, 121
        %v2260 = vpop.permute.xlu0 %2259
        %2261 = vrot.lane.b32.xlu0 %v2140, 121
        %v2262 = vpop.permute.xlu0 %2261
        %2263 = vrot.lane.b32.xlu0 %v2139, 57
        %v2264 = vpop.permute.xlu0 %2263
        %2265 = vrot.lane.b32.xlu0 %v2140, 57
        %v2266 = vpop.permute.xlu0 %2265
        %v2269 = vsel %vm1787, %v2260, %v2264
        %v2273 = vsel %vm1787, %v2262, %v2266
        %v2275 = vlaneseq
        %v2276 = vshrl.u32 %v2275, 7
        %v2277 = vsub.s32 3, %v2276
        %v2278 = vrot.slane %v2160, %v2277
        %v2279 = vmul.bf16 %v2269, %v2278
        %v2280 = vmul.bf16 %v2273, %v2278
        %2281 = vrot.lane.b32.xlu0 %v2139, 120
        %v2282 = vpop.permute.xlu0 %2281
        %2283 = vrot.lane.b32.xlu0 %v2140, 120
        %v2284 = vpop.permute.xlu0 %2283
        %2285 = vrot.lane.b32.xlu0 %v2139, 56
        %v2286 = vpop.permute.xlu0 %2285
        %2287 = vrot.lane.b32.xlu0 %v2140, 56
        %v2288 = vpop.permute.xlu0 %2287
        %v2291 = vsel %vm1804, %v2282, %v2286
        %v2295 = vsel %vm1804, %v2284, %v2288
        %v2297 = vlaneseq
        %v2298 = vshrl.u32 %v2297, 7
        %v2299 = vsub.s32 3, %v2298
        %v2300 = vrot.slane %v2185, %v2299
        %v2301 = vmul.bf16 %v2291, %v2300
        %v2302 = vmul.bf16 %v2295, %v2300
        %2303 = vrot.lane.b32.xlu0 %v2139, 119
        %v2304 = vpop.permute.xlu0 %2303
        %2305 = vrot.lane.b32.xlu0 %v2140, 119
        %v2306 = vpop.permute.xlu0 %2305
        %2307 = vrot.lane.b32.xlu0 %v2139, 55
        %v2308 = vpop.permute.xlu0 %2307
        %2309 = vrot.lane.b32.xlu0 %v2140, 55
        %v2310 = vpop.permute.xlu0 %2309
        %v2313 = vsel %vm1821, %v2304, %v2308
        %v2317 = vsel %vm1821, %v2306, %v2310
        %v2320 = vpack.i.b16 %v2138, %v2138
        %v2322 = vlaneseq
        %v2323 = vshrl.u32 %v2322, 7
        %v2324 = vsub.s32 0, %v2323
        %v2325 = vrot.slane %v2320, %v2324
        %v2326 = vmul.bf16 %v2313, %v2325
        %v2327 = vmul.bf16 %v2317, %v2325
        %v2330 = vunpack.c.l.b16 %v2134
        %v2331 = vunpack.c.l.b16 %v2136
        %v2332 = vpack.c.b16 %v2331, %v2330
        %vm2333 = vcmask 261120
        %v2335 = vsel %vm2333, %v2332, 0
        %2337 = vmatprep.subr.bf16.mxu0 0
        %2338 = vmatpush1.bf16.msra.mxu0 %v2326
        %2339 = vmatprep.subr.bf16.mxu0 0
        %2340 = vmatpush1.bf16.msra.mxu0 %v2327
        %2341 = vmatprep.subr.bf16.mxu0 0
        %2342 = vmatpush1.bf16.msra.mxu0 0
        %2343 = vmatprep.subr.bf16.mxu0 0
        %2344 = vmatpush1.bf16.msra.mxu0 0
        %2345 = vmatprep.subr.bf16.mxu0 0
        %2346 = vmatpush1.bf16.msra.mxu0 0
        %2347 = vmatprep.subr.bf16.mxu0 0
        %2348 = vmatpush1.bf16.msra.mxu0 0
        %2349 = vmatprep.subr.bf16.mxu0 0
        %2350 = vmatpush1.bf16.msra.mxu0 0
        %2351 = vmatprep.subr.bf16.mxu0 0
        %2352 = vmatpush1.bf16.msra.mxu0 0
        %2353 = vmatprep.subr.bf16.mxu0 0
        %2354 = vmatpush1.bf16.msra.mxu0 0
        %2355 = vmatprep.subr.bf16.mxu0 0
        %2356 = vmatpush1.bf16.msra.mxu0 0
        %2357 = vmatprep.subr.bf16.mxu0 0
        %2358 = vmatpush1.bf16.msra.mxu0 0
        %2359 = vmatprep.subr.bf16.mxu0 0
        %2360 = vmatpush1.bf16.msra.mxu0 0
        %2361 = vmatprep.subr.bf16.mxu0 0
        %2362 = vmatpush1.bf16.msra.mxu0 0
        %2363 = vmatprep.subr.bf16.mxu0 0
        %2364 = vmatpush1.bf16.msra.mxu0 0
        %2365 = vmatprep.subr.bf16.mxu0 0
        %2366 = vmatpush1.bf16.msra.mxu0 0
        %2367 = vmatprep.subr.bf16.mxu0 0
        %2368 = vmatpush1.bf16.msra.mxu0 0
        %2369 = vmatprep.mubr.bf16.mxu0 0
        %2370 = vmatmul.mubr.bf16.gmra.mrb[0].mxu0 %v2335
        %v2371 = vpop.f32.mrb[0].mxu0
        %v2372 = vadd.f32 0.0, %v2371
        %v2373 = vpop.f32.mrb[0].mxu0
        %v2374 = vpop.f32.mrb[0].mxu0
        %v2375 = vadd.f32 0.0, %v2374
        %v2376 = vpop.f32.mrb[0].mxu0
        %2377 = vdwg.mxu0
        %v2380 = vunpack.c.l.b16 %v2133
        %v2381 = vunpack.c.h.b16 %v2133
        %v2382 = vunpack.c.l.b16 %v2135
        %v2383 = vunpack.c.h.b16 %v2135
        %v2384 = vpack.c.b16 %v2382, %v2380
        %v2385 = vpack.c.b16 %v2383, %v2381
        %2388 = vmatprep.subr.bf16.mxu0 0
        %2389 = vmatpush1.bf16.msra.mxu0 %v2166
        %2390 = vmatprep.subr.bf16.mxu0 0
        %2391 = vmatpush1.bf16.msra.mxu0 %v2167
        %2392 = vmatprep.subr.bf16.mxu0 0
        %2393 = vmatpush1.bf16.msra.mxu0 %v2191
        %2394 = vmatprep.subr.bf16.mxu0 0
        %2395 = vmatpush1.bf16.msra.mxu0 %v2192
        %2396 = vmatprep.subr.bf16.mxu0 0
        %2397 = vmatpush1.bf16.msra.mxu0 %v2213
        %2398 = vmatprep.subr.bf16.mxu0 0
        %2399 = vmatpush1.bf16.msra.mxu0 %v2214
        %2400 = vmatprep.subr.bf16.mxu0 0
        %2401 = vmatpush1.bf16.msra.mxu0 %v2235
        %2402 = vmatprep.subr.bf16.mxu0 0
        %2403 = vmatpush1.bf16.msra.mxu0 %v2236
        %2404 = vmatprep.subr.bf16.mxu0 0
        %2405 = vmatpush1.bf16.msra.mxu0 %v2139
        %2406 = vmatprep.subr.bf16.mxu0 0
        %2407 = vmatpush1.bf16.msra.mxu0 %v2140
        %2408 = vmatprep.subr.bf16.mxu0 0
        %2409 = vmatpush1.bf16.msra.mxu0 %v2257
        %2410 = vmatprep.subr.bf16.mxu0 0
        %2411 = vmatpush1.bf16.msra.mxu0 %v2258
        %2412 = vmatprep.subr.bf16.mxu0 0
        %2413 = vmatpush1.bf16.msra.mxu0 %v2279
        %2414 = vmatprep.subr.bf16.mxu0 0
        %2415 = vmatpush1.bf16.msra.mxu0 %v2280
        %2416 = vmatprep.subr.bf16.mxu0 0
        %2417 = vmatpush1.bf16.msra.mxu0 %v2301
        %2418 = vmatprep.subr.bf16.mxu0 0
        %2419 = vmatpush1.bf16.msra.mxu0 %v2302
        %2420 = vmatprep.mubr.bf16.mxu0 %v2385
        %2421 = vmatmul.mubr.bf16.gmra.mrb[0].mxu0 %v2384
        %v2422 = vpop.f32.mrb[0].mxu0
        %v2423 = vadd.f32 %v2372, %v2422
        %v2424 = vpop.f32.mrb[0].mxu0
        %v2425 = vpop.f32.mrb[0].mxu0
        %v2426 = vadd.f32 %v2375, %v2425
        %v2427 = vpop.f32.mrb[0].mxu0
        %2428 = vdwg.mxu0
        %v2429 = vmul.f32 %v2423, 0.2
        %v2430 = vmul.f32 %v2426, 0.2
        %v2431 = vmax.f32 %v2423, %v2429
        %v2432 = vmax.f32 %v2426, %v2430
        %v2433 = vadd.f32 %v2431, %v1665
        %v2434 = vadd.f32 %v2432, %v1666
        %v2435 = vpack.c.bf16 %v2434, %v2433
        %v2436 = vld [vmem:[%s14] sm:$0xff]
        %v2437 = vld [vmem:[%s14 + $0x8] sm:$0xff]
        %v2438 = vld [vmem:[%s14 + $0x10] sm:$0xff]
        %v2439 = vld [vmem:[%s14 + $0x18] sm:$0xff]
        %v2440 = vld [vmem:[%s14 + $0x20] sm:$0xff]
        %v2441 = vld [vmem:[%s14 + $0x28] sm:$0xff]
        %v2442 = vld [vmem:[%s14 + $0x30] sm:$0xff]
        %v2443 = vld [vmem:[%s14 + $0x38] sm:$0xff]
        %v2452 = vunpack.c.l.b16 %v2436
        %v2453 = vunpack.c.h.b16 %v2436
        %v2454 = vunpack.c.l.b16 %v2437
        %v2455 = vunpack.c.h.b16 %v2437
        %v2456 = vunpack.c.l.b16 %v2438
        %v2457 = vunpack.c.h.b16 %v2438
        %v2458 = vunpack.c.l.b16 %v2439
        %v2459 = vunpack.c.h.b16 %v2439
        %v2460 = vunpack.c.l.b16 %v2440
        %v2461 = vunpack.c.h.b16 %v2440
        %v2462 = vunpack.c.l.b16 %v2441
        %v2463 = vunpack.c.h.b16 %v2441
        %v2464 = vunpack.c.l.b16 %v2442
        %v2465 = vunpack.c.h.b16 %v2442
        %v2466 = vunpack.c.l.b16 %v2443
        %v2467 = vunpack.c.h.b16 %v2443
        %v2468 = vpack.c.b16 %v2454, %v2452
        %v2469 = vpack.c.b16 %v2455, %v2453
        %v2470 = vpack.c.b16 %v2458, %v2456
        %v2471 = vpack.c.b16 %v2459, %v2457
        %v2472 = vpack.c.b16 %v2462, %v2460
        %v2473 = vpack.c.b16 %v2463, %v2461
        %v2474 = vpack.c.b16 %v2466, %v2464
        %v2475 = vpack.c.b16 %v2467, %v2465
        %v2485 = vsel %vm2004, %v2435, 0
        %2487 = vmatprep.subr.bf16.mxu0 %v2469
        %2488 = vmatpush1.bf16.msra.mxu0 %v2468
        %2489 = vmatprep.subr.bf16.mxu0 %v2471
        %2490 = vmatpush1.bf16.msra.mxu0 %v2470
        %2491 = vmatprep.subr.bf16.mxu0 %v2473
        %2492 = vmatpush1.bf16.msra.mxu0 %v2472
        %2493 = vmatprep.subr.bf16.mxu0 %v2475
        %2494 = vmatpush1.bf16.msra.mxu0 %v2474
        %2495 = vmatprep.subr.bf16.mxu0 0
        %2496 = vmatpush1.bf16.msra.mxu0 0
        %2497 = vmatprep.subr.bf16.mxu0 0
        %2498 = vmatpush1.bf16.msra.mxu0 0
        %2499 = vmatprep.subr.bf16.mxu0 0
        %2500 = vmatpush1.bf16.msra.mxu0 0
        %2501 = vmatprep.subr.bf16.mxu0 0
        %2502 = vmatpush1.bf16.msra.mxu0 0
        %2503 = vmatprep.subr.bf16.mxu0 0
        %2504 = vmatpush1.bf16.msra.mxu0 0
        %2505 = vmatprep.subr.bf16.mxu0 0
        %2506 = vmatpush1.bf16.msra.mxu0 0
        %2507 = vmatprep.subr.bf16.mxu0 0
        %2508 = vmatpush1.bf16.msra.mxu0 0
        %2509 = vmatprep.subr.bf16.mxu0 0
        %2510 = vmatpush1.bf16.msra.mxu0 0
        %2511 = vmatprep.subr.bf16.mxu0 0
        %2512 = vmatpush1.bf16.msra.mxu0 0
        %2513 = vmatprep.subr.bf16.mxu0 0
        %2514 = vmatpush1.bf16.msra.mxu0 0
        %2515 = vmatprep.subr.bf16.mxu0 0
        %2516 = vmatpush1.bf16.msra.mxu0 0
        %2517 = vmatprep.subr.bf16.mxu0 0
        %2518 = vmatpush1.bf16.msra.mxu0 0
        %2519 = vmatprep.mubr.bf16.mxu0 0
        %2520 = vmatmul.mubr.bf16.gmra.mrb[0].mxu0 %v2485
        %v2521 = vpop.f32.mrb[0].mxu0
        %v2522 = vadd.f32 0.0, %v2521
        %v2523 = vpop.f32.mrb[0].mxu0
        %v2524 = vadd.f32 0.0, %v2523
        %v2525 = vpop.f32.mrb[0].mxu0
        %v2526 = vadd.f32 0.0, %v2525
        %v2527 = vpop.f32.mrb[0].mxu0
        %v2528 = vadd.f32 0.0, %v2527
        %2529 = vdwg.mxu0
        %v2530 = vld [vmem:[#allocation8] sm:$0xff]
        %v2531 = vpack.c.bf16 %v2526, %v2522
        %v2532 = vpack.c.bf16 %v2528, %v2524
        %2534 = vrot.lane.b32.xlu0 %v2532, 17
        %v2535 = vpop.permute.xlu0 %2534
        %2537 = vrot.lane.b32.xlu0 %v2531, 17
        %v2538 = vpop.permute.xlu0 %2537
        %v2539 = vsel %vm720, %v2538, %v2535
        %v2543 = vsel %vm723, %v2535, %v2538
        %v2545 = vmul.bf16 %v2543, %v739
        %v2546 = vmul.bf16 %v2539, %v746
        %2547 = vrot.lane.b32.xlu0 %v2532, 16
        %v2548 = vpop.permute.xlu0 %2547
        %2549 = vrot.lane.b32.xlu0 %v2531, 16
        %v2550 = vpop.permute.xlu0 %2549
        %v2551 = vsel %vm753, %v2550, %v2548
        %v2555 = vsel %vm756, %v2548, %v2550
        %v2557 = vmul.bf16 %v2555, %v767
        %v2558 = vmul.bf16 %v2551, %v774
        %2559 = vrot.lane.b32.xlu0 %v2532, 15
        %v2560 = vpop.permute.xlu0 %2559
        %2561 = vrot.lane.b32.xlu0 %v2531, 15
        %v2562 = vpop.permute.xlu0 %2561
        %v2563 = vsel %vm781, %v2562, %v2560
        %v2567 = vsel %vm784, %v2560, %v2562
        %v2569 = vmul.bf16 %v2567, %v792
        %v2570 = vmul.bf16 %v2563, %v796
        %2571 = vrot.lane.b32.xlu0 %v2532, 1
        %v2572 = vpop.permute.xlu0 %2571
        %2573 = vrot.lane.b32.xlu0 %v2531, 1
        %v2574 = vpop.permute.xlu0 %2573
        %v2575 = vsel %vm803, %v2574, %v2572
        %v2579 = vsel %vm806, %v2572, %v2574
        %v2581 = vmul.bf16 %v2579, %v814
        %v2582 = vmul.bf16 %v2575, %v818
        %2583 = vrot.lane.b32.xlu0 %v2531, 127
        %v2584 = vpop.permute.xlu0 %2583
        %2585 = vrot.lane.b32.xlu0 %v2532, 127
        %v2586 = vpop.permute.xlu0 %2585
        %v2587 = vsel %vm825, %v2584, %v2586
        %v2591 = vsel %vm828, %v2586, %v2584
        %v2593 = vmul.bf16 %v2587, %v836
        %v2594 = vmul.bf16 %v2591, %v840
        %2595 = vrot.lane.b32.xlu0 %v2531, 113
        %v2596 = vpop.permute.xlu0 %2595
        %2597 = vrot.lane.b32.xlu0 %v2532, 113
        %v2598 = vpop.permute.xlu0 %2597
        %v2599 = vsel %vm847, %v2596, %v2598
        %v2603 = vsel %vm850, %v2598, %v2596
        %v2605 = vmul.bf16 %v2599, %v858
        %v2606 = vmul.bf16 %v2603, %v862
        %2607 = vrot.lane.b32.xlu0 %v2531, 112
        %v2608 = vpop.permute.xlu0 %2607
        %2609 = vrot.lane.b32.xlu0 %v2532, 112
        %v2610 = vpop.permute.xlu0 %2609
        %v2611 = vsel %vm869, %v2608, %v2610
        %v2615 = vsel %vm872, %v2610, %v2608
        %v2617 = vmul.bf16 %v2611, %v880
        %v2618 = vmul.bf16 %v2615, %v884
        %2619 = vrot.lane.b32.xlu0 %v2531, 111
        %v2620 = vpop.permute.xlu0 %2619
        %2621 = vrot.lane.b32.xlu0 %v2532, 111
        %v2622 = vpop.permute.xlu0 %2621
        %v2623 = vsel %vm891, %v2620, %v2622
        %v2627 = vsel %vm894, %v2622, %v2620
        %v2629 = vmul.bf16 %v2623, %v910
        %v2630 = vmul.bf16 %v2627, %v917
        %v2632 = vunpack.c.l.b16 %v2530
        %v2633 = vunpack.c.h.b16 %v2530
        %v2634 = vpack.c.b16 %v2632, %v2632
        %v2635 = vpack.c.b16 %v2633, %v2633
        %v2638 = vsel %vm756, %v2635, 0
        %2640 = vmatprep.subr.bf16.mxu0 %v2546
        %2641 = vmatpush1.bf16.msra.mxu0 %v2545
        %2642 = vmatprep.subr.bf16.mxu0 %v2558
        %2643 = vmatpush1.bf16.msra.mxu0 %v2557
        %2644 = vmatprep.subr.bf16.mxu0 %v2570
        %2645 = vmatpush1.bf16.msra.mxu0 %v2569
        %2646 = vmatprep.subr.bf16.mxu0 %v2582
        %2647 = vmatpush1.bf16.msra.mxu0 %v2581
        %2648 = vmatprep.subr.bf16.mxu0 %v2532
        %2649 = vmatpush1.bf16.msra.mxu0 %v2531
        %2650 = vmatprep.subr.bf16.mxu0 %v2594
        %2651 = vmatpush1.bf16.msra.mxu0 %v2593
        %2652 = vmatprep.subr.bf16.mxu0 %v2606
        %2653 = vmatpush1.bf16.msra.mxu0 %v2605
        %2654 = vmatprep.subr.bf16.mxu0 %v2618
        %2655 = vmatpush1.bf16.msra.mxu0 %v2617
        %2656 = vmatprep.subr.bf16.mxu0 %v2630
        %2657 = vmatpush1.bf16.msra.mxu0 %v2629
        %2658 = vmatprep.subr.bf16.mxu0 0
        %2659 = vmatpush1.bf16.msra.mxu0 0
        %2660 = vmatprep.subr.bf16.mxu0 0
        %2661 = vmatpush1.bf16.msra.mxu0 0
        %2662 = vmatprep.subr.bf16.mxu0 0
        %2663 = vmatpush1.bf16.msra.mxu0 0
        %2664 = vmatprep.subr.bf16.mxu0 0
        %2665 = vmatpush1.bf16.msra.mxu0 0
        %2666 = vmatprep.subr.bf16.mxu0 0
        %2667 = vmatpush1.bf16.msra.mxu0 0
        %2668 = vmatprep.subr.bf16.mxu0 0
        %2669 = vmatpush1.bf16.msra.mxu0 0
        %2670 = vmatprep.subr.bf16.mxu0 0
        %2671 = vmatpush1.bf16.msra.mxu0 0
        %2672 = vmatprep.mubr.bf16.mxu0 %v2638
        %2673 = vmatmul.mubr.bf16.gmra.mrb[0].mxu0 %v2634
        %v2674 = vpop.f32.mrb[0].mxu0
        %v2675 = vadd.f32 0.0, %v2674
        %v2676 = vpop.f32.mrb[0].mxu0
        %v2677 = vadd.f32 0.0, %v2676
        %v2678 = vpop.f32.mrb[0].mxu0
        %v2679 = vpop.f32.mrb[0].mxu0
        %2680 = vdwg.mxu0
        %v2681 = vmul.f32 %v2675, 0.2
        %v2682 = vmul.f32 %v2677, 0.2
        %v2683 = vmax.f32 %v2675, %v2681
        %v2684 = vmax.f32 %v2677, %v2682
        %v2685 = vadd.f32 %v2683, %v978
        %v2686 = vadd.f32 %v2684, %v979
        %v2687 = vld [vmem:[#allocation9] sm:$0xf]
        %v2688 = vpack.c.bf16 %v2685, %v2685
        %v2689 = vpack.c.bf16 %v2686, %v2686
        %2691 = vrot.lane.b32.xlu0 %v2689, 17
        %v2692 = vpop.permute.xlu0 %2691
        %2694 = vrot.lane.b32.xlu0 %v2688, 17
        %v2695 = vpop.permute.xlu0 %2694
        %v2696 = vsel %vm720, %v2695, %v2692
        %v2700 = vsel %vm723, %v2692, %v2695
        %v2702 = vmul.bf16 %v2700, %v739
        %v2703 = vmul.bf16 %v2696, %v746
        %2704 = vrot.lane.b32.xlu0 %v2689, 16
        %v2705 = vpop.permute.xlu0 %2704
        %2706 = vrot.lane.b32.xlu0 %v2688, 16
        %v2707 = vpop.permute.xlu0 %2706
        %v2708 = vsel %vm753, %v2707, %v2705
        %v2712 = vsel %vm756, %v2705, %v2707
        %v2714 = vmul.bf16 %v2712, %v767
        %v2715 = vmul.bf16 %v2708, %v774
        %2716 = vrot.lane.b32.xlu0 %v2689, 15
        %v2717 = vpop.permute.xlu0 %2716
        %2718 = vrot.lane.b32.xlu0 %v2688, 15
        %v2719 = vpop.permute.xlu0 %2718
        %v2720 = vsel %vm781, %v2719, %v2717
        %v2724 = vsel %vm784, %v2717, %v2719
        %v2726 = vmul.bf16 %v2724, %v792
        %v2727 = vmul.bf16 %v2720, %v796
        %2728 = vrot.lane.b32.xlu0 %v2689, 1
        %v2729 = vpop.permute.xlu0 %2728
        %2730 = vrot.lane.b32.xlu0 %v2688, 1
        %v2731 = vpop.permute.xlu0 %2730
        %v2732 = vsel %vm803, %v2731, %v2729
        %v2736 = vsel %vm806, %v2729, %v2731
        %v2738 = vmul.bf16 %v2736, %v814
        %v2739 = vmul.bf16 %v2732, %v818
        %2740 = vrot.lane.b32.xlu0 %v2688, 127
        %v2741 = vpop.permute.xlu0 %2740
        %2742 = vrot.lane.b32.xlu0 %v2689, 127
        %v2743 = vpop.permute.xlu0 %2742
        %v2744 = vsel %vm825, %v2741, %v2743
        %v2748 = vsel %vm828, %v2743, %v2741
        %v2750 = vmul.bf16 %v2744, %v836
        %v2751 = vmul.bf16 %v2748, %v840
        %2752 = vrot.lane.b32.xlu0 %v2688, 113
        %v2753 = vpop.permute.xlu0 %2752
        %2754 = vrot.lane.b32.xlu0 %v2689, 113
        %v2755 = vpop.permute.xlu0 %2754
        %v2756 = vsel %vm847, %v2753, %v2755
        %v2760 = vsel %vm850, %v2755, %v2753
        %v2762 = vmul.bf16 %v2756, %v858
        %v2763 = vmul.bf16 %v2760, %v862
        %2764 = vrot.lane.b32.xlu0 %v2688, 112
        %v2765 = vpop.permute.xlu0 %2764
        %2766 = vrot.lane.b32.xlu0 %v2689, 112
        %v2767 = vpop.permute.xlu0 %2766
        %v2768 = vsel %vm869, %v2765, %v2767
        %v2772 = vsel %vm872, %v2767, %v2765
        %v2774 = vmul.bf16 %v2768, %v880
        %v2775 = vmul.bf16 %v2772, %v884
        %2776 = vrot.lane.b32.xlu0 %v2688, 111
        %v2777 = vpop.permute.xlu0 %2776
        %2778 = vrot.lane.b32.xlu0 %v2689, 111
        %v2779 = vpop.permute.xlu0 %2778
        %v2780 = vsel %vm891, %v2777, %v2779
        %v2784 = vsel %vm894, %v2779, %v2777
        %v2786 = vmul.bf16 %v2780, %v910
        %v2787 = vmul.bf16 %v2784, %v917
        %v2790 = vrot.slane %v2714, 4
        %v2791 = vrot.slane %v2715, 4
        %v2794 = vrot.slane %v2738, 4
        %v2795 = vrot.slane %v2739, 4
        %v2798 = vrot.slane %v2750, 4
        %v2799 = vrot.slane %v2751, 4
        %v2802 = vrot.slane %v2774, 4
        %v2803 = vrot.slane %v2775, 4
        %v2806 = vsel %vm1378, %v2702, %v2790
        %v2810 = vsel %vm1378, %v2703, %v2791
        %v2814 = vsel %vm1378, %v2726, %v2794
        %v2818 = vsel %vm1378, %v2727, %v2795
        %v2822 = vsel %vm1378, %v2688, %v2798
        %v2826 = vsel %vm1378, %v2689, %v2799
        %v2830 = vsel %vm1378, %v2762, %v2802
        %v2834 = vsel %vm1378, %v2763, %v2803
        %vm2836 = vcmask 588800
        %v2838 = vsel %vm2836, %v2687, 0
        %v2841 = vsel %vm1378, %v2786, 0
        %v2844 = vsel %vm1378, %v2787, 0
        %2846 = vmatprep.subr.bf16.mxu0 %v2810
        %2847 = vmatpush1.bf16.msra.mxu0 %v2806
        %2848 = vmatprep.subr.bf16.mxu0 %v2818
        %2849 = vmatpush1.bf16.msra.mxu0 %v2814
        %2850 = vmatprep.subr.bf16.mxu0 %v2826
        %2851 = vmatpush1.bf16.msra.mxu0 %v2822
        %2852 = vmatprep.subr.bf16.mxu0 %v2834
        %2853 = vmatpush1.bf16.msra.mxu0 %v2830
        %2854 = vmatprep.subr.bf16.mxu0 %v2844
        %2855 = vmatpush1.bf16.msra.mxu0 %v2841
        %2856 = vmatprep.subr.bf16.mxu0 0
        %2857 = vmatpush1.bf16.msra.mxu0 0
        %2858 = vmatprep.subr.bf16.mxu0 0
        %2859 = vmatpush1.bf16.msra.mxu0 0
        %2860 = vmatprep.subr.bf16.mxu0 0
        %2861 = vmatpush1.bf16.msra.mxu0 0
        %2862 = vmatprep.subr.bf16.mxu0 0
        %2863 = vmatpush1.bf16.msra.mxu0 0
        %2864 = vmatprep.subr.bf16.mxu0 0
        %2865 = vmatpush1.bf16.msra.mxu0 0
        %2866 = vmatprep.subr.bf16.mxu0 0
        %2867 = vmatpush1.bf16.msra.mxu0 0
        %2868 = vmatprep.subr.bf16.mxu0 0
        %2869 = vmatpush1.bf16.msra.mxu0 0
        %2870 = vmatprep.subr.bf16.mxu0 0
        %2871 = vmatpush1.bf16.msra.mxu0 0
        %2872 = vmatprep.subr.bf16.mxu0 0
        %2873 = vmatpush1.bf16.msra.mxu0 0
        %2874 = vmatprep.subr.bf16.mxu0 0
        %2875 = vmatpush1.bf16.msra.mxu0 0
        %2876 = vmatprep.subr.bf16.mxu0 0
        %2877 = vmatpush1.bf16.msra.mxu0 0
        %2878 = vmatprep.mubr.bf16.mxu0 0
        %2879 = vmatmul.mubr.bf16.gmra.mrb[0].mxu0 %v2838
        %v2880 = vpop.f32.mrb[0].mxu0
        %v2881 = vadd.f32 0.0, %v2880
        %v2882 = vpop.f32.mrb[0].mxu0
        %v2883 = vadd.f32 0.0, %v2882
        %v2884 = vpop.f32.mrb[0].mxu0
        %v2885 = vpop.f32.mrb[0].mxu0
        %2886 = vdwg.mxu0
        %v2887 = vmul.f32 %v2881, 0.2
        %v2888 = vmul.f32 %v2883, 0.2
        %v2889 = vmax.f32 %v2881, %v2887
        %v2890 = vmax.f32 %v2883, %v2888
        %v2891 = vld [vmem:[#allocation11] sm:$0xf]
        %v2892 = vpack.c.bf16 %v2889, %v2889
        %v2893 = vpack.c.bf16 %v2890, %v2890
        %2895 = vrot.lane.b32.xlu0 %v2893, 17
        %v2896 = vpop.permute.xlu0 %2895
        %2898 = vrot.lane.b32.xlu0 %v2892, 17
        %v2899 = vpop.permute.xlu0 %2898
        %v2900 = vsel %vm720, %v2899, %v2896
        %v2904 = vsel %vm723, %v2896, %v2899
        %v2906 = vmul.bf16 %v2904, %v739
        %v2907 = vmul.bf16 %v2900, %v746
        %2908 = vrot.lane.b32.xlu0 %v2893, 16
        %v2909 = vpop.permute.xlu0 %2908
        %2910 = vrot.lane.b32.xlu0 %v2892, 16
        %v2911 = vpop.permute.xlu0 %2910
        %v2912 = vsel %vm753, %v2911, %v2909
        %v2916 = vsel %vm756, %v2909, %v2911
        %v2918 = vmul.bf16 %v2916, %v767
        %v2919 = vmul.bf16 %v2912, %v774
        %2920 = vrot.lane.b32.xlu0 %v2893, 15
        %v2921 = vpop.permute.xlu0 %2920
        %2922 = vrot.lane.b32.xlu0 %v2892, 15
        %v2923 = vpop.permute.xlu0 %2922
        %v2924 = vsel %vm781, %v2923, %v2921
        %v2928 = vsel %vm784, %v2921, %v2923
        %v2930 = vmul.bf16 %v2928, %v792
        %v2931 = vmul.bf16 %v2924, %v796
        %2932 = vrot.lane.b32.xlu0 %v2893, 1
        %v2933 = vpop.permute.xlu0 %2932
        %2934 = vrot.lane.b32.xlu0 %v2892, 1
        %v2935 = vpop.permute.xlu0 %2934
        %v2936 = vsel %vm803, %v2935, %v2933
        %v2940 = vsel %vm806, %v2933, %v2935
        %v2942 = vmul.bf16 %v2940, %v814
        %v2943 = vmul.bf16 %v2936, %v818
        %2944 = vrot.lane.b32.xlu0 %v2892, 127
        %v2945 = vpop.permute.xlu0 %2944
        %2946 = vrot.lane.b32.xlu0 %v2893, 127
        %v2947 = vpop.permute.xlu0 %2946
        %v2948 = vsel %vm825, %v2945, %v2947
        %v2952 = vsel %vm828, %v2947, %v2945
        %v2954 = vmul.bf16 %v2948, %v836
        %v2955 = vmul.bf16 %v2952, %v840
        %2956 = vrot.lane.b32.xlu0 %v2892, 113
        %v2957 = vpop.permute.xlu0 %2956
        %2958 = vrot.lane.b32.xlu0 %v2893, 113
        %v2959 = vpop.permute.xlu0 %2958
        %v2960 = vsel %vm847, %v2957, %v2959
        %v2964 = vsel %vm850, %v2959, %v2957
        %v2966 = vmul.bf16 %v2960, %v858
        %v2967 = vmul.bf16 %v2964, %v862
        %2968 = vrot.lane.b32.xlu0 %v2892, 112
        %v2969 = vpop.permute.xlu0 %2968
        %2970 = vrot.lane.b32.xlu0 %v2893, 112
        %v2971 = vpop.permute.xlu0 %2970
        %v2972 = vsel %vm869, %v2969, %v2971
        %v2976 = vsel %vm872, %v2971, %v2969
        %v2978 = vmul.bf16 %v2972, %v880
        %v2979 = vmul.bf16 %v2976, %v884
        %2980 = vrot.lane.b32.xlu0 %v2892, 111
        %v2981 = vpop.permute.xlu0 %2980
        %2982 = vrot.lane.b32.xlu0 %v2893, 111
        %v2983 = vpop.permute.xlu0 %2982
        %v2984 = vsel %vm891, %v2981, %v2983
        %v2988 = vsel %vm894, %v2983, %v2981
        %v2990 = vmul.bf16 %v2984, %v910
        %v2991 = vmul.bf16 %v2988, %v917
        %v2994 = vrot.slane %v2918, 4
        %v2995 = vrot.slane %v2919, 4
        %v2998 = vrot.slane %v2942, 4
        %v2999 = vrot.slane %v2943, 4
        %v3002 = vrot.slane %v2954, 4
        %v3003 = vrot.slane %v2955, 4
        %v3006 = vrot.slane %v2978, 4
        %v3007 = vrot.slane %v2979, 4
        %v3010 = vsel %vm1378, %v2906, %v2994
        %v3014 = vsel %vm1378, %v2907, %v2995
        %v3018 = vsel %vm1378, %v2930, %v2998
        %v3022 = vsel %vm1378, %v2931, %v2999
        %v3026 = vsel %vm1378, %v2892, %v3002
        %v3030 = vsel %vm1378, %v2893, %v3003
        %v3034 = vsel %vm1378, %v2966, %v3006
        %v3038 = vsel %vm1378, %v2967, %v3007
        %v3041 = vsel %vm2836, %v2891, 0
        %v3044 = vsel %vm1378, %v2990, 0
        %v3047 = vsel %vm1378, %v2991, 0
        %3049 = vmatprep.subr.bf16.mxu0 %v3014
        %3050 = vmatpush1.bf16.msra.mxu0 %v3010
        %3051 = vmatprep.subr.bf16.mxu0 %v3022
        %3052 = vmatpush1.bf16.msra.mxu0 %v3018
        %3053 = vmatprep.subr.bf16.mxu0 %v3030
        %3054 = vmatpush1.bf16.msra.mxu0 %v3026
        %3055 = vmatprep.subr.bf16.mxu0 %v3038
        %3056 = vmatpush1.bf16.msra.mxu0 %v3034
        %3057 = vmatprep.subr.bf16.mxu0 %v3047
        %3058 = vmatpush1.bf16.msra.mxu0 %v3044
        %3059 = vmatprep.subr.bf16.mxu0 0
        %3060 = vmatpush1.bf16.msra.mxu0 0
        %3061 = vmatprep.subr.bf16.mxu0 0
        %3062 = vmatpush1.bf16.msra.mxu0 0
        %3063 = vmatprep.subr.bf16.mxu0 0
        %3064 = vmatpush1.bf16.msra.mxu0 0
        %3065 = vmatprep.subr.bf16.mxu0 0
        %3066 = vmatpush1.bf16.msra.mxu0 0
        %3067 = vmatprep.subr.bf16.mxu0 0
        %3068 = vmatpush1.bf16.msra.mxu0 0
        %3069 = vmatprep.subr.bf16.mxu0 0
        %3070 = vmatpush1.bf16.msra.mxu0 0
        %3071 = vmatprep.subr.bf16.mxu0 0
        %3072 = vmatpush1.bf16.msra.mxu0 0
        %3073 = vmatprep.subr.bf16.mxu0 0
        %3074 = vmatpush1.bf16.msra.mxu0 0
        %3075 = vmatprep.subr.bf16.mxu0 0
        %3076 = vmatpush1.bf16.msra.mxu0 0
        %3077 = vmatprep.subr.bf16.mxu0 0
        %3078 = vmatpush1.bf16.msra.mxu0 0
        %3079 = vmatprep.subr.bf16.mxu0 0
        %3080 = vmatpush1.bf16.msra.mxu0 0
        %3081 = vmatprep.mubr.bf16.mxu0 0
        %3082 = vmatmul.mubr.bf16.gmra.mrb[0].mxu0 %v3041
        %v3083 = vpop.f32.mrb[0].mxu0
        %v3084 = vadd.f32 0.0, %v3083
        %v3085 = vpop.f32.mrb[0].mxu0
        %v3086 = vadd.f32 0.0, %v3085
        %v3087 = vpop.f32.mrb[0].mxu0
        %v3088 = vpop.f32.mrb[0].mxu0
        %3089 = vdwg.mxu0
        %v3090 = vmul.f32 %v3084, 0.2
        %v3091 = vmul.f32 %v3086, 0.2
        %v3092 = vmax.f32 %v3084, %v3090
        %v3093 = vmax.f32 %v3086, %v3091
        %v3094 = vld [vmem:[%s9] sm:$0x1]
        %v3095 = vpack.c.bf16 %v3092, %v3092
        %v3096 = vpack.c.bf16 %v3093, %v3093
        %3098 = vrot.lane.b32.xlu0 %v3096, 17
        %v3099 = vpop.permute.xlu0 %3098
        %3101 = vrot.lane.b32.xlu0 %v3095, 17
        %v3102 = vpop.permute.xlu0 %3101
        %v3103 = vsel %vm720, %v3102, %v3099
        %v3107 = vsel %vm723, %v3099, %v3102
        %v3109 = vmul.bf16 %v3107, %v739
        %v3110 = vmul.bf16 %v3103, %v746
        %3111 = vrot.lane.b32.xlu0 %v3096, 16
        %v3112 = vpop.permute.xlu0 %3111
        %3113 = vrot.lane.b32.xlu0 %v3095, 16
        %v3114 = vpop.permute.xlu0 %3113
        %v3115 = vsel %vm753, %v3114, %v3112
        %v3119 = vsel %vm756, %v3112, %v3114
        %v3121 = vmul.bf16 %v3119, %v767
        %v3122 = vmul.bf16 %v3115, %v774
        %3123 = vrot.lane.b32.xlu0 %v3096, 15
        %v3124 = vpop.permute.xlu0 %3123
        %3125 = vrot.lane.b32.xlu0 %v3095, 15
        %v3126 = vpop.permute.xlu0 %3125
        %v3127 = vsel %vm781, %v3126, %v3124
        %v3131 = vsel %vm784, %v3124, %v3126
        %v3133 = vmul.bf16 %v3131, %v792
        %v3134 = vmul.bf16 %v3127, %v796
        %3135 = vrot.lane.b32.xlu0 %v3096, 1
        %v3136 = vpop.permute.xlu0 %3135
        %3137 = vrot.lane.b32.xlu0 %v3095, 1
        %v3138 = vpop.permute.xlu0 %3137
        %v3139 = vsel %vm803, %v3138, %v3136
        %v3143 = vsel %vm806, %v3136, %v3138
        %v3145 = vmul.bf16 %v3143, %v814
        %v3146 = vmul.bf16 %v3139, %v818
        %3147 = vrot.lane.b32.xlu0 %v3095, 127
        %v3148 = vpop.permute.xlu0 %3147
        %3149 = vrot.lane.b32.xlu0 %v3096, 127
        %v3150 = vpop.permute.xlu0 %3149
        %v3151 = vsel %vm825, %v3148, %v3150
        %v3155 = vsel %vm828, %v3150, %v3148
        %v3157 = vmul.bf16 %v3151, %v836
        %v3158 = vmul.bf16 %v3155, %v840
        %3159 = vrot.lane.b32.xlu0 %v3095, 113
        %v3160 = vpop.permute.xlu0 %3159
        %3161 = vrot.lane.b32.xlu0 %v3096, 113
        %v3162 = vpop.permute.xlu0 %3161
        %v3163 = vsel %vm847, %v3160, %v3162
        %v3167 = vsel %vm850, %v3162, %v3160
        %v3169 = vmul.bf16 %v3163, %v858
        %v3170 = vmul.bf16 %v3167, %v862
        %3171 = vrot.lane.b32.xlu0 %v3095, 112
        %v3172 = vpop.permute.xlu0 %3171
        %3173 = vrot.lane.b32.xlu0 %v3096, 112
        %v3174 = vpop.permute.xlu0 %3173
        %v3175 = vsel %vm869, %v3172, %v3174
        %v3179 = vsel %vm872, %v3174, %v3172
        %v3181 = vmul.bf16 %v3175, %v880
        %v3182 = vmul.bf16 %v3179, %v884
        %3183 = vrot.lane.b32.xlu0 %v3095, 111
        %v3184 = vpop.permute.xlu0 %3183
        %3185 = vrot.lane.b32.xlu0 %v3096, 111
        %v3186 = vpop.permute.xlu0 %3185
        %v3187 = vsel %vm891, %v3184, %v3186
        %v3191 = vsel %vm894, %v3186, %v3184
        %v3193 = vmul.bf16 %v3187, %v910
        %v3194 = vmul.bf16 %v3191, %v917
        %v3197 = vrot.slane %v3121, 4
        %v3198 = vrot.slane %v3122, 4
        %v3201 = vrot.slane %v3145, 4
        %v3202 = vrot.slane %v3146, 4
        %v3205 = vrot.slane %v3157, 4
        %v3206 = vrot.slane %v3158, 4
        %v3209 = vrot.slane %v3181, 4
        %v3210 = vrot.slane %v3182, 4
        %v3213 = vsel %vm1378, %v3109, %v3197
        %v3217 = vsel %vm1378, %v3110, %v3198
        %v3221 = vsel %vm1378, %v3133, %v3201
        %v3225 = vsel %vm1378, %v3134, %v3202
        %v3229 = vsel %vm1378, %v3095, %v3205
        %v3233 = vsel %vm1378, %v3096, %v3206
        %v3237 = vsel %vm1378, %v3169, %v3209
        %v3241 = vsel %vm1378, %v3170, %v3210
        %v3243 = vld [vmem:[#allocation2] sm:$0x1]
        %3245 = vset.pattern.permute.xlu0 0
        %3246 = vperm.xlu0 %3245, %v3243
        %v3247 = vpop.permute.xlu0 %3246
        %v3249 = vlaneseq
        %v3250 = vshrl.u32 %v3249, 7
        %v3251 = vsub.s32 0, %v3250
        %v3252 = vrot.slane %v3247, %v3251
        %v3254 = vsel %vm2836, %v3094, 0
        %v3257 = vsel %vm1378, %v3193, 0
        %v3260 = vsel %vm1378, %v3194, 0
        %3262 = vmatprep.subr.bf16.mxu0 %v3217
        %3263 = vmatpush1.bf16.msra.mxu0 %v3213
        %3264 = vmatprep.subr.bf16.mxu0 %v3225
        %3265 = vmatpush1.bf16.msra.mxu0 %v3221
        %3266 = vmatprep.subr.bf16.mxu0 %v3233
        %3267 = vmatpush1.bf16.msra.mxu0 %v3229
        %3268 = vmatprep.subr.bf16.mxu0 %v3241
        %3269 = vmatpush1.bf16.msra.mxu0 %v3237
        %3270 = vmatprep.subr.bf16.mxu0 %v3260
        %3271 = vmatpush1.bf16.msra.mxu0 %v3257
        %3272 = vmatprep.subr.bf16.mxu0 0
        %3273 = vmatpush1.bf16.msra.mxu0 0
        %3274 = vmatprep.subr.bf16.mxu0 0
        %3275 = vmatpush1.bf16.msra.mxu0 0
        %3276 = vmatprep.subr.bf16.mxu0 0
        %3277 = vmatpush1.bf16.msra.mxu0 0
        %3278 = vmatprep.subr.bf16.mxu0 0
        %3279 = vmatpush1.bf16.msra.mxu0 0
        %3280 = vmatprep.subr.bf16.mxu0 0
        %3281 = vmatpush1.bf16.msra.mxu0 0
        %3282 = vmatprep.subr.bf16.mxu0 0
        %3283 = vmatpush1.bf16.msra.mxu0 0
        %3284 = vmatprep.subr.bf16.mxu0 0
        %3285 = vmatpush1.bf16.msra.mxu0 0
        %3286 = vmatprep.subr.bf16.mxu0 0
        %3287 = vmatpush1.bf16.msra.mxu0 0
        %3288 = vmatprep.subr.bf16.mxu0 0
        %3289 = vmatpush1.bf16.msra.mxu0 0
        %3290 = vmatprep.subr.bf16.mxu0 0
        %3291 = vmatpush1.bf16.msra.mxu0 0
        %3292 = vmatprep.subr.bf16.mxu0 0
        %3293 = vmatpush1.bf16.msra.mxu0 0
        %3294 = vmatprep.mubr.bf16.mxu0 0
        %3295 = vmatmul.mubr.bf16.gmra.mrb[0].mxu0 %v3254
        %v3296 = vpop.f32.mrb[0].mxu0
        %v3297 = vadd.f32 %v3252, %v3296
        %v3298 = vpop.f32.mrb[0].mxu0
        %v3299 = vadd.f32 %v3252, %v3298
        %v3300 = vpop.f32.mrb[0].mxu0
        %v3301 = vpop.f32.mrb[0].mxu0
        %3302 = vdwg.mxu0
        %v3305 = vcombine.low %v3297, %v3299
        %v3307 = vunpack.c.l.s4 1966171168
        %v3308 = vunpack.c.0.s8 %v3307
        %v3309 = vlaneseq
        %v3310 = vshrl.u32 %v3309, 7
        %v3311 = vsub.s32 %v3308, %v3310
        %v3312 = vrot.slane %v3305, %v3311
        %v3314 = vunpack.c.l.s4 1966171168
        %v3315 = vunpack.c.0.s8 %v3314
        %v3316 = vlaneseq
        %v3317 = vshrl.u32 %v3316, 7
        %v3318 = vsub.s32 %v3315, %v3317
        %v3319 = vrot.slane %v3312, %v3318
        %v3321 = vlaneseq
        %vm3322 = vcmp.ge.s32.totalorder %v3321, 0
        %vm3323 = vcmp.lt.s32.totalorder %v3321, 256
        %vm3324 = vmand %vm3322, %vm3323
        %3325 = vst.msk [vmem:[%s695] sm:$0x3] %vm3324, %v3319
        %vm3326 = vcmask 1040384
        %v3327 = vsel %vm3326, %v3297, 0.0
        %v3328 = vsel %vm3326, %v3299, 0.0
        %v3329 = vadd.f32 %v3327, %v3328
        %3330 = vadd.xlane.f32.xlu0 %v3329
        %v3331 = vpop.xlane.xlu0 %3330
        %v3332 = vrcp.pop 256.0
        %v3333 = vmul.f32 %v3331, %v3332
        %vm3334 = vcmask 0
        %3335 = vst.msk [vmem:[%s703] sm:$0x1] %vm3334, %v3333
        %p3336 = scmp.lt.s32.totalorder %s40, 1
        %s3337 = scalar_select %p3336, %s40, 1
        %s3338 = scalar_lea.vmem %s19, %s3337
        %s3339 = sand.u32 %s478, 1
        %s3340 = scalar_lea.sflag [#allocation5], %s3339
        %s3341 = sand.u32 %s478, 1
        %s3342 = smul.addr %s3341, 2
        %s3343 = scalar_lea.vmem [#allocation12], %s3342
        // Predicated region
        $region117: #{tpu_custom_call.1} parent=95 // pred_check
          %p3344 = pneg %p462
        $region118: #{tpu_custom_call.1} parent=95 // pred_check_branch
          %3346 = sbr.rel (%p3344) target = $region120
        $region119: #{tpu_custom_call.1} parent=95 // pred_region
          _
        $region120: #{tpu_custom_call.1} parent=95 // pred_fallthru
          _
        // Predicated region
        $region121: #{tpu_custom_call.1} parent=95 // pred_check
          %p3347 = pneg %p488
        $region122: #{tpu_custom_call.1} parent=95 // pred_check_branch
          %3349 = sbr.rel (%p3347) target = $region124
        $region123: #{tpu_custom_call.1} parent=95 // pred_region
          %s3351 = ssub.s32 32, 32
          %3352 = vsyncadd %s3340, %s3351
          %s3353 = smul.addr %s40, 2
          %s3354 = smul.addr %s3353, 16
          %s3355 = scalar_lea.hbm %s20, %s3354
          %s3357 = sshll.u32 %s3343, 4
          %s3358 = int_to_ptr.vmem [resolvable:$true] %s3357
          %3360 = dma.vmem_to_hbm [thread:$0]  %s3358, 32, %s3355, %s3340
        $region124: #{tpu_custom_call.1} parent=95 // pred_fallthru
          _
      $region96: #{tpu_custom_call.1} parent=5 // pred_fallthru
        _
      %p3361 = scmp.le.s32.totalorder 2, %s35
      // Predicated region
      $region125: #{tpu_custom_call.1} parent=5 // pred_check
        %p3362 = pneg %p3361
      $region126: #{tpu_custom_call.1} parent=5 // pred_check_branch
        %3364 = sbr.rel (%p3362) target = $region128
      $region127: #{tpu_custom_call.1} parent=5 // pred_region
        %s3365 = ssub.s32 %s35, 2
        // Predicated region
        $region129: #{tpu_custom_call.1} parent=127 // pred_check
          %p3366 = pneg %p468
        $region130: #{tpu_custom_call.1} parent=127 // pred_check_branch
          %3368 = sbr.rel (%p3366) target = $region132
        $region131: #{tpu_custom_call.1} parent=127 // pred_region
          %p3369 = scmp.lt.s32.totalorder %s41, 1
          %s3370 = scalar_select %p3369, %s41, 1
          %s3371 = scalar_lea.vmem %s19, %s3370
        $region132: #{tpu_custom_call.1} parent=127 // pred_fallthru
          _
        // Predicated region
        $region133: #{tpu_custom_call.1} parent=127 // pred_check
          %p3372 = pneg %p494
        $region134: #{tpu_custom_call.1} parent=127 // pred_check_branch
          %3374 = sbr.rel (%p3372) target = $region136
        $region135: #{tpu_custom_call.1} parent=127 // pred_region
          %s3375 = sand.u32 %s479, 1
          %s3376 = scalar_lea.sflag [#allocation5], %s3375
          %s3377 = sand.u32 %s479, 1
          %s3378 = smul.addr %s3377, 2
          %s3379 = scalar_lea.vmem [#allocation12], %s3378
          %3380 = dma.done %s3376, 32
        $region136: #{tpu_custom_call.1} parent=127 // pred_fallthru
          _
      $region128: #{tpu_custom_call.1} parent=5 // pred_fallthru
        _
    $region6: #{tpu_custom_call.1} parent=1 // loop_footer
      %s39 = sadd.s32 1, %s35
    $region7: #{tpu_custom_call.1} parent=1 // loop_footer_branch
      %34 = sbr.rel target = $region3
    $region8: #{tpu_custom_call.1} parent=1 // loop_exit
      _
    %3381 = vsyncpa [#allocation4], 1
    %s3382 = scalar_lea.sflag [#allocation4], 1
    %3383 = vsyncpa %s3382, 1
    %3384 = vsyncpa [#allocation7], 1
    %3385 = vsyncpa [#allocation10], 1
    %3386 = vsyncpa [#allocation5], 1
    %s3387 = scalar_lea.sflag [#allocation5], 1
    %3388 = vsyncpa %s3387, 1

</llo_original>
